<compile_context>
chip_gen: v7x
topology: tpu7x:2x2x1
jax: 0.10.0
libtpu: 0.0.40
codegen_flags: <defaults>
</compile_context>

<pallas_src>
import math

import jax
import jax.numpy as jnp
from jax import lax
from jax.experimental import pallas as pl
from jax.experimental.pallas import tpu as pltpu


# ------------------------- model hyper-parameters --------------------------
# (PyTorch defaults of Transformer_light)
FEAT_DIM = 9
N_HEAD = 1
EMBED_DIM = FEAT_DIM * N_HEAD        # 9
N_LAYERS = 3
DIM_FF = 2048
FF_CHUNK = 512                       # feed-forward processed in 512-lane chunks
N_FF_CHUNKS = DIM_FF // FF_CHUNK     # 4
MLP_DIMS = (64, 32, 16)
OUT_DIM = 1
LN_EPS = 1e-5
NEG_INF = -1e30


# ------------------------------ kernel helpers ------------------------------

def _layer_norm(x, gamma, beta, eps=LN_EPS):
    mean = jnp.mean(x, axis=-1, keepdims=True)
    var = jnp.mean((x - mean) ** 2, axis=-1, keepdims=True)
    return (x - mean) * lax.rsqrt(var + eps) * gamma + beta


def _gelu_erf(x):
    # exact erf GELU -- matches PyTorch activation='gelu'
    return 0.5 * x * (1.0 + lax.erf(x * (1.0 / math.sqrt(2.0))))


# ------------------------------- fused kernel -------------------------------
# Single invocation: the whole flattened (B*S, FEAT) batch at once.

def transformer_light_kernel(
    x_ref,        # (N, FEAT)        flattened (B*S, FEAT) input
    mask_ref,     # (N, N)           block-diagonal attention bias (0 / -1e30)
    w_in_ref,     # (FEAT, E)
    gvec_ref,     # (2, E)           rows: [input-proj bias, positional embed]
    wqkv_ref,     # (L, E, 3E)       fused QKV (Q pre-scaled by 1/sqrt(E))
    wo_ref,       # (L, E, E)
    lvec_ref,     # (L, 9, E)        bq*s, bk, bv, bo, g1, beta1, b2, g2, beta2
    w1_ref,       # (L*NC, E, FC)    bf16, FF axis chunked onto lanes
    b1_ref,       # (L*NC, 1, FC)    f32
    w2t_ref,      # (L*NC, E, FC)    bf16, w2 transposed (contract on FF)
    mw1_ref, mw2_ref, mw3_ref, mw4_ref,   # MLP-head weights
    mb_ref,       # (4, MLP_DIMS[0]) padded MLP-head biases
    out_ref,      # (N, OUT_DIM)
):
    f32 = jnp.float32
    bf16 = jnp.bfloat16
    E = EMBED_DIM
    N = x_ref.shape[0]

    x = x_ref[...]
    gv = gvec_ref[...]
    mask = mask_ref[...]

    # input projection + positional embedding (single (E,) vector, broadcast
    # to every token -- matches torch.randn(embed_dim) parameter)
    z = jnp.dot(x, w_in_ref[...], preferred_element_type=f32) + gv[0] + gv[1]

    # TODO(synk): dropout layers are treated as identity (inference / eval mode).
    for l in range(N_LAYERS):
        lv = lvec_ref[l]                                         # (9, E)

        # ---- single-head self-attention over the whole token slab ----
        qkv = jnp.dot(z, wqkv_ref[l], preferred_element_type=f32)    # (N, 3E)
        q = qkv[:, 0 * E:1 * E] + lv[0]      # 1/sqrt(E) already folded in
        k = qkv[:, 1 * E:2 * E] + lv[1]
        v = qkv[:, 2 * E:3 * E] + lv[2]

        scores = lax.dot_general(q, k, (((1,), (1,)), ((), ())),
                                 preferred_element_type=f32)          # (N, N)
        scores = scores + mask               # block-diag: no cross-batch attn
        scores = scores - jnp.max(scores, axis=-1, keepdims=True)
        p = jnp.exp(scores)
        p = p / jnp.sum(p, axis=-1, keepdims=True)       # exact softmax denom
        attn = jnp.dot(p, v, preferred_element_type=f32)
        attn = jnp.dot(attn, wo_ref[l], preferred_element_type=f32) + lv[3]

        # ---- residual + LayerNorm 1 (post-norm) ----
        h = _layer_norm(z + attn, lv[4], lv[5])
        h_bf = h.astype(bf16)

        # ---- feed-forward, chunked over the 2048 axis (bounds vreg pressure),
        #      bf16 MXU matmuls with f32 accumulation ----
        base = l * N_FF_CHUNKS

        def ff_chunk(c, acc, base=base, h_bf=h_bf):
            idx = base + c
            w1c = w1_ref[idx]                    # (E, FC) bf16
            b1c = b1_ref[idx]                    # (1, FC) f32
            w2c = w2t_ref[idx]                   # (E, FC) bf16
            ff = jnp.dot(h_bf, w1c, preferred_element_type=f32) + b1c
            ff = _gelu_erf(ff)
            # contract on the FF (lane) axis: (N, FC) x (E, FC)^T -> (N, E)
            return acc + lax.dot_general(
                ff.astype(bf16), w2c, (((1,), (1,)), ((), ())),
                preferred_element_type=f32)

        ff_out = lax.fori_loop(0, N_FF_CHUNKS, ff_chunk,
                               jnp.zeros((N, E), f32)) + lv[6]

        # ---- residual + LayerNorm 2 ----
        z = _layer_norm(h + ff_out, lv[7], lv[8])

    # ---- MLP head: Linear/ReLU x3 + final Linear ----
    mb = mb_ref[...]
    r = jnp.maximum(
        jnp.dot(z, mw1_ref[...], preferred_element_type=f32) + mb[0, :MLP_DIMS[0]], 0.0)
    r = jnp.maximum(
        jnp.dot(r, mw2_ref[...], preferred_element_type=f32) + mb[1, :MLP_DIMS[1]], 0.0)
    r = jnp.maximum(
        jnp.dot(r, mw3_ref[...], preferred_element_type=f32) + mb[2, :MLP_DIMS[2]], 0.0)
    out_ref[...] = (
        jnp.dot(r, mw4_ref[...], preferred_element_type=f32) + mb[3, :OUT_DIM])


# --------------------------------- wrapper ----------------------------------

def transformer_light_forward(x, params):
    """x: (B, S, FEAT_DIM), batch_first=True.  Mirrors PyTorch forward incl. squeeze(1)."""
    x = x.astype(jnp.float32)
    B, S, F = x.shape
    assert F == FEAT_DIM, f"expected feature dim {FEAT_DIM}, got {F}"
    N = B * S
    x_flat = x.reshape(N, F)

    # block-diagonal attention bias: tokens only attend within their own batch row
    tok_batch = jnp.arange(N, dtype=jnp.int32) // S
    mask = jnp.where(tok_batch[:, None] == tok_batch[None, :],
                     0.0, NEG_INF).astype(jnp.float32)

    args = [
        x_flat, mask,
        params["w_in"], params["gvec"],
        params["wqkv"], params["wo"], params["lvec"],
        params["w1"], params["b1"], params["w2t"],
        params["mw1"], params["mw2"], params["mw3"], params["mw4"], params["mb"],
    ]

    # No grid: single invocation, every array is one full-shape VMEM block,
    # implicitly single-buffered (no pipeline machinery).
    out_flat = pl.pallas_call(
        transformer_light_kernel,
        out_shape=jax.ShapeDtypeStruct((N, OUT_DIM), jnp.float32),
    )(*args)

    out = out_flat.reshape(B, S, OUT_DIM)
    # torch .squeeze(1): removes axis 1 only when it has size 1
    if out.shape[1] == 1:
        out = jnp.squeeze(out, axis=1)
    return out


# ------------------------------ parameter init ------------------------------

def _linear_init(key, din, dout, scale=0.1):
    k1, k2 = jax.random.split(key)
    w = jax.random.normal(k1, (din, dout), jnp.float32) * scale
    b = jax.random.normal(k2, (dout,), jnp.float32) * scale
    return w, b


def init_params(key):
    E, F, L, FF = EMBED_DIM, FEAT_DIM, N_LAYERS, DIM_FF
    NC, FC = N_FF_CHUNKS, FF_CHUNK
    keys = jax.random.split(key, 3 + L)
    p = {}

    # input projection + positional embedding, packed into a (2, E) slab
    w_in, b_in = _linear_init(keys[0], F, E)
    pos = jax.random.normal(keys[1], (E,), jnp.float32)
    p["w_in"] = w_in
    p["gvec"] = jnp.stack([b_in, pos], axis=0)

    # encoder layers (independent weights per layer, as in nn.TransformerEncoder)
    scale = 1.0 / math.sqrt(float(E))      # head_dim == E for n_head == 1
    wqkv_l, wo_l, lvec_l, w1_l, b1_l, w2t_l = [], [], [], [], [], []
    for l in range(L):
        ks = jax.random.split(keys[2 + l], 6)
        wq, bq = _linear_init(ks[0], E, E)
        wk, bk = _linear_init(ks[1], E, E)
        wv, bv = _linear_init(ks[2], E, E)
        wo, bo = _linear_init(ks[3], E, E)
        w1, b1 = _linear_init(ks[4], E, FF)
        w2, b2 = _linear_init(ks[5], FF, E)
        g1 = jnp.ones((E,), jnp.float32)
        be1 = jnp.zeros((E,), jnp.float32)
        g2 = jnp.ones((E,), jnp.float32)
        be2 = jnp.zeros((E,), jnp.float32)
        # fold the 1/sqrt(E) attention scale into the Q projection (weight + bias)
        wqkv_l.append(jnp.concatenate([wq * scale, wk, wv], axis=1))   # (E, 3E)
        wo_l.append(wo)
        lvec_l.append(jnp.stack([bq * scale, bk, bv, bo, g1, be1, b2, g2, be2], axis=0))
        # chunked, lane-dense feed-forward layouts
        w1_l.append(w1.reshape(E, NC, FC).transpose(1, 0, 2).astype(jnp.bfloat16))
        b1_l.append(b1.reshape(NC, 1, FC))
        # w2 stored transposed: FF axis on lanes
        w2t_l.append(w2.T.reshape(E, NC, FC).transpose(1, 0, 2).astype(jnp.bfloat16))
    p["wqkv"] = jnp.stack(wqkv_l)
    p["wo"] = jnp.stack(wo_l)
    p["lvec"] = jnp.stack(lvec_l)
    p["w1"] = jnp.concatenate(w1_l, axis=0)     # (L*NC, E, FC) bf16
    p["b1"] = jnp.concatenate(b1_l, axis=0)     # (L*NC, 1, FC) f32
    p["w2t"] = jnp.concatenate(w2t_l, axis=0)   # (L*NC, E, FC) bf16

    # MLP head: (E -> 64 -> 32 -> 16 -> 1); biases packed into one padded slab
    kh = jax.random.split(keys[2 + L], 4)
    dims = (E,) + MLP_DIMS + (OUT_DIM,)
    mws, mbs = [], []
    for i in range(4):
        w, b = _linear_init(kh[i], dims[i], dims[i + 1])
        mws.append(w)
        mbs.append(jnp.pad(b, (0, MLP_DIMS[0] - b.shape[0])))
    p["mw1"], p["mw2"], p["mw3"], p["mw4"] = mws
    p["mb"] = jnp.stack(mbs, axis=0)            # (4, 64)
    return p


# ----------------------------------- main ------------------------------------

if __name__ == "__main__":
    key = jax.random.PRNGKey(0)
    k_par, k_x = jax.random.split(key)

    B, S = 2, 8                                   # small batch, short sequence
    x = jax.random.normal(k_x, (B, S, FEAT_DIM), jnp.float32)
    params = init_params(k_par)

    fwd = jax.jit(transformer_light_forward)
    out = fwd(x, params)
    jax.block_until_ready(out)

    # squeeze(1) is a no-op here since S != 1, so the output stays (B, S, 1)
    assert out.shape == (B, S, OUT_DIM), f"unexpected output shape {out.shape}"
    assert bool(jnp.all(jnp.isfinite(out))), "non-finite output"
    print("KERNEL_OK")
</pallas_src>

<mosaic_0001>
module attributes {stable_mosaic.version = 11 : i64} {
  func.func @transformer_light_kernel(%arg0: memref<16x9xf32, #tpu.memory_space<vmem>>, %arg1: memref<16x16xf32, #tpu.memory_space<vmem>>, %arg2: memref<9x9xf32, #tpu.memory_space<vmem>>, %arg3: memref<2x9xf32, #tpu.memory_space<vmem>>, %arg4: memref<3x9x27xf32, #tpu.memory_space<vmem>>, %arg5: memref<3x9x9xf32, #tpu.memory_space<vmem>>, %arg6: memref<3x9x9xf32, #tpu.memory_space<vmem>>, %arg7: memref<12x9x512xbf16, #tpu.memory_space<vmem>>, %arg8: memref<12x1x512xf32, #tpu.memory_space<vmem>>, %arg9: memref<12x9x512xbf16, #tpu.memory_space<vmem>>, %arg10: memref<9x64xf32, #tpu.memory_space<vmem>>, %arg11: memref<64x32xf32, #tpu.memory_space<vmem>>, %arg12: memref<32x16xf32, #tpu.memory_space<vmem>>, %arg13: memref<16x1xf32, #tpu.memory_space<vmem>>, %arg14: memref<4x64xf32, #tpu.memory_space<vmem>>, %arg15: memref<16x1xf32, #tpu.memory_space<vmem>>) attributes {dimension_semantics = [], scalar_prefetch = 0 : i64, scratch_operands = 0 : i64, tpu.core_type = #tpu.core_type<tc>} {
    %c0 = arith.constant 0 : index
    %c0_0 = arith.constant 0 : index
    %0 = vector.load %arg0[%c0, %c0_0] : memref<16x9xf32, #tpu.memory_space<vmem>>, vector<16x9xf32>
    %c0_1 = arith.constant 0 : index
    %c0_2 = arith.constant 0 : index
    %1 = vector.load %arg3[%c0_1, %c0_2] : memref<2x9xf32, #tpu.memory_space<vmem>>, vector<2x9xf32>
    %c0_3 = arith.constant 0 : index
    %c0_4 = arith.constant 0 : index
    %2 = vector.load %arg1[%c0_3, %c0_4] : memref<16x16xf32, #tpu.memory_space<vmem>>, vector<16x16xf32>
    %c0_5 = arith.constant 0 : index
    %c0_6 = arith.constant 0 : index
    %3 = vector.load %arg2[%c0_5, %c0_6] : memref<9x9xf32, #tpu.memory_space<vmem>>, vector<9x9xf32>
    %cst = arith.constant dense<0.000000e+00> : vector<16x9xf32>
    %4 = tpu.matmul %0, %3, %cst {dimension_numbers = #tpu.dot_dimension_numbers<[1], [0], [0], [1], [0, 0, 1, 1], [], []>} : vector<16x9xf32>, vector<9x9xf32>, vector<16x9xf32> -> vector<16x9xf32>
    %5 = vector.extract_strided_slice %1 {offsets = [0, 0], sizes = [1, 9], strides = [1, 1]} : vector<2x9xf32> to vector<1x9xf32>
    %6 = vector.shape_cast %5 : vector<1x9xf32> to vector<9xf32>
    %7 = vector.shape_cast %6 : vector<9xf32> to vector<1x9xf32>
    %8 = vector.broadcast %7 : vector<1x9xf32> to vector<16x9xf32>
    %9 = arith.addf %4, %8 : vector<16x9xf32>
    %10 = vector.extract_strided_slice %1 {offsets = [1, 0], sizes = [1, 9], strides = [1, 1]} : vector<2x9xf32> to vector<1x9xf32>
    %11 = vector.shape_cast %10 : vector<1x9xf32> to vector<9xf32>
    %12 = vector.shape_cast %11 : vector<9xf32> to vector<1x9xf32>
    %13 = vector.broadcast %12 : vector<1x9xf32> to vector<16x9xf32>
    %14 = arith.addf %9, %13 : vector<16x9xf32>
    %c0_7 = arith.constant 0 : index
    %c0_8 = arith.constant 0 : index
    %c0_9 = arith.constant 0 : index
    %15 = vector.load %arg6[%c0_7, %c0_8, %c0_9] : memref<3x9x9xf32, #tpu.memory_space<vmem>>, vector<1x9x9xf32>
    %16 = vector.shape_cast %15 : vector<1x9x9xf32> to vector<9x9xf32>
    %c0_10 = arith.constant 0 : index
    %c0_11 = arith.constant 0 : index
    %c0_12 = arith.constant 0 : index
    %17 = vector.load %arg4[%c0_10, %c0_11, %c0_12] : memref<3x9x27xf32, #tpu.memory_space<vmem>>, vector<1x9x27xf32>
    %18 = vector.shape_cast %17 : vector<1x9x27xf32> to vector<9x27xf32>
    %cst_13 = arith.constant dense<0.000000e+00> : vector<16x27xf32>
    %19 = tpu.matmul %14, %18, %cst_13 {dimension_numbers = #tpu.dot_dimension_numbers<[1], [0], [0], [1], [0, 0, 1, 1], [], []>} : vector<16x9xf32>, vector<9x27xf32>, vector<16x27xf32> -> vector<16x27xf32>
    %20 = vector.extract_strided_slice %19 {offsets = [0, 0], sizes = [16, 9], strides = [1, 1]} : vector<16x27xf32> to vector<16x9xf32>
    %21 = vector.extract_strided_slice %16 {offsets = [0, 0], sizes = [1, 9], strides = [1, 1]} : vector<9x9xf32> to vector<1x9xf32>
    %22 = vector.shape_cast %21 : vector<1x9xf32> to vector<9xf32>
    %23 = vector.shape_cast %22 : vector<9xf32> to vector<1x9xf32>
    %24 = vector.broadcast %23 : vector<1x9xf32> to vector<16x9xf32>
    %25 = arith.addf %20, %24 : vector<16x9xf32>
    %26 = vector.extract_strided_slice %19 {offsets = [0, 9], sizes = [16, 9], strides = [1, 1]} : vector<16x27xf32> to vector<16x9xf32>
    %27 = vector.extract_strided_slice %16 {offsets = [1, 0], sizes = [1, 9], strides = [1, 1]} : vector<9x9xf32> to vector<1x9xf32>
    %28 = vector.shape_cast %27 : vector<1x9xf32> to vector<9xf32>
    %29 = vector.shape_cast %28 : vector<9xf32> to vector<1x9xf32>
    %30 = vector.broadcast %29 : vector<1x9xf32> to vector<16x9xf32>
    %31 = arith.addf %26, %30 : vector<16x9xf32>
    %32 = vector.extract_strided_slice %19 {offsets = [0, 18], sizes = [16, 9], strides = [1, 1]} : vector<16x27xf32> to vector<16x9xf32>
    %33 = vector.extract_strided_slice %16 {offsets = [2, 0], sizes = [1, 9], strides = [1, 1]} : vector<9x9xf32> to vector<1x9xf32>
    %34 = vector.shape_cast %33 : vector<1x9xf32> to vector<9xf32>
    %35 = vector.shape_cast %34 : vector<9xf32> to vector<1x9xf32>
    %36 = vector.broadcast %35 : vector<1x9xf32> to vector<16x9xf32>
    %37 = arith.addf %32, %36 : vector<16x9xf32>
    %cst_14 = arith.constant dense<0.000000e+00> : vector<16x16xf32>
    %38 = tpu.matmul %25, %31, %cst_14 {dimension_numbers = #tpu.dot_dimension_numbers<[1], [1], [0], [0], [0, 0, 1, 0], [], []>} : vector<16x9xf32>, vector<16x9xf32>, vector<16x16xf32> -> vector<16x16xf32>
    %39 = arith.addf %38, %2 : vector<16x16xf32>
    %cst_15 = arith.constant dense<0xFF800000> : vector<16xf32>
    %40 = vector.multi_reduction <maximumf>, %39, %cst_15 [1] : vector<16x16xf32> to vector<16xf32>
    %41 = vector.shape_cast %40 : vector<16xf32> to vector<16x1xf32>
    %42 = vector.broadcast %41 : vector<16x1xf32> to vector<16x16xf32>
    %43 = arith.subf %39, %42 : vector<16x16xf32>
    %44 = math.exp %43 : vector<16x16xf32>
    %cst_16 = arith.constant dense<0.000000e+00> : vector<16xf32>
    %45 = vector.multi_reduction <add>, %44, %cst_16 [1] : vector<16x16xf32> to vector<16xf32>
    %46 = vector.shape_cast %45 : vector<16xf32> to vector<16x1xf32>
    %47 = vector.broadcast %46 : vector<16x1xf32> to vector<16x16xf32>
    %48 = arith.divf %44, %47 : vector<16x16xf32>
    %cst_17 = arith.constant dense<0.000000e+00> : vector<16x9xf32>
    %49 = tpu.matmul %48, %37, %cst_17 {dimension_numbers = #tpu.dot_dimension_numbers<[1], [0], [0], [1], [0, 0, 1, 1], [], []>} : vector<16x16xf32>, vector<16x9xf32>, vector<16x9xf32> -> vector<16x9xf32>
    %c0_18 = arith.constant 0 : index
    %c0_19 = arith.constant 0 : index
    %c0_20 = arith.constant 0 : index
    %50 = vector.load %arg5[%c0_18, %c0_19, %c0_20] : memref<3x9x9xf32, #tpu.memory_space<vmem>>, vector<1x9x9xf32>
    %51 = vector.shape_cast %50 : vector<1x9x9xf32> to vector<9x9xf32>
    %cst_21 = arith.constant dense<0.000000e+00> : vector<16x9xf32>
    %52 = tpu.matmul %49, %51, %cst_21 {dimension_numbers = #tpu.dot_dimension_numbers<[1], [0], [0], [1], [0, 0, 1, 1], [], []>} : vector<16x9xf32>, vector<9x9xf32>, vector<16x9xf32> -> vector<16x9xf32>
    %53 = vector.extract_strided_slice %16 {offsets = [3, 0], sizes = [1, 9], strides = [1, 1]} : vector<9x9xf32> to vector<1x9xf32>
    %54 = vector.shape_cast %53 : vector<1x9xf32> to vector<9xf32>
    %55 = vector.shape_cast %54 : vector<9xf32> to vector<1x9xf32>
    %56 = vector.broadcast %55 : vector<1x9xf32> to vector<16x9xf32>
    %57 = arith.addf %52, %56 : vector<16x9xf32>
    %58 = arith.addf %14, %57 : vector<16x9xf32>
    %59 = vector.extract_strided_slice %16 {offsets = [4, 0], sizes = [1, 9], strides = [1, 1]} : vector<9x9xf32> to vector<1x9xf32>
    %60 = vector.shape_cast %59 : vector<1x9xf32> to vector<9xf32>
    %61 = vector.extract_strided_slice %16 {offsets = [5, 0], sizes = [1, 9], strides = [1, 1]} : vector<9x9xf32> to vector<1x9xf32>
    %62 = vector.shape_cast %61 : vector<1x9xf32> to vector<9xf32>
    %cst_22 = arith.constant dense<0.000000e+00> : vector<16xf32>
    %63 = vector.multi_reduction <add>, %58, %cst_22 [1] : vector<16x9xf32> to vector<16xf32>
    %64 = vector.shape_cast %63 : vector<16xf32> to vector<16x1xf32>
    %cst_23 = arith.constant 9.000000e+00 : f32
    %65 = vector.broadcast %cst_23 : f32 to vector<16x1xf32>
    %66 = arith.divf %64, %65 : vector<16x1xf32>
    %67 = vector.broadcast %66 : vector<16x1xf32> to vector<16x9xf32>
    %68 = arith.subf %58, %67 : vector<16x9xf32>
    %69 = arith.mulf %68, %68 : vector<16x9xf32>
    %cst_24 = arith.constant dense<0.000000e+00> : vector<16xf32>
    %70 = vector.multi_reduction <add>, %69, %cst_24 [1] : vector<16x9xf32> to vector<16xf32>
    %71 = vector.shape_cast %70 : vector<16xf32> to vector<16x1xf32>
    %cst_25 = arith.constant 9.000000e+00 : f32
    %72 = vector.broadcast %cst_25 : f32 to vector<16x1xf32>
    %73 = arith.divf %71, %72 : vector<16x1xf32>
    %74 = vector.broadcast %66 : vector<16x1xf32> to vector<16x9xf32>
    %75 = arith.subf %58, %74 : vector<16x9xf32>
    %cst_26 = arith.constant 9.99999974E-6 : f32
    %76 = vector.broadcast %cst_26 : f32 to vector<16x1xf32>
    %77 = arith.addf %73, %76 : vector<16x1xf32>
    %78 = math.rsqrt %77 : vector<16x1xf32>
    %79 = vector.broadcast %78 : vector<16x1xf32> to vector<16x9xf32>
    %80 = arith.mulf %75, %79 : vector<16x9xf32>
    %81 = vector.shape_cast %60 : vector<9xf32> to vector<1x9xf32>
    %82 = vector.broadcast %81 : vector<1x9xf32> to vector<16x9xf32>
    %83 = arith.mulf %80, %82 : vector<16x9xf32>
    %84 = vector.shape_cast %62 : vector<9xf32> to vector<1x9xf32>
    %85 = vector.broadcast %84 : vector<1x9xf32> to vector<16x9xf32>
    %86 = arith.addf %83, %85 : vector<16x9xf32>
    %87 = arith.truncf %86 : vector<16x9xf32> to vector<16x9xbf16>
    %cst_27 = arith.constant 0.000000e+00 : f32
    %88 = vector.broadcast %cst_27 : f32 to vector<16x9xf32>
    %c0_i32 = arith.constant 0 : i32
    %c4_i32 = arith.constant 4 : i32
    %89 = arith.addi %c0_i32, %c4_i32 : i32
    %c1_i32 = arith.constant 1 : i32
    %90 = scf.for %arg16 = %c0_i32 to %89 step %c1_i32 iter_args(%arg17 = %88) -> (vector<16x9xf32>)  : i32 {
      %c0_i32_111 = arith.constant 0 : i32
      %381 = arith.addi %c0_i32_111, %arg16 : i32
      %382 = arith.index_cast %381 : i32 to index
      %c0_112 = arith.constant 0 : index
      %c0_113 = arith.constant 0 : index
      %383 = vector.load %arg7[%382, %c0_112, %c0_113] : memref<12x9x512xbf16, #tpu.memory_space<vmem>>, vector<1x9x512xbf16>
      %384 = vector.shape_cast %383 : vector<1x9x512xbf16> to vector<9x512xbf16>
      %385 = arith.index_cast %381 : i32 to index
      %c0_114 = arith.constant 0 : index
      %c0_115 = arith.constant 0 : index
      %386 = vector.load %arg8[%385, %c0_114, %c0_115] : memref<12x1x512xf32, #tpu.memory_space<vmem>>, vector<1x1x512xf32>
      %387 = vector.shape_cast %386 : vector<1x1x512xf32> to vector<1x512xf32>
      %388 = arith.index_cast %381 : i32 to index
      %c0_116 = arith.constant 0 : index
      %c0_117 = arith.constant 0 : index
      %389 = vector.load %arg9[%388, %c0_116, %c0_117] : memref<12x9x512xbf16, #tpu.memory_space<vmem>>, vector<1x9x512xbf16>
      %390 = vector.shape_cast %389 : vector<1x9x512xbf16> to vector<9x512xbf16>
      %cst_118 = arith.constant dense<0.000000e+00> : vector<16x512xf32>
      %391 = tpu.matmul %87, %384, %cst_118 {dimension_numbers = #tpu.dot_dimension_numbers<[1], [0], [0], [1], [0, 0, 1, 1], [], []>} : vector<16x9xbf16>, vector<9x512xbf16>, vector<16x512xf32> -> vector<16x512xf32>
      %392 = vector.broadcast %387 : vector<1x512xf32> to vector<16x512xf32>
      %393 = arith.addf %391, %392 : vector<16x512xf32>
      %cst_119 = arith.constant 5.000000e-01 : f32
      %394 = vector.broadcast %cst_119 : f32 to vector<16x512xf32>
      %395 = arith.mulf %394, %393 : vector<16x512xf32>
      %cst_120 = arith.constant 0.707106769 : f32
      %396 = vector.broadcast %cst_120 : f32 to vector<16x512xf32>
      %397 = arith.mulf %393, %396 : vector<16x512xf32>
      %398 = math.erf %397 : vector<16x512xf32>
      %cst_121 = arith.constant 1.000000e+00 : f32
      %399 = vector.broadcast %cst_121 : f32 to vector<16x512xf32>
      %400 = arith.addf %399, %398 : vector<16x512xf32>
      %401 = arith.mulf %395, %400 : vector<16x512xf32>
      %402 = arith.truncf %401 : vector<16x512xf32> to vector<16x512xbf16>
      %cst_122 = arith.constant dense<0.000000e+00> : vector<16x9xf32>
      %403 = tpu.matmul %402, %390, %cst_122 {dimension_numbers = #tpu.dot_dimension_numbers<[1], [1], [0], [0], [0, 0, 1, 0], [], []>} : vector<16x512xbf16>, vector<9x512xbf16>, vector<16x9xf32> -> vector<16x9xf32>
      %404 = arith.addf %arg17, %403 : vector<16x9xf32>
      scf.yield %404 : vector<16x9xf32>
    }
    %c4_i32_28 = arith.constant 4 : i32
    %91 = vector.extract_strided_slice %16 {offsets = [6, 0], sizes = [1, 9], strides = [1, 1]} : vector<9x9xf32> to vector<1x9xf32>
    %92 = vector.shape_cast %91 : vector<1x9xf32> to vector<9xf32>
    %93 = vector.shape_cast %92 : vector<9xf32> to vector<1x9xf32>
    %94 = vector.broadcast %93 : vector<1x9xf32> to vector<16x9xf32>
    %95 = arith.addf %90, %94 : vector<16x9xf32>
    %96 = arith.addf %86, %95 : vector<16x9xf32>
    %97 = vector.extract_strided_slice %16 {offsets = [7, 0], sizes = [1, 9], strides = [1, 1]} : vector<9x9xf32> to vector<1x9xf32>
    %98 = vector.shape_cast %97 : vector<1x9xf32> to vector<9xf32>
    %99 = vector.extract_strided_slice %16 {offsets = [8, 0], sizes = [1, 9], strides = [1, 1]} : vector<9x9xf32> to vector<1x9xf32>
    %100 = vector.shape_cast %99 : vector<1x9xf32> to vector<9xf32>
    %cst_29 = arith.constant dense<0.000000e+00> : vector<16xf32>
    %101 = vector.multi_reduction <add>, %96, %cst_29 [1] : vector<16x9xf32> to vector<16xf32>
    %102 = vector.shape_cast %101 : vector<16xf32> to vector<16x1xf32>
    %cst_30 = arith.constant 9.000000e+00 : f32
    %103 = vector.broadcast %cst_30 : f32 to vector<16x1xf32>
    %104 = arith.divf %102, %103 : vector<16x1xf32>
    %105 = vector.broadcast %104 : vector<16x1xf32> to vector<16x9xf32>
    %106 = arith.subf %96, %105 : vector<16x9xf32>
    %107 = arith.mulf %106, %106 : vector<16x9xf32>
    %cst_31 = arith.constant dense<0.000000e+00> : vector<16xf32>
    %108 = vector.multi_reduction <add>, %107, %cst_31 [1] : vector<16x9xf32> to vector<16xf32>
    %109 = vector.shape_cast %108 : vector<16xf32> to vector<16x1xf32>
    %cst_32 = arith.constant 9.000000e+00 : f32
    %110 = vector.broadcast %cst_32 : f32 to vector<16x1xf32>
    %111 = arith.divf %109, %110 : vector<16x1xf32>
    %112 = vector.broadcast %104 : vector<16x1xf32> to vector<16x9xf32>
    %113 = arith.subf %96, %112 : vector<16x9xf32>
    %cst_33 = arith.constant 9.99999974E-6 : f32
    %114 = vector.broadcast %cst_33 : f32 to vector<16x1xf32>
    %115 = arith.addf %111, %114 : vector<16x1xf32>
    %116 = math.rsqrt %115 : vector<16x1xf32>
    %117 = vector.broadcast %116 : vector<16x1xf32> to vector<16x9xf32>
    %118 = arith.mulf %113, %117 : vector<16x9xf32>
    %119 = vector.shape_cast %98 : vector<9xf32> to vector<1x9xf32>
    %120 = vector.broadcast %119 : vector<1x9xf32> to vector<16x9xf32>
    %121 = arith.mulf %118, %120 : vector<16x9xf32>
    %122 = vector.shape_cast %100 : vector<9xf32> to vector<1x9xf32>
    %123 = vector.broadcast %122 : vector<1x9xf32> to vector<16x9xf32>
    %124 = arith.addf %121, %123 : vector<16x9xf32>
    %c1 = arith.constant 1 : index
    %c0_34 = arith.constant 0 : index
    %c0_35 = arith.constant 0 : index
    %125 = vector.load %arg6[%c1, %c0_34, %c0_35] : memref<3x9x9xf32, #tpu.memory_space<vmem>>, vector<1x9x9xf32>
    %126 = vector.shape_cast %125 : vector<1x9x9xf32> to vector<9x9xf32>
    %c1_36 = arith.constant 1 : index
    %c0_37 = arith.constant 0 : index
    %c0_38 = arith.constant 0 : index
    %127 = vector.load %arg4[%c1_36, %c0_37, %c0_38] : memref<3x9x27xf32, #tpu.memory_space<vmem>>, vector<1x9x27xf32>
    %128 = vector.shape_cast %127 : vector<1x9x27xf32> to vector<9x27xf32>
    %cst_39 = arith.constant dense<0.000000e+00> : vector<16x27xf32>
    %129 = tpu.matmul %124, %128, %cst_39 {dimension_numbers = #tpu.dot_dimension_numbers<[1], [0], [0], [1], [0, 0, 1, 1], [], []>} : vector<16x9xf32>, vector<9x27xf32>, vector<16x27xf32> -> vector<16x27xf32>
    %130 = vector.extract_strided_slice %129 {offsets = [0, 0], sizes = [16, 9], strides = [1, 1]} : vector<16x27xf32> to vector<16x9xf32>
    %131 = vector.extract_strided_slice %126 {offsets = [0, 0], sizes = [1, 9], strides = [1, 1]} : vector<9x9xf32> to vector<1x9xf32>
    %132 = vector.shape_cast %131 : vector<1x9xf32> to vector<9xf32>
    %133 = vector.shape_cast %132 : vector<9xf32> to vector<1x9xf32>
    %134 = vector.broadcast %133 : vector<1x9xf32> to vector<16x9xf32>
    %135 = arith.addf %130, %134 : vector<16x9xf32>
    %136 = vector.extract_strided_slice %129 {offsets = [0, 9], sizes = [16, 9], strides = [1, 1]} : vector<16x27xf32> to vector<16x9xf32>
    %137 = vector.extract_strided_slice %126 {offsets = [1, 0], sizes = [1, 9], strides = [1, 1]} : vector<9x9xf32> to vector<1x9xf32>
    %138 = vector.shape_cast %137 : vector<1x9xf32> to vector<9xf32>
    %139 = vector.shape_cast %138 : vector<9xf32> to vector<1x9xf32>
    %140 = vector.broadcast %139 : vector<1x9xf32> to vector<16x9xf32>
    %141 = arith.addf %136, %140 : vector<16x9xf32>
    %142 = vector.extract_strided_slice %129 {offsets = [0, 18], sizes = [16, 9], strides = [1, 1]} : vector<16x27xf32> to vector<16x9xf32>
    %143 = vector.extract_strided_slice %126 {offsets = [2, 0], sizes = [1, 9], strides = [1, 1]} : vector<9x9xf32> to vector<1x9xf32>
    %144 = vector.shape_cast %143 : vector<1x9xf32> to vector<9xf32>
    %145 = vector.shape_cast %144 : vector<9xf32> to vector<1x9xf32>
    %146 = vector.broadcast %145 : vector<1x9xf32> to vector<16x9xf32>
    %147 = arith.addf %142, %146 : vector<16x9xf32>
    %cst_40 = arith.constant dense<0.000000e+00> : vector<16x16xf32>
    %148 = tpu.matmul %135, %141, %cst_40 {dimension_numbers = #tpu.dot_dimension_numbers<[1], [1], [0], [0], [0, 0, 1, 0], [], []>} : vector<16x9xf32>, vector<16x9xf32>, vector<16x16xf32> -> vector<16x16xf32>
    %149 = arith.addf %148, %2 : vector<16x16xf32>
    %cst_41 = arith.constant dense<0xFF800000> : vector<16xf32>
    %150 = vector.multi_reduction <maximumf>, %149, %cst_41 [1] : vector<16x16xf32> to vector<16xf32>
    %151 = vector.shape_cast %150 : vector<16xf32> to vector<16x1xf32>
    %152 = vector.broadcast %151 : vector<16x1xf32> to vector<16x16xf32>
    %153 = arith.subf %149, %152 : vector<16x16xf32>
    %154 = math.exp %153 : vector<16x16xf32>
    %cst_42 = arith.constant dense<0.000000e+00> : vector<16xf32>
    %155 = vector.multi_reduction <add>, %154, %cst_42 [1] : vector<16x16xf32> to vector<16xf32>
    %156 = vector.shape_cast %155 : vector<16xf32> to vector<16x1xf32>
    %157 = vector.broadcast %156 : vector<16x1xf32> to vector<16x16xf32>
    %158 = arith.divf %154, %157 : vector<16x16xf32>
    %cst_43 = arith.constant dense<0.000000e+00> : vector<16x9xf32>
    %159 = tpu.matmul %158, %147, %cst_43 {dimension_numbers = #tpu.dot_dimension_numbers<[1], [0], [0], [1], [0, 0, 1, 1], [], []>} : vector<16x16xf32>, vector<16x9xf32>, vector<16x9xf32> -> vector<16x9xf32>
    %c1_44 = arith.constant 1 : index
    %c0_45 = arith.constant 0 : index
    %c0_46 = arith.constant 0 : index
    %160 = vector.load %arg5[%c1_44, %c0_45, %c0_46] : memref<3x9x9xf32, #tpu.memory_space<vmem>>, vector<1x9x9xf32>
    %161 = vector.shape_cast %160 : vector<1x9x9xf32> to vector<9x9xf32>
    %cst_47 = arith.constant dense<0.000000e+00> : vector<16x9xf32>
    %162 = tpu.matmul %159, %161, %cst_47 {dimension_numbers = #tpu.dot_dimension_numbers<[1], [0], [0], [1], [0, 0, 1, 1], [], []>} : vector<16x9xf32>, vector<9x9xf32>, vector<16x9xf32> -> vector<16x9xf32>
    %163 = vector.extract_strided_slice %126 {offsets = [3, 0], sizes = [1, 9], strides = [1, 1]} : vector<9x9xf32> to vector<1x9xf32>
    %164 = vector.shape_cast %163 : vector<1x9xf32> to vector<9xf32>
    %165 = vector.shape_cast %164 : vector<9xf32> to vector<1x9xf32>
    %166 = vector.broadcast %165 : vector<1x9xf32> to vector<16x9xf32>
    %167 = arith.addf %162, %166 : vector<16x9xf32>
    %168 = arith.addf %124, %167 : vector<16x9xf32>
    %169 = vector.extract_strided_slice %126 {offsets = [4, 0], sizes = [1, 9], strides = [1, 1]} : vector<9x9xf32> to vector<1x9xf32>
    %170 = vector.shape_cast %169 : vector<1x9xf32> to vector<9xf32>
    %171 = vector.extract_strided_slice %126 {offsets = [5, 0], sizes = [1, 9], strides = [1, 1]} : vector<9x9xf32> to vector<1x9xf32>
    %172 = vector.shape_cast %171 : vector<1x9xf32> to vector<9xf32>
    %cst_48 = arith.constant dense<0.000000e+00> : vector<16xf32>
    %173 = vector.multi_reduction <add>, %168, %cst_48 [1] : vector<16x9xf32> to vector<16xf32>
    %174 = vector.shape_cast %173 : vector<16xf32> to vector<16x1xf32>
    %cst_49 = arith.constant 9.000000e+00 : f32
    %175 = vector.broadcast %cst_49 : f32 to vector<16x1xf32>
    %176 = arith.divf %174, %175 : vector<16x1xf32>
    %177 = vector.broadcast %176 : vector<16x1xf32> to vector<16x9xf32>
    %178 = arith.subf %168, %177 : vector<16x9xf32>
    %179 = arith.mulf %178, %178 : vector<16x9xf32>
    %cst_50 = arith.constant dense<0.000000e+00> : vector<16xf32>
    %180 = vector.multi_reduction <add>, %179, %cst_50 [1] : vector<16x9xf32> to vector<16xf32>
    %181 = vector.shape_cast %180 : vector<16xf32> to vector<16x1xf32>
    %cst_51 = arith.constant 9.000000e+00 : f32
    %182 = vector.broadcast %cst_51 : f32 to vector<16x1xf32>
    %183 = arith.divf %181, %182 : vector<16x1xf32>
    %184 = vector.broadcast %176 : vector<16x1xf32> to vector<16x9xf32>
    %185 = arith.subf %168, %184 : vector<16x9xf32>
    %cst_52 = arith.constant 9.99999974E-6 : f32
    %186 = vector.broadcast %cst_52 : f32 to vector<16x1xf32>
    %187 = arith.addf %183, %186 : vector<16x1xf32>
    %188 = math.rsqrt %187 : vector<16x1xf32>
    %189 = vector.broadcast %188 : vector<16x1xf32> to vector<16x9xf32>
    %190 = arith.mulf %185, %189 : vector<16x9xf32>
    %191 = vector.shape_cast %170 : vector<9xf32> to vector<1x9xf32>
    %192 = vector.broadcast %191 : vector<1x9xf32> to vector<16x9xf32>
    %193 = arith.mulf %190, %192 : vector<16x9xf32>
    %194 = vector.shape_cast %172 : vector<9xf32> to vector<1x9xf32>
    %195 = vector.broadcast %194 : vector<1x9xf32> to vector<16x9xf32>
    %196 = arith.addf %193, %195 : vector<16x9xf32>
    %197 = arith.truncf %196 : vector<16x9xf32> to vector<16x9xbf16>
    %cst_53 = arith.constant 0.000000e+00 : f32
    %198 = vector.broadcast %cst_53 : f32 to vector<16x9xf32>
    %c0_i32_54 = arith.constant 0 : i32
    %c4_i32_55 = arith.constant 4 : i32
    %199 = arith.addi %c0_i32_54, %c4_i32_55 : i32
    %c1_i32_56 = arith.constant 1 : i32
    %200 = scf.for %arg16 = %c0_i32_54 to %199 step %c1_i32_56 iter_args(%arg17 = %198) -> (vector<16x9xf32>)  : i32 {
      %c4_i32_111 = arith.constant 4 : i32
      %381 = arith.addi %c4_i32_111, %arg16 : i32
      %382 = arith.index_cast %381 : i32 to index
      %c0_112 = arith.constant 0 : index
      %c0_113 = arith.constant 0 : index
      %383 = vector.load %arg7[%382, %c0_112, %c0_113] : memref<12x9x512xbf16, #tpu.memory_space<vmem>>, vector<1x9x512xbf16>
      %384 = vector.shape_cast %383 : vector<1x9x512xbf16> to vector<9x512xbf16>
      %385 = arith.index_cast %381 : i32 to index
      %c0_114 = arith.constant 0 : index
      %c0_115 = arith.constant 0 : index
      %386 = vector.load %arg8[%385, %c0_114, %c0_115] : memref<12x1x512xf32, #tpu.memory_space<vmem>>, vector<1x1x512xf32>
      %387 = vector.shape_cast %386 : vector<1x1x512xf32> to vector<1x512xf32>
      %388 = arith.index_cast %381 : i32 to index
      %c0_116 = arith.constant 0 : index
      %c0_117 = arith.constant 0 : index
      %389 = vector.load %arg9[%388, %c0_116, %c0_117] : memref<12x9x512xbf16, #tpu.memory_space<vmem>>, vector<1x9x512xbf16>
      %390 = vector.shape_cast %389 : vector<1x9x512xbf16> to vector<9x512xbf16>
      %cst_118 = arith.constant dense<0.000000e+00> : vector<16x512xf32>
      %391 = tpu.matmul %197, %384, %cst_118 {dimension_numbers = #tpu.dot_dimension_numbers<[1], [0], [0], [1], [0, 0, 1, 1], [], []>} : vector<16x9xbf16>, vector<9x512xbf16>, vector<16x512xf32> -> vector<16x512xf32>
      %392 = vector.broadcast %387 : vector<1x512xf32> to vector<16x512xf32>
      %393 = arith.addf %391, %392 : vector<16x512xf32>
      %cst_119 = arith.constant 5.000000e-01 : f32
      %394 = vector.broadcast %cst_119 : f32 to vector<16x512xf32>
      %395 = arith.mulf %394, %393 : vector<16x512xf32>
      %cst_120 = arith.constant 0.707106769 : f32
      %396 = vector.broadcast %cst_120 : f32 to vector<16x512xf32>
      %397 = arith.mulf %393, %396 : vector<16x512xf32>
      %398 = math.erf %397 : vector<16x512xf32>
      %cst_121 = arith.constant 1.000000e+00 : f32
      %399 = vector.broadcast %cst_121 : f32 to vector<16x512xf32>
      %400 = arith.addf %399, %398 : vector<16x512xf32>
      %401 = arith.mulf %395, %400 : vector<16x512xf32>
      %402 = arith.truncf %401 : vector<16x512xf32> to vector<16x512xbf16>
      %cst_122 = arith.constant dense<0.000000e+00> : vector<16x9xf32>
      %403 = tpu.matmul %402, %390, %cst_122 {dimension_numbers = #tpu.dot_dimension_numbers<[1], [1], [0], [0], [0, 0, 1, 0], [], []>} : vector<16x512xbf16>, vector<9x512xbf16>, vector<16x9xf32> -> vector<16x9xf32>
      %404 = arith.addf %arg17, %403 : vector<16x9xf32>
      scf.yield %404 : vector<16x9xf32>
    }
    %c4_i32_57 = arith.constant 4 : i32
    %201 = vector.extract_strided_slice %126 {offsets = [6, 0], sizes = [1, 9], strides = [1, 1]} : vector<9x9xf32> to vector<1x9xf32>
    %202 = vector.shape_cast %201 : vector<1x9xf32> to vector<9xf32>
    %203 = vector.shape_cast %202 : vector<9xf32> to vector<1x9xf32>
    %204 = vector.broadcast %203 : vector<1x9xf32> to vector<16x9xf32>
    %205 = arith.addf %200, %204 : vector<16x9xf32>
    %206 = arith.addf %196, %205 : vector<16x9xf32>
    %207 = vector.extract_strided_slice %126 {offsets = [7, 0], sizes = [1, 9], strides = [1, 1]} : vector<9x9xf32> to vector<1x9xf32>
    %208 = vector.shape_cast %207 : vector<1x9xf32> to vector<9xf32>
    %209 = vector.extract_strided_slice %126 {offsets = [8, 0], sizes = [1, 9], strides = [1, 1]} : vector<9x9xf32> to vector<1x9xf32>
    %210 = vector.shape_cast %209 : vector<1x9xf32> to vector<9xf32>
    %cst_58 = arith.constant dense<0.000000e+00> : vector<16xf32>
    %211 = vector.multi_reduction <add>, %206, %cst_58 [1] : vector<16x9xf32> to vector<16xf32>
    %212 = vector.shape_cast %211 : vector<16xf32> to vector<16x1xf32>
    %cst_59 = arith.constant 9.000000e+00 : f32
    %213 = vector.broadcast %cst_59 : f32 to vector<16x1xf32>
    %214 = arith.divf %212, %213 : vector<16x1xf32>
    %215 = vector.broadcast %214 : vector<16x1xf32> to vector<16x9xf32>
    %216 = arith.subf %206, %215 : vector<16x9xf32>
    %217 = arith.mulf %216, %216 : vector<16x9xf32>
    %cst_60 = arith.constant dense<0.000000e+00> : vector<16xf32>
    %218 = vector.multi_reduction <add>, %217, %cst_60 [1] : vector<16x9xf32> to vector<16xf32>
    %219 = vector.shape_cast %218 : vector<16xf32> to vector<16x1xf32>
    %cst_61 = arith.constant 9.000000e+00 : f32
    %220 = vector.broadcast %cst_61 : f32 to vector<16x1xf32>
    %221 = arith.divf %219, %220 : vector<16x1xf32>
    %222 = vector.broadcast %214 : vector<16x1xf32> to vector<16x9xf32>
    %223 = arith.subf %206, %222 : vector<16x9xf32>
    %cst_62 = arith.constant 9.99999974E-6 : f32
    %224 = vector.broadcast %cst_62 : f32 to vector<16x1xf32>
    %225 = arith.addf %221, %224 : vector<16x1xf32>
    %226 = math.rsqrt %225 : vector<16x1xf32>
    %227 = vector.broadcast %226 : vector<16x1xf32> to vector<16x9xf32>
    %228 = arith.mulf %223, %227 : vector<16x9xf32>
    %229 = vector.shape_cast %208 : vector<9xf32> to vector<1x9xf32>
    %230 = vector.broadcast %229 : vector<1x9xf32> to vector<16x9xf32>
    %231 = arith.mulf %228, %230 : vector<16x9xf32>
    %232 = vector.shape_cast %210 : vector<9xf32> to vector<1x9xf32>
    %233 = vector.broadcast %232 : vector<1x9xf32> to vector<16x9xf32>
    %234 = arith.addf %231, %233 : vector<16x9xf32>
    %c2 = arith.constant 2 : index
    %c0_63 = arith.constant 0 : index
    %c0_64 = arith.constant 0 : index
    %235 = vector.load %arg6[%c2, %c0_63, %c0_64] : memref<3x9x9xf32, #tpu.memory_space<vmem>>, vector<1x9x9xf32>
    %236 = vector.shape_cast %235 : vector<1x9x9xf32> to vector<9x9xf32>
    %c2_65 = arith.constant 2 : index
    %c0_66 = arith.constant 0 : index
    %c0_67 = arith.constant 0 : index
    %237 = vector.load %arg4[%c2_65, %c0_66, %c0_67] : memref<3x9x27xf32, #tpu.memory_space<vmem>>, vector<1x9x27xf32>
    %238 = vector.shape_cast %237 : vector<1x9x27xf32> to vector<9x27xf32>
    %cst_68 = arith.constant dense<0.000000e+00> : vector<16x27xf32>
    %239 = tpu.matmul %234, %238, %cst_68 {dimension_numbers = #tpu.dot_dimension_numbers<[1], [0], [0], [1], [0, 0, 1, 1], [], []>} : vector<16x9xf32>, vector<9x27xf32>, vector<16x27xf32> -> vector<16x27xf32>
    %240 = vector.extract_strided_slice %239 {offsets = [0, 0], sizes = [16, 9], strides = [1, 1]} : vector<16x27xf32> to vector<16x9xf32>
    %241 = vector.extract_strided_slice %236 {offsets = [0, 0], sizes = [1, 9], strides = [1, 1]} : vector<9x9xf32> to vector<1x9xf32>
    %242 = vector.shape_cast %241 : vector<1x9xf32> to vector<9xf32>
    %243 = vector.shape_cast %242 : vector<9xf32> to vector<1x9xf32>
    %244 = vector.broadcast %243 : vector<1x9xf32> to vector<16x9xf32>
    %245 = arith.addf %240, %244 : vector<16x9xf32>
    %246 = vector.extract_strided_slice %239 {offsets = [0, 9], sizes = [16, 9], strides = [1, 1]} : vector<16x27xf32> to vector<16x9xf32>
    %247 = vector.extract_strided_slice %236 {offsets = [1, 0], sizes = [1, 9], strides = [1, 1]} : vector<9x9xf32> to vector<1x9xf32>
    %248 = vector.shape_cast %247 : vector<1x9xf32> to vector<9xf32>
    %249 = vector.shape_cast %248 : vector<9xf32> to vector<1x9xf32>
    %250 = vector.broadcast %249 : vector<1x9xf32> to vector<16x9xf32>
    %251 = arith.addf %246, %250 : vector<16x9xf32>
    %252 = vector.extract_strided_slice %239 {offsets = [0, 18], sizes = [16, 9], strides = [1, 1]} : vector<16x27xf32> to vector<16x9xf32>
    %253 = vector.extract_strided_slice %236 {offsets = [2, 0], sizes = [1, 9], strides = [1, 1]} : vector<9x9xf32> to vector<1x9xf32>
    %254 = vector.shape_cast %253 : vector<1x9xf32> to vector<9xf32>
    %255 = vector.shape_cast %254 : vector<9xf32> to vector<1x9xf32>
    %256 = vector.broadcast %255 : vector<1x9xf32> to vector<16x9xf32>
    %257 = arith.addf %252, %256 : vector<16x9xf32>
    %cst_69 = arith.constant dense<0.000000e+00> : vector<16x16xf32>
    %258 = tpu.matmul %245, %251, %cst_69 {dimension_numbers = #tpu.dot_dimension_numbers<[1], [1], [0], [0], [0, 0, 1, 0], [], []>} : vector<16x9xf32>, vector<16x9xf32>, vector<16x16xf32> -> vector<16x16xf32>
    %259 = arith.addf %258, %2 : vector<16x16xf32>
    %cst_70 = arith.constant dense<0xFF800000> : vector<16xf32>
    %260 = vector.multi_reduction <maximumf>, %259, %cst_70 [1] : vector<16x16xf32> to vector<16xf32>
    %261 = vector.shape_cast %260 : vector<16xf32> to vector<16x1xf32>
    %262 = vector.broadcast %261 : vector<16x1xf32> to vector<16x16xf32>
    %263 = arith.subf %259, %262 : vector<16x16xf32>
    %264 = math.exp %263 : vector<16x16xf32>
    %cst_71 = arith.constant dense<0.000000e+00> : vector<16xf32>
    %265 = vector.multi_reduction <add>, %264, %cst_71 [1] : vector<16x16xf32> to vector<16xf32>
    %266 = vector.shape_cast %265 : vector<16xf32> to vector<16x1xf32>
    %267 = vector.broadcast %266 : vector<16x1xf32> to vector<16x16xf32>
    %268 = arith.divf %264, %267 : vector<16x16xf32>
    %cst_72 = arith.constant dense<0.000000e+00> : vector<16x9xf32>
    %269 = tpu.matmul %268, %257, %cst_72 {dimension_numbers = #tpu.dot_dimension_numbers<[1], [0], [0], [1], [0, 0, 1, 1], [], []>} : vector<16x16xf32>, vector<16x9xf32>, vector<16x9xf32> -> vector<16x9xf32>
    %c2_73 = arith.constant 2 : index
    %c0_74 = arith.constant 0 : index
    %c0_75 = arith.constant 0 : index
    %270 = vector.load %arg5[%c2_73, %c0_74, %c0_75] : memref<3x9x9xf32, #tpu.memory_space<vmem>>, vector<1x9x9xf32>
    %271 = vector.shape_cast %270 : vector<1x9x9xf32> to vector<9x9xf32>
    %cst_76 = arith.constant dense<0.000000e+00> : vector<16x9xf32>
    %272 = tpu.matmul %269, %271, %cst_76 {dimension_numbers = #tpu.dot_dimension_numbers<[1], [0], [0], [1], [0, 0, 1, 1], [], []>} : vector<16x9xf32>, vector<9x9xf32>, vector<16x9xf32> -> vector<16x9xf32>
    %273 = vector.extract_strided_slice %236 {offsets = [3, 0], sizes = [1, 9], strides = [1, 1]} : vector<9x9xf32> to vector<1x9xf32>
    %274 = vector.shape_cast %273 : vector<1x9xf32> to vector<9xf32>
    %275 = vector.shape_cast %274 : vector<9xf32> to vector<1x9xf32>
    %276 = vector.broadcast %275 : vector<1x9xf32> to vector<16x9xf32>
    %277 = arith.addf %272, %276 : vector<16x9xf32>
    %278 = arith.addf %234, %277 : vector<16x9xf32>
    %279 = vector.extract_strided_slice %236 {offsets = [4, 0], sizes = [1, 9], strides = [1, 1]} : vector<9x9xf32> to vector<1x9xf32>
    %280 = vector.shape_cast %279 : vector<1x9xf32> to vector<9xf32>
    %281 = vector.extract_strided_slice %236 {offsets = [5, 0], sizes = [1, 9], strides = [1, 1]} : vector<9x9xf32> to vector<1x9xf32>
    %282 = vector.shape_cast %281 : vector<1x9xf32> to vector<9xf32>
    %cst_77 = arith.constant dense<0.000000e+00> : vector<16xf32>
    %283 = vector.multi_reduction <add>, %278, %cst_77 [1] : vector<16x9xf32> to vector<16xf32>
    %284 = vector.shape_cast %283 : vector<16xf32> to vector<16x1xf32>
    %cst_78 = arith.constant 9.000000e+00 : f32
    %285 = vector.broadcast %cst_78 : f32 to vector<16x1xf32>
    %286 = arith.divf %284, %285 : vector<16x1xf32>
    %287 = vector.broadcast %286 : vector<16x1xf32> to vector<16x9xf32>
    %288 = arith.subf %278, %287 : vector<16x9xf32>
    %289 = arith.mulf %288, %288 : vector<16x9xf32>
    %cst_79 = arith.constant dense<0.000000e+00> : vector<16xf32>
    %290 = vector.multi_reduction <add>, %289, %cst_79 [1] : vector<16x9xf32> to vector<16xf32>
    %291 = vector.shape_cast %290 : vector<16xf32> to vector<16x1xf32>
    %cst_80 = arith.constant 9.000000e+00 : f32
    %292 = vector.broadcast %cst_80 : f32 to vector<16x1xf32>
    %293 = arith.divf %291, %292 : vector<16x1xf32>
    %294 = vector.broadcast %286 : vector<16x1xf32> to vector<16x9xf32>
    %295 = arith.subf %278, %294 : vector<16x9xf32>
    %cst_81 = arith.constant 9.99999974E-6 : f32
    %296 = vector.broadcast %cst_81 : f32 to vector<16x1xf32>
    %297 = arith.addf %293, %296 : vector<16x1xf32>
    %298 = math.rsqrt %297 : vector<16x1xf32>
    %299 = vector.broadcast %298 : vector<16x1xf32> to vector<16x9xf32>
    %300 = arith.mulf %295, %299 : vector<16x9xf32>
    %301 = vector.shape_cast %280 : vector<9xf32> to vector<1x9xf32>
    %302 = vector.broadcast %301 : vector<1x9xf32> to vector<16x9xf32>
    %303 = arith.mulf %300, %302 : vector<16x9xf32>
    %304 = vector.shape_cast %282 : vector<9xf32> to vector<1x9xf32>
    %305 = vector.broadcast %304 : vector<1x9xf32> to vector<16x9xf32>
    %306 = arith.addf %303, %305 : vector<16x9xf32>
    %307 = arith.truncf %306 : vector<16x9xf32> to vector<16x9xbf16>
    %cst_82 = arith.constant 0.000000e+00 : f32
    %308 = vector.broadcast %cst_82 : f32 to vector<16x9xf32>
    %c0_i32_83 = arith.constant 0 : i32
    %c4_i32_84 = arith.constant 4 : i32
    %309 = arith.addi %c0_i32_83, %c4_i32_84 : i32
    %c1_i32_85 = arith.constant 1 : i32
    %310 = scf.for %arg16 = %c0_i32_83 to %309 step %c1_i32_85 iter_args(%arg17 = %308) -> (vector<16x9xf32>)  : i32 {
      %c8_i32 = arith.constant 8 : i32
      %381 = arith.addi %c8_i32, %arg16 : i32
      %382 = arith.index_cast %381 : i32 to index
      %c0_111 = arith.constant 0 : index
      %c0_112 = arith.constant 0 : index
      %383 = vector.load %arg7[%382, %c0_111, %c0_112] : memref<12x9x512xbf16, #tpu.memory_space<vmem>>, vector<1x9x512xbf16>
      %384 = vector.shape_cast %383 : vector<1x9x512xbf16> to vector<9x512xbf16>
      %385 = arith.index_cast %381 : i32 to index
      %c0_113 = arith.constant 0 : index
      %c0_114 = arith.constant 0 : index
      %386 = vector.load %arg8[%385, %c0_113, %c0_114] : memref<12x1x512xf32, #tpu.memory_space<vmem>>, vector<1x1x512xf32>
      %387 = vector.shape_cast %386 : vector<1x1x512xf32> to vector<1x512xf32>
      %388 = arith.index_cast %381 : i32 to index
      %c0_115 = arith.constant 0 : index
      %c0_116 = arith.constant 0 : index
      %389 = vector.load %arg9[%388, %c0_115, %c0_116] : memref<12x9x512xbf16, #tpu.memory_space<vmem>>, vector<1x9x512xbf16>
      %390 = vector.shape_cast %389 : vector<1x9x512xbf16> to vector<9x512xbf16>
      %cst_117 = arith.constant dense<0.000000e+00> : vector<16x512xf32>
      %391 = tpu.matmul %307, %384, %cst_117 {dimension_numbers = #tpu.dot_dimension_numbers<[1], [0], [0], [1], [0, 0, 1, 1], [], []>} : vector<16x9xbf16>, vector<9x512xbf16>, vector<16x512xf32> -> vector<16x512xf32>
      %392 = vector.broadcast %387 : vector<1x512xf32> to vector<16x512xf32>
      %393 = arith.addf %391, %392 : vector<16x512xf32>
      %cst_118 = arith.constant 5.000000e-01 : f32
      %394 = vector.broadcast %cst_118 : f32 to vector<16x512xf32>
      %395 = arith.mulf %394, %393 : vector<16x512xf32>
      %cst_119 = arith.constant 0.707106769 : f32
      %396 = vector.broadcast %cst_119 : f32 to vector<16x512xf32>
      %397 = arith.mulf %393, %396 : vector<16x512xf32>
      %398 = math.erf %397 : vector<16x512xf32>
      %cst_120 = arith.constant 1.000000e+00 : f32
      %399 = vector.broadcast %cst_120 : f32 to vector<16x512xf32>
      %400 = arith.addf %399, %398 : vector<16x512xf32>
      %401 = arith.mulf %395, %400 : vector<16x512xf32>
      %402 = arith.truncf %401 : vector<16x512xf32> to vector<16x512xbf16>
      %cst_121 = arith.constant dense<0.000000e+00> : vector<16x9xf32>
      %403 = tpu.matmul %402, %390, %cst_121 {dimension_numbers = #tpu.dot_dimension_numbers<[1], [1], [0], [0], [0, 0, 1, 0], [], []>} : vector<16x512xbf16>, vector<9x512xbf16>, vector<16x9xf32> -> vector<16x9xf32>
      %404 = arith.addf %arg17, %403 : vector<16x9xf32>
      scf.yield %404 : vector<16x9xf32>
    }
    %c4_i32_86 = arith.constant 4 : i32
    %311 = vector.extract_strided_slice %236 {offsets = [6, 0], sizes = [1, 9], strides = [1, 1]} : vector<9x9xf32> to vector<1x9xf32>
    %312 = vector.shape_cast %311 : vector<1x9xf32> to vector<9xf32>
    %313 = vector.shape_cast %312 : vector<9xf32> to vector<1x9xf32>
    %314 = vector.broadcast %313 : vector<1x9xf32> to vector<16x9xf32>
    %315 = arith.addf %310, %314 : vector<16x9xf32>
    %316 = arith.addf %306, %315 : vector<16x9xf32>
    %317 = vector.extract_strided_slice %236 {offsets = [7, 0], sizes = [1, 9], strides = [1, 1]} : vector<9x9xf32> to vector<1x9xf32>
    %318 = vector.shape_cast %317 : vector<1x9xf32> to vector<9xf32>
    %319 = vector.extract_strided_slice %236 {offsets = [8, 0], sizes = [1, 9], strides = [1, 1]} : vector<9x9xf32> to vector<1x9xf32>
    %320 = vector.shape_cast %319 : vector<1x9xf32> to vector<9xf32>
    %cst_87 = arith.constant dense<0.000000e+00> : vector<16xf32>
    %321 = vector.multi_reduction <add>, %316, %cst_87 [1] : vector<16x9xf32> to vector<16xf32>
    %322 = vector.shape_cast %321 : vector<16xf32> to vector<16x1xf32>
    %cst_88 = arith.constant 9.000000e+00 : f32
    %323 = vector.broadcast %cst_88 : f32 to vector<16x1xf32>
    %324 = arith.divf %322, %323 : vector<16x1xf32>
    %325 = vector.broadcast %324 : vector<16x1xf32> to vector<16x9xf32>
    %326 = arith.subf %316, %325 : vector<16x9xf32>
    %327 = arith.mulf %326, %326 : vector<16x9xf32>
    %cst_89 = arith.constant dense<0.000000e+00> : vector<16xf32>
    %328 = vector.multi_reduction <add>, %327, %cst_89 [1] : vector<16x9xf32> to vector<16xf32>
    %329 = vector.shape_cast %328 : vector<16xf32> to vector<16x1xf32>
    %cst_90 = arith.constant 9.000000e+00 : f32
    %330 = vector.broadcast %cst_90 : f32 to vector<16x1xf32>
    %331 = arith.divf %329, %330 : vector<16x1xf32>
    %332 = vector.broadcast %324 : vector<16x1xf32> to vector<16x9xf32>
    %333 = arith.subf %316, %332 : vector<16x9xf32>
    %cst_91 = arith.constant 9.99999974E-6 : f32
    %334 = vector.broadcast %cst_91 : f32 to vector<16x1xf32>
    %335 = arith.addf %331, %334 : vector<16x1xf32>
    %336 = math.rsqrt %335 : vector<16x1xf32>
    %337 = vector.broadcast %336 : vector<16x1xf32> to vector<16x9xf32>
    %338 = arith.mulf %333, %337 : vector<16x9xf32>
    %339 = vector.shape_cast %318 : vector<9xf32> to vector<1x9xf32>
    %340 = vector.broadcast %339 : vector<1x9xf32> to vector<16x9xf32>
    %341 = arith.mulf %338, %340 : vector<16x9xf32>
    %342 = vector.shape_cast %320 : vector<9xf32> to vector<1x9xf32>
    %343 = vector.broadcast %342 : vector<1x9xf32> to vector<16x9xf32>
    %344 = arith.addf %341, %343 : vector<16x9xf32>
    %c0_92 = arith.constant 0 : index
    %c0_93 = arith.constant 0 : index
    %345 = vector.load %arg14[%c0_92, %c0_93] : memref<4x64xf32, #tpu.memory_space<vmem>>, vector<4x64xf32>
    %c0_94 = arith.constant 0 : index
    %c0_95 = arith.constant 0 : index
    %346 = vector.load %arg10[%c0_94, %c0_95] : memref<9x64xf32, #tpu.memory_space<vmem>>, vector<9x64xf32>
    %cst_96 = arith.constant dense<0.000000e+00> : vector<16x64xf32>
    %347 = tpu.matmul %344, %346, %cst_96 {dimension_numbers = #tpu.dot_dimension_numbers<[1], [0], [0], [1], [0, 0, 1, 1], [], []>} : vector<16x9xf32>, vector<9x64xf32>, vector<16x64xf32> -> vector<16x64xf32>
    %348 = vector.extract_strided_slice %345 {offsets = [0, 0], sizes = [1, 64], strides = [1, 1]} : vector<4x64xf32> to vector<1x64xf32>
    %349 = vector.shape_cast %348 : vector<1x64xf32> to vector<64xf32>
    %350 = vector.shape_cast %349 : vector<64xf32> to vector<1x64xf32>
    %351 = vector.broadcast %350 : vector<1x64xf32> to vector<16x64xf32>
    %352 = arith.addf %347, %351 : vector<16x64xf32>
    %cst_97 = arith.constant 0.000000e+00 : f32
    %353 = vector.broadcast %cst_97 : f32 to vector<16x64xf32>
    %354 = arith.maximumf %352, %353 : vector<16x64xf32>
    %c0_98 = arith.constant 0 : index
    %c0_99 = arith.constant 0 : index
    %355 = vector.load %arg11[%c0_98, %c0_99] : memref<64x32xf32, #tpu.memory_space<vmem>>, vector<64x32xf32>
    %cst_100 = arith.constant dense<0.000000e+00> : vector<16x32xf32>
    %356 = tpu.matmul %354, %355, %cst_100 {dimension_numbers = #tpu.dot_dimension_numbers<[1], [0], [0], [1], [0, 0, 1, 1], [], []>} : vector<16x64xf32>, vector<64x32xf32>, vector<16x32xf32> -> vector<16x32xf32>
    %357 = vector.extract_strided_slice %345 {offsets = [1, 0], sizes = [1, 32], strides = [1, 1]} : vector<4x64xf32> to vector<1x32xf32>
    %358 = vector.shape_cast %357 : vector<1x32xf32> to vector<32xf32>
    %359 = vector.shape_cast %358 : vector<32xf32> to vector<1x32xf32>
    %360 = vector.broadcast %359 : vector<1x32xf32> to vector<16x32xf32>
    %361 = arith.addf %356, %360 : vector<16x32xf32>
    %cst_101 = arith.constant 0.000000e+00 : f32
    %362 = vector.broadcast %cst_101 : f32 to vector<16x32xf32>
    %363 = arith.maximumf %361, %362 : vector<16x32xf32>
    %c0_102 = arith.constant 0 : index
    %c0_103 = arith.constant 0 : index
    %364 = vector.load %arg12[%c0_102, %c0_103] : memref<32x16xf32, #tpu.memory_space<vmem>>, vector<32x16xf32>
    %cst_104 = arith.constant dense<0.000000e+00> : vector<16x16xf32>
    %365 = tpu.matmul %363, %364, %cst_104 {dimension_numbers = #tpu.dot_dimension_numbers<[1], [0], [0], [1], [0, 0, 1, 1], [], []>} : vector<16x32xf32>, vector<32x16xf32>, vector<16x16xf32> -> vector<16x16xf32>
    %366 = vector.extract_strided_slice %345 {offsets = [2, 0], sizes = [1, 16], strides = [1, 1]} : vector<4x64xf32> to vector<1x16xf32>
    %367 = vector.shape_cast %366 : vector<1x16xf32> to vector<16xf32>
    %368 = vector.shape_cast %367 : vector<16xf32> to vector<1x16xf32>
    %369 = vector.broadcast %368 : vector<1x16xf32> to vector<16x16xf32>
    %370 = arith.addf %365, %369 : vector<16x16xf32>
    %cst_105 = arith.constant 0.000000e+00 : f32
    %371 = vector.broadcast %cst_105 : f32 to vector<16x16xf32>
    %372 = arith.maximumf %370, %371 : vector<16x16xf32>
    %c0_106 = arith.constant 0 : index
    %c0_107 = arith.constant 0 : index
    %373 = vector.load %arg13[%c0_106, %c0_107] : memref<16x1xf32, #tpu.memory_space<vmem>>, vector<16x1xf32>
    %cst_108 = arith.constant dense<0.000000e+00> : vector<16x1xf32>
    %374 = tpu.matmul %372, %373, %cst_108 {dimension_numbers = #tpu.dot_dimension_numbers<[1], [0], [0], [1], [0, 0, 1, 1], [], []>} : vector<16x16xf32>, vector<16x1xf32>, vector<16x1xf32> -> vector<16x1xf32>
    %375 = vector.extract_strided_slice %345 {offsets = [3, 0], sizes = [1, 1], strides = [1, 1]} : vector<4x64xf32> to vector<1x1xf32>
    %376 = vector.shape_cast %375 : vector<1x1xf32> to vector<1xf32>
    %377 = vector.shape_cast %376 : vector<1xf32> to vector<1x1xf32>
    %378 = vector.broadcast %377 : vector<1x1xf32> to vector<16x1xf32>
    %379 = arith.addf %374, %378 : vector<16x1xf32>
    %c0_109 = arith.constant 0 : index
    %c0_110 = arith.constant 0 : index
    %380 = vector.load %arg15[%c0_109, %c0_110] : memref<16x1xf32, #tpu.memory_space<vmem>>, vector<16x1xf32>
    tpu.vector_store %arg15[%c0_109, %c0_110], %379 {strides = array<i32>} : memref<16x1xf32, #tpu.memory_space<vmem>>, vector<16x1xf32>,
    return
  }
}

</mosaic_0001>

<llo_original>
// kernel: transformer_light_forward.1
$region0: #{transformer_light_forward.1}
  #allocation0 [shape = 'u32[]', space=smem, size = 0x4, offset = 0x4, fixed_abs, tag = 'smem constant byte address 0x4 - core index']
  #allocation1 [shape = 'u32[144,128]{1,0:T(1,128)}', space=vmem, size = 0x12000, scoped, tag = 'internal scratch']
  %s0 = inlined_call_operand.vmem [shape: f32[16,9], index: 0, kind: input, shape index: {}]
  %s1 = inlined_call_operand.vmem [shape: f32[16,16], index: 1, kind: input, shape index: {}]
  %s2 = inlined_call_operand.vmem [shape: f32[9,9], index: 2, kind: input, shape index: {}]
  %s3 = inlined_call_operand.vmem [shape: f32[2,9], index: 3, kind: input, shape index: {}]
  %s4 = inlined_call_operand.vmem [shape: f32[3,9,27], index: 4, kind: input, shape index: {}]
  %s5 = inlined_call_operand.vmem [shape: f32[3,9,9], index: 5, kind: input, shape index: {}]
  %s6 = inlined_call_operand.vmem [shape: f32[3,9,9], index: 6, kind: input, shape index: {}]
  %s7 = inlined_call_operand.vmem [shape: bf16[12,9,512], index: 7, kind: input, shape index: {}]
  %s8 = inlined_call_operand.vmem [shape: f32[12,1,512], index: 8, kind: input, shape index: {}]
  %s9 = inlined_call_operand.vmem [shape: bf16[12,9,512], index: 9, kind: input, shape index: {}]
  %s10 = inlined_call_operand.vmem [shape: f32[9,64], index: 10, kind: input, shape index: {}]
  %s11 = inlined_call_operand.vmem [shape: f32[64,32], index: 11, kind: input, shape index: {}]
  %s12 = inlined_call_operand.vmem [shape: f32[32,16], index: 12, kind: input, shape index: {}]
  %s13 = inlined_call_operand.vmem [shape: f32[16,1], index: 13, kind: input, shape index: {}]
  %s14 = inlined_call_operand.vmem [shape: f32[4,64], index: 14, kind: input, shape index: {}]
  %s15 = inlined_call_operand.vmem [shape: f32[16,1], index: 15, kind: output, shape index: {}]
  %s16 = sld [smem:[#allocation0]]
  $region91: #{transformer_light_forward.1} parent=0
    _
  %s18 = ssub.s32 1, %s16
  %s19 = scalar_select 0, %s18, %s16
  // Predicated region
  $region2: #{transformer_light_forward.1} parent=0 // pred_check
    _
  $region3: #{transformer_light_forward.1} parent=0 // pred_check_branch
    %21 = sbr.rel (0) target = $region5
  $region4: #{transformer_light_forward.1} parent=0 // pred_region
    _
  $region5: #{transformer_light_forward.1} parent=0 // pred_fallthru
    _
  // Predicated region
  $region6: #{transformer_light_forward.1} parent=0 // pred_check
    _
  $region7: #{transformer_light_forward.1} parent=0 // pred_check_branch
    %23 = sbr.rel (0) target = $region9
  $region8: #{transformer_light_forward.1} parent=0 // pred_region
    _
  $region9: #{transformer_light_forward.1} parent=0 // pred_fallthru
    _
  // Predicated region
  $region10: #{transformer_light_forward.1} parent=0 // pred_check
    _
  $region11: #{transformer_light_forward.1} parent=0 // pred_check_branch
    %25 = sbr.rel (0) target = $region13
  $region12: #{transformer_light_forward.1} parent=0 // pred_region
    _
  $region13: #{transformer_light_forward.1} parent=0 // pred_fallthru
    _
  // Predicated region
  $region14: #{transformer_light_forward.1} parent=0 // pred_check
    _
  $region15: #{transformer_light_forward.1} parent=0 // pred_check_branch
    %27 = sbr.rel (0) target = $region17
  $region16: #{transformer_light_forward.1} parent=0 // pred_region
    _
  $region17: #{transformer_light_forward.1} parent=0 // pred_fallthru
    _
  // Predicated region
  $region18: #{transformer_light_forward.1} parent=0 // pred_check
    _
  $region19: #{transformer_light_forward.1} parent=0 // pred_check_branch
    %29 = sbr.rel (0) target = $region21
  $region20: #{transformer_light_forward.1} parent=0 // pred_region
    _
  $region21: #{transformer_light_forward.1} parent=0 // pred_fallthru
    _
  // Predicated region
  $region22: #{transformer_light_forward.1} parent=0 // pred_check
    _
  $region23: #{transformer_light_forward.1} parent=0 // pred_check_branch
    %31 = sbr.rel (0) target = $region25
  $region24: #{transformer_light_forward.1} parent=0 // pred_region
    _
  $region25: #{transformer_light_forward.1} parent=0 // pred_fallthru
    _
  // Predicated region
  $region26: #{transformer_light_forward.1} parent=0 // pred_check
    _
  $region27: #{transformer_light_forward.1} parent=0 // pred_check_branch
    %33 = sbr.rel (0) target = $region29
  $region28: #{transformer_light_forward.1} parent=0 // pred_region
    _
  $region29: #{transformer_light_forward.1} parent=0 // pred_fallthru
    _
  // Predicated region
  $region30: #{transformer_light_forward.1} parent=0 // pred_check
    _
  $region31: #{transformer_light_forward.1} parent=0 // pred_check_branch
    %35 = sbr.rel (0) target = $region33
  $region32: #{transformer_light_forward.1} parent=0 // pred_region
    _
  $region33: #{transformer_light_forward.1} parent=0 // pred_fallthru
    _
  // Predicated region
  $region34: #{transformer_light_forward.1} parent=0 // pred_check
    _
  $region35: #{transformer_light_forward.1} parent=0 // pred_check_branch
    %37 = sbr.rel (0) target = $region37
  $region36: #{transformer_light_forward.1} parent=0 // pred_region
    _
  $region37: #{transformer_light_forward.1} parent=0 // pred_fallthru
    _
  // Predicated region
  $region38: #{transformer_light_forward.1} parent=0 // pred_check
    _
  $region39: #{transformer_light_forward.1} parent=0 // pred_check_branch
    %39 = sbr.rel (0) target = $region41
  $region40: #{transformer_light_forward.1} parent=0 // pred_region
    _
  $region41: #{transformer_light_forward.1} parent=0 // pred_fallthru
    _
  // Predicated region
  $region42: #{transformer_light_forward.1} parent=0 // pred_check
    _
  $region43: #{transformer_light_forward.1} parent=0 // pred_check_branch
    %41 = sbr.rel (0) target = $region45
  $region44: #{transformer_light_forward.1} parent=0 // pred_region
    _
  $region45: #{transformer_light_forward.1} parent=0 // pred_fallthru
    _
  // Predicated region
  $region46: #{transformer_light_forward.1} parent=0 // pred_check
    _
  $region47: #{transformer_light_forward.1} parent=0 // pred_check_branch
    %43 = sbr.rel (0) target = $region49
  $region48: #{transformer_light_forward.1} parent=0 // pred_region
    _
  $region49: #{transformer_light_forward.1} parent=0 // pred_fallthru
    _
  // Predicated region
  $region50: #{transformer_light_forward.1} parent=0 // pred_check
    _
  $region51: #{transformer_light_forward.1} parent=0 // pred_check_branch
    %45 = sbr.rel (0) target = $region53
  $region52: #{transformer_light_forward.1} parent=0 // pred_region
    _
  $region53: #{transformer_light_forward.1} parent=0 // pred_fallthru
    _
  // Predicated region
  $region54: #{transformer_light_forward.1} parent=0 // pred_check
    _
  $region55: #{transformer_light_forward.1} parent=0 // pred_check_branch
    %47 = sbr.rel (0) target = $region57
  $region56: #{transformer_light_forward.1} parent=0 // pred_region
    _
  $region57: #{transformer_light_forward.1} parent=0 // pred_fallthru
    _
  // Predicated region
  $region58: #{transformer_light_forward.1} parent=0 // pred_check
    _
  $region59: #{transformer_light_forward.1} parent=0 // pred_check_branch
    %49 = sbr.rel (0) target = $region61
  $region60: #{transformer_light_forward.1} parent=0 // pred_region
    _
  $region61: #{transformer_light_forward.1} parent=0 // pred_fallthru
    _
  %v51 = vld [vmem:[%s0] sm:$0xff]
  %v52 = vld [vmem:[%s0 + $0x8] sm:$0xff]
  %v53 = vld [vmem:[%s3] sm:$0x3]
  %v54 = vld [vmem:[%s1] sm:$0xff]
  %v55 = vld [vmem:[%s1 + $0x8] sm:$0xff]
  %v56 = vld [vmem:[%s2] sm:$0xff]
  %v57 = vld [vmem:[%s2 + $0x8] sm:$0x1]
  %v58 = vlaneseq
  %v59 = vshrl.u32 %v58, 7
  %v60 = vsub.s32 0, %v59
  %v61 = vrot.slane %v53, %v60
  %vm62 = vcmask 72704
  %v64 = vsel %vm62, %v51, 0
  %v67 = vsel %vm62, %v52, 0
  %vm69 = vcmask 1040384
  %v71 = vsel %vm69, %v57, 0
  %73 = vmatprep.subr.mxu0 0.0
  %74 = vmatpush1.msra.mxu0 %v56
  %75 = vmatprep.subr.mxu0 0.0
  %76 = vmatpush1.msra.mxu0 %v71
  %77 = vmatprep.subr.mxu0 0.0
  %78 = vmatpush1.msra.mxu0 0.0
  %79 = vmatprep.subr.mxu0 0.0
  %80 = vmatpush1.msra.mxu0 0.0
  %81 = vmatprep.subr.mxu0 0.0
  %82 = vmatpush1.msra.mxu0 0.0
  %83 = vmatprep.subr.mxu0 0.0
  %84 = vmatpush1.msra.mxu0 0.0
  %85 = vmatprep.subr.mxu0 0.0
  %86 = vmatpush1.msra.mxu0 0.0
  %87 = vmatprep.subr.mxu0 0.0
  %88 = vmatpush1.msra.mxu0 0.0
  %89 = vmatprep.subr.mxu0 0.0
  %90 = vmatpush1.msra.mxu0 0.0
  %91 = vmatprep.subr.mxu0 0.0
  %92 = vmatpush1.msra.mxu0 0.0
  %93 = vmatprep.subr.mxu0 0.0
  %94 = vmatpush1.msra.mxu0 0.0
  %95 = vmatprep.subr.mxu0 0.0
  %96 = vmatpush1.msra.mxu0 0.0
  %97 = vmatprep.subr.mxu0 0.0
  %98 = vmatpush1.msra.mxu0 0.0
  %99 = vmatprep.subr.mxu0 0.0
  %100 = vmatpush1.msra.mxu0 0.0
  %101 = vmatprep.subr.mxu0 0.0
  %102 = vmatpush1.msra.mxu0 0.0
  %103 = vmatprep.subr.mxu0 0.0
  %104 = vmatpush1.msra.mxu0 0.0
  %105 = vmatprep.subr.mxu0 0.0
  %106 = vmatpush1.msra.mxu0 0.0
  %107 = vmatprep.subr.mxu0 0.0
  %108 = vmatpush1.msra.mxu0 0.0
  %109 = vmatprep.subr.mxu0 0.0
  %110 = vmatpush1.msra.mxu0 0.0
  %111 = vmatprep.subr.mxu0 0.0
  %112 = vmatpush1.msra.mxu0 0.0
  %113 = vmatprep.subr.mxu0 0.0
  %114 = vmatpush1.msra.mxu0 0.0
  %115 = vmatprep.subr.mxu0 0.0
  %116 = vmatpush1.msra.mxu0 0.0
  %117 = vmatprep.subr.mxu0 0.0
  %118 = vmatpush1.msra.mxu0 0.0
  %119 = vmatprep.subr.mxu0 0.0
  %120 = vmatpush1.msra.mxu0 0.0
  %121 = vmatprep.subr.mxu0 0.0
  %122 = vmatpush1.msra.mxu0 0.0
  %123 = vmatprep.subr.mxu0 0.0
  %124 = vmatpush1.msra.mxu0 0.0
  %125 = vmatprep.subr.mxu0 0.0
  %126 = vmatpush1.msra.mxu0 0.0
  %127 = vmatprep.subr.mxu0 0.0
  %128 = vmatpush1.msra.mxu0 0.0
  %129 = vmatprep.subr.mxu0 0.0
  %130 = vmatpush1.msra.mxu0 0.0
  %131 = vmatprep.subr.mxu0 0.0
  %132 = vmatpush1.msra.mxu0 0.0
  %133 = vmatprep.subr.mxu0 0.0
  %134 = vmatpush1.msra.mxu0 0.0
  %135 = vmatprep.subr.mxu0 0.0
  %136 = vmatpush1.msra.mxu0 0.0
  %137 = vmatprep.mubr.f32.mxu0 0.0
  %138 = vmatmul.mubr.f32.gmra.mrb[0].mxu0 %v64
  %v139 = vpop.f32.mrb[0].mxu0
  %v140 = vadd.f32 %v61, %v139
  %v141 = vpop.f32.mrb[0].mxu0
  %142 = vmatprep.mubr.f32.mxu0 0.0
  %143 = vmatmul.mubr.f32.gmra.mrb[0].mxu0 %v67
  %v144 = vpop.f32.mrb[0].mxu0
  %v145 = vadd.f32 %v61, %v144
  %v146 = vpop.f32.mrb[0].mxu0
  %147 = vdwg.mxu0
  %v148 = vlaneseq
  %v149 = vshrl.u32 %v148, 7
  %v150 = vsub.s32 1, %v149
  %v151 = vrot.slane %v53, %v150
  %v152 = vadd.f32 %v140, %v151
  %v153 = vadd.f32 %v145, %v151
  %v154 = vld [vmem:[%s6] sm:$0xff]
  %v155 = vld [vmem:[%s6 + $0x8] sm:$0x1]
  %v156 = vld [vmem:[%s4] sm:$0xff]
  %v157 = vld [vmem:[%s4 + $0x8] sm:$0x1]
  %v159 = vsel %vm62, %v152, 0
  %v162 = vsel %vm62, %v153, 0
  %v165 = vsel %vm69, %v157, 0
  %167 = vmatprep.subr.mxu0 0.0
  %168 = vmatpush1.msra.mxu0 %v156
  %169 = vmatprep.subr.mxu0 0.0
  %170 = vmatpush1.msra.mxu0 %v165
  %171 = vmatprep.subr.mxu0 0.0
  %172 = vmatpush1.msra.mxu0 0.0
  %173 = vmatprep.subr.mxu0 0.0
  %174 = vmatpush1.msra.mxu0 0.0
  %175 = vmatprep.subr.mxu0 0.0
  %176 = vmatpush1.msra.mxu0 0.0
  %177 = vmatprep.subr.mxu0 0.0
  %178 = vmatpush1.msra.mxu0 0.0
  %179 = vmatprep.subr.mxu0 0.0
  %180 = vmatpush1.msra.mxu0 0.0
  %181 = vmatprep.subr.mxu0 0.0
  %182 = vmatpush1.msra.mxu0 0.0
  %183 = vmatprep.subr.mxu0 0.0
  %184 = vmatpush1.msra.mxu0 0.0
  %185 = vmatprep.subr.mxu0 0.0
  %186 = vmatpush1.msra.mxu0 0.0
  %187 = vmatprep.subr.mxu0 0.0
  %188 = vmatpush1.msra.mxu0 0.0
  %189 = vmatprep.subr.mxu0 0.0
  %190 = vmatpush1.msra.mxu0 0.0
  %191 = vmatprep.subr.mxu0 0.0
  %192 = vmatpush1.msra.mxu0 0.0
  %193 = vmatprep.subr.mxu0 0.0
  %194 = vmatpush1.msra.mxu0 0.0
  %195 = vmatprep.subr.mxu0 0.0
  %196 = vmatpush1.msra.mxu0 0.0
  %197 = vmatprep.subr.mxu0 0.0
  %198 = vmatpush1.msra.mxu0 0.0
  %199 = vmatprep.subr.mxu0 0.0
  %200 = vmatpush1.msra.mxu0 0.0
  %201 = vmatprep.subr.mxu0 0.0
  %202 = vmatpush1.msra.mxu0 0.0
  %203 = vmatprep.subr.mxu0 0.0
  %204 = vmatpush1.msra.mxu0 0.0
  %205 = vmatprep.subr.mxu0 0.0
  %206 = vmatpush1.msra.mxu0 0.0
  %207 = vmatprep.subr.mxu0 0.0
  %208 = vmatpush1.msra.mxu0 0.0
  %209 = vmatprep.subr.mxu0 0.0
  %210 = vmatpush1.msra.mxu0 0.0
  %211 = vmatprep.subr.mxu0 0.0
  %212 = vmatpush1.msra.mxu0 0.0
  %213 = vmatprep.subr.mxu0 0.0
  %214 = vmatpush1.msra.mxu0 0.0
  %215 = vmatprep.subr.mxu0 0.0
  %216 = vmatpush1.msra.mxu0 0.0
  %217 = vmatprep.subr.mxu0 0.0
  %218 = vmatpush1.msra.mxu0 0.0
  %219 = vmatprep.subr.mxu0 0.0
  %220 = vmatpush1.msra.mxu0 0.0
  %221 = vmatprep.subr.mxu0 0.0
  %222 = vmatpush1.msra.mxu0 0.0
  %223 = vmatprep.subr.mxu0 0.0
  %224 = vmatpush1.msra.mxu0 0.0
  %225 = vmatprep.subr.mxu0 0.0
  %226 = vmatpush1.msra.mxu0 0.0
  %227 = vmatprep.subr.mxu0 0.0
  %228 = vmatpush1.msra.mxu0 0.0
  %229 = vmatprep.subr.mxu0 0.0
  %230 = vmatpush1.msra.mxu0 0.0
  %231 = vmatprep.mubr.f32.mxu0 0.0
  %232 = vmatmul.mubr.f32.gmra.mrb[0].mxu0 %v159
  %v233 = vpop.f32.mrb[0].mxu0
  %v234 = vadd.f32 0.0, %v233
  %v235 = vpop.f32.mrb[0].mxu0
  %236 = vmatprep.mubr.f32.mxu0 0.0
  %237 = vmatmul.mubr.f32.gmra.mrb[0].mxu0 %v162
  %v238 = vpop.f32.mrb[0].mxu0
  %v239 = vadd.f32 0.0, %v238
  %v240 = vpop.f32.mrb[0].mxu0
  %241 = vdwg.mxu0
  %v242 = vlaneseq
  %v243 = vshrl.u32 %v242, 7
  %v244 = vsub.s32 0, %v243
  %v245 = vrot.slane %v154, %v244
  %v246 = vadd.f32 %v234, %v245
  %v247 = vadd.f32 %v239, %v245
  %v248 = vlaneseq
  %v249 = vshrl.u32 %v248, 7
  %v250 = vsub.s32 1, %v249
  %v251 = vrot.slane %v154, %v250
  %253 = vrot.lane.b32.xlu0 %v251, 9
  %v254 = vpop.permute.xlu0 %253
  %v256 = vadd.f32 %v234, %v254
  %v257 = vadd.f32 %v239, %v254
  %v258 = vlaneseq
  %v259 = vshrl.u32 %v258, 7
  %v260 = vsub.s32 2, %v259
  %v261 = vrot.slane %v154, %v260
  %263 = vrot.lane.b32.xlu0 %v261, 18
  %v264 = vpop.permute.xlu0 %263
  %v266 = vadd.f32 %v234, %v264
  %v267 = vadd.f32 %v239, %v264
  %270 = vrot.lane.b32.xlu0 %v256, 119
  %v271 = vpop.permute.xlu0 %270
  %272 = vrot.lane.b32.xlu0 %v257, 119
  %v273 = vpop.permute.xlu0 %272
  %v275 = vsel %vm62, %v246, 0
  %v278 = vsel %vm62, %v247, 0
  %v280 = vsel %vm62, %v271, 0
  %v282 = vsel %vm62, %v273, 0
  %284 = vmatprep.subr.mxu0 0.0
  %285 = vmatpush1.xpose.msra.mxu0 %v280
  %286 = vmatprep.subr.mxu0 0.0
  %287 = vmatpush1.xpose.msra.mxu0 %v282
  %288 = vmatprep.subr.mxu0 0.0
  %289 = vmatpush1.xpose.msra.mxu0 0.0
  %290 = vmatprep.subr.mxu0 0.0
  %291 = vmatpush1.xpose.msra.mxu0 0.0
  %292 = vmatprep.subr.mxu0 0.0
  %293 = vmatpush1.xpose.msra.mxu0 0.0
  %294 = vmatprep.subr.mxu0 0.0
  %295 = vmatpush1.xpose.msra.mxu0 0.0
  %296 = vmatprep.subr.mxu0 0.0
  %297 = vmatpush1.xpose.msra.mxu0 0.0
  %298 = vmatprep.subr.mxu0 0.0
  %299 = vmatpush1.xpose.msra.mxu0 0.0
  %300 = vmatprep.subr.mxu0 0.0
  %301 = vmatpush1.xpose.msra.mxu0 0.0
  %302 = vmatprep.subr.mxu0 0.0
  %303 = vmatpush1.xpose.msra.mxu0 0.0
  %304 = vmatprep.subr.mxu0 0.0
  %305 = vmatpush1.xpose.msra.mxu0 0.0
  %306 = vmatprep.subr.mxu0 0.0
  %307 = vmatpush1.xpose.msra.mxu0 0.0
  %308 = vmatprep.subr.mxu0 0.0
  %309 = vmatpush1.xpose.msra.mxu0 0.0
  %310 = vmatprep.subr.mxu0 0.0
  %311 = vmatpush1.xpose.msra.mxu0 0.0
  %312 = vmatprep.subr.mxu0 0.0
  %313 = vmatpush1.xpose.msra.mxu0 0.0
  %314 = vmatprep.subr.mxu0 0.0
  %315 = vmatpush1.xpose.msra.mxu0 0.0
  %316 = vmatprep.subr.mxu0 0.0
  %317 = vmatpush1.xpose.msra.mxu0 0.0
  %318 = vmatprep.subr.mxu0 0.0
  %319 = vmatpush1.xpose.msra.mxu0 0.0
  %320 = vmatprep.subr.mxu0 0.0
  %321 = vmatpush1.xpose.msra.mxu0 0.0
  %322 = vmatprep.subr.mxu0 0.0
  %323 = vmatpush1.xpose.msra.mxu0 0.0
  %324 = vmatprep.subr.mxu0 0.0
  %325 = vmatpush1.xpose.msra.mxu0 0.0
  %326 = vmatprep.subr.mxu0 0.0
  %327 = vmatpush1.xpose.msra.mxu0 0.0
  %328 = vmatprep.subr.mxu0 0.0
  %329 = vmatpush1.xpose.msra.mxu0 0.0
  %330 = vmatprep.subr.mxu0 0.0
  %331 = vmatpush1.xpose.msra.mxu0 0.0
  %332 = vmatprep.subr.mxu0 0.0
  %333 = vmatpush1.xpose.msra.mxu0 0.0
  %334 = vmatprep.subr.mxu0 0.0
  %335 = vmatpush1.xpose.msra.mxu0 0.0
  %336 = vmatprep.subr.mxu0 0.0
  %337 = vmatpush1.xpose.msra.mxu0 0.0
  %338 = vmatprep.subr.mxu0 0.0
  %339 = vmatpush1.xpose.msra.mxu0 0.0
  %340 = vmatprep.subr.mxu0 0.0
  %341 = vmatpush1.xpose.msra.mxu0 0.0
  %342 = vmatprep.subr.mxu0 0.0
  %343 = vmatpush1.xpose.msra.mxu0 0.0
  %344 = vmatprep.subr.mxu0 0.0
  %345 = vmatpush1.xpose.msra.mxu0 0.0
  %346 = vmatprep.subr.mxu0 0.0
  %347 = vmatpush1.xpose.msra.mxu0 0.0
  %348 = vmatprep.mubr.f32.mxu0 0.0
  %349 = vmatmul.mubr.f32.gmra.mrb[0].mxu0 %v275
  %v350 = vpop.f32.mrb[0].mxu0
  %v351 = vadd.f32 %v54, %v350
  %v352 = vpop.f32.mrb[0].mxu0
  %353 = vmatprep.mubr.f32.mxu0 0.0
  %354 = vmatmul.mubr.f32.gmra.mrb[0].mxu0 %v278
  %v355 = vpop.f32.mrb[0].mxu0
  %v356 = vadd.f32 %v55, %v355
  %v357 = vpop.f32.mrb[0].mxu0
  %358 = vdwg.mxu0
  %vm359 = vcmask 130048
  %v360 = vsel %vm359, %v351, -inf
  %361 = vmax.xlane.f32.xlu0 %v360
  %v362 = vpop.xlane.xlu0 %361
  %v363 = vsel %vm359, %v356, -inf
  %364 = vmax.xlane.f32.xlu0 %v363
  %v365 = vpop.xlane.xlu0 %364
  %v366 = vsub.f32 %v351, %v362
  %v367 = vsub.f32 %v356, %v365
  %v368 = vmul.f32 %v366, 1.442695
  %v369 = vpow.pop %v368
  %v370 = vmul.f32 %v367, 1.442695
  %v371 = vpow.pop %v370
  %v372 = vsel %vm359, %v369, 0.0
  %373 = vadd.xlane.f32.xlu0 %v372
  %v374 = vpop.xlane.xlu0 %373
  %v375 = vsel %vm359, %v371, 0.0
  %376 = vadd.xlane.f32.xlu0 %v375
  %v377 = vpop.xlane.xlu0 %376
  %v378 = vrcp.pop %v374
  %v379 = vmul.f32 %v369, %v378
  %v380 = vrcp.pop %v377
  %v381 = vmul.f32 %v371, %v380
  %384 = vrot.lane.b32.xlu0 %v266, 110
  %v385 = vpop.permute.xlu0 %384
  %386 = vrot.lane.b32.xlu0 %v267, 110
  %v387 = vpop.permute.xlu0 %386
  %v391 = vsel %vm359, %v379, 0
  %v394 = vsel %vm359, %v381, 0
  %396 = vmatprep.subr.mxu0 0.0
  %397 = vmatpush1.msra.mxu0 %v385
  %398 = vmatprep.subr.mxu0 0.0
  %399 = vmatpush1.msra.mxu0 %v387
  %400 = vmatprep.subr.mxu0 0.0
  %401 = vmatpush1.msra.mxu0 0.0
  %402 = vmatprep.subr.mxu0 0.0
  %403 = vmatpush1.msra.mxu0 0.0
  %404 = vmatprep.subr.mxu0 0.0
  %405 = vmatpush1.msra.mxu0 0.0
  %406 = vmatprep.subr.mxu0 0.0
  %407 = vmatpush1.msra.mxu0 0.0
  %408 = vmatprep.subr.mxu0 0.0
  %409 = vmatpush1.msra.mxu0 0.0
  %410 = vmatprep.subr.mxu0 0.0
  %411 = vmatpush1.msra.mxu0 0.0
  %412 = vmatprep.subr.mxu0 0.0
  %413 = vmatpush1.msra.mxu0 0.0
  %414 = vmatprep.subr.mxu0 0.0
  %415 = vmatpush1.msra.mxu0 0.0
  %416 = vmatprep.subr.mxu0 0.0
  %417 = vmatpush1.msra.mxu0 0.0
  %418 = vmatprep.subr.mxu0 0.0
  %419 = vmatpush1.msra.mxu0 0.0
  %420 = vmatprep.subr.mxu0 0.0
  %421 = vmatpush1.msra.mxu0 0.0
  %422 = vmatprep.subr.mxu0 0.0
  %423 = vmatpush1.msra.mxu0 0.0
  %424 = vmatprep.subr.mxu0 0.0
  %425 = vmatpush1.msra.mxu0 0.0
  %426 = vmatprep.subr.mxu0 0.0
  %427 = vmatpush1.msra.mxu0 0.0
  %428 = vmatprep.subr.mxu0 0.0
  %429 = vmatpush1.msra.mxu0 0.0
  %430 = vmatprep.subr.mxu0 0.0
  %431 = vmatpush1.msra.mxu0 0.0
  %432 = vmatprep.subr.mxu0 0.0
  %433 = vmatpush1.msra.mxu0 0.0
  %434 = vmatprep.subr.mxu0 0.0
  %435 = vmatpush1.msra.mxu0 0.0
  %436 = vmatprep.subr.mxu0 0.0
  %437 = vmatpush1.msra.mxu0 0.0
  %438 = vmatprep.subr.mxu0 0.0
  %439 = vmatpush1.msra.mxu0 0.0
  %440 = vmatprep.subr.mxu0 0.0
  %441 = vmatpush1.msra.mxu0 0.0
  %442 = vmatprep.subr.mxu0 0.0
  %443 = vmatpush1.msra.mxu0 0.0
  %444 = vmatprep.subr.mxu0 0.0
  %445 = vmatpush1.msra.mxu0 0.0
  %446 = vmatprep.subr.mxu0 0.0
  %447 = vmatpush1.msra.mxu0 0.0
  %448 = vmatprep.subr.mxu0 0.0
  %449 = vmatpush1.msra.mxu0 0.0
  %450 = vmatprep.subr.mxu0 0.0
  %451 = vmatpush1.msra.mxu0 0.0
  %452 = vmatprep.subr.mxu0 0.0
  %453 = vmatpush1.msra.mxu0 0.0
  %454 = vmatprep.subr.mxu0 0.0
  %455 = vmatpush1.msra.mxu0 0.0
  %456 = vmatprep.subr.mxu0 0.0
  %457 = vmatpush1.msra.mxu0 0.0
  %458 = vmatprep.subr.mxu0 0.0
  %459 = vmatpush1.msra.mxu0 0.0
  %460 = vmatprep.mubr.f32.mxu0 0.0
  %461 = vmatmul.mubr.f32.gmra.mrb[0].mxu0 %v391
  %v462 = vpop.f32.mrb[0].mxu0
  %v463 = vadd.f32 0.0, %v462
  %v464 = vpop.f32.mrb[0].mxu0
  %465 = vmatprep.mubr.f32.mxu0 0.0
  %466 = vmatmul.mubr.f32.gmra.mrb[0].mxu0 %v394
  %v467 = vpop.f32.mrb[0].mxu0
  %v468 = vadd.f32 0.0, %v467
  %v469 = vpop.f32.mrb[0].mxu0
  %470 = vdwg.mxu0
  %v471 = vld [vmem:[%s5] sm:$0xff]
  %v472 = vld [vmem:[%s5 + $0x8] sm:$0x1]
  %v473 = vlaneseq
  %v474 = vshrl.u32 %v473, 7
  %v475 = vsub.s32 3, %v474
  %v476 = vrot.slane %v154, %v475
  %v478 = vsel %vm62, %v463, 0
  %v481 = vsel %vm62, %v468, 0
  %v484 = vsel %vm69, %v472, 0
  %486 = vmatprep.subr.mxu0 0.0
  %487 = vmatpush1.msra.mxu0 %v471
  %488 = vmatprep.subr.mxu0 0.0
  %489 = vmatpush1.msra.mxu0 %v484
  %490 = vmatprep.subr.mxu0 0.0
  %491 = vmatpush1.msra.mxu0 0.0
  %492 = vmatprep.subr.mxu0 0.0
  %493 = vmatpush1.msra.mxu0 0.0
  %494 = vmatprep.subr.mxu0 0.0
  %495 = vmatpush1.msra.mxu0 0.0
  %496 = vmatprep.subr.mxu0 0.0
  %497 = vmatpush1.msra.mxu0 0.0
  %498 = vmatprep.subr.mxu0 0.0
  %499 = vmatpush1.msra.mxu0 0.0
  %500 = vmatprep.subr.mxu0 0.0
  %501 = vmatpush1.msra.mxu0 0.0
  %502 = vmatprep.subr.mxu0 0.0
  %503 = vmatpush1.msra.mxu0 0.0
  %504 = vmatprep.subr.mxu0 0.0
  %505 = vmatpush1.msra.mxu0 0.0
  %506 = vmatprep.subr.mxu0 0.0
  %507 = vmatpush1.msra.mxu0 0.0
  %508 = vmatprep.subr.mxu0 0.0
  %509 = vmatpush1.msra.mxu0 0.0
  %510 = vmatprep.subr.mxu0 0.0
  %511 = vmatpush1.msra.mxu0 0.0
  %512 = vmatprep.subr.mxu0 0.0
  %513 = vmatpush1.msra.mxu0 0.0
  %514 = vmatprep.subr.mxu0 0.0
  %515 = vmatpush1.msra.mxu0 0.0
  %516 = vmatprep.subr.mxu0 0.0
  %517 = vmatpush1.msra.mxu0 0.0
  %518 = vmatprep.subr.mxu0 0.0
  %519 = vmatpush1.msra.mxu0 0.0
  %520 = vmatprep.subr.mxu0 0.0
  %521 = vmatpush1.msra.mxu0 0.0
  %522 = vmatprep.subr.mxu0 0.0
  %523 = vmatpush1.msra.mxu0 0.0
  %524 = vmatprep.subr.mxu0 0.0
  %525 = vmatpush1.msra.mxu0 0.0
  %526 = vmatprep.subr.mxu0 0.0
  %527 = vmatpush1.msra.mxu0 0.0
  %528 = vmatprep.subr.mxu0 0.0
  %529 = vmatpush1.msra.mxu0 0.0
  %530 = vmatprep.subr.mxu0 0.0
  %531 = vmatpush1.msra.mxu0 0.0
  %532 = vmatprep.subr.mxu0 0.0
  %533 = vmatpush1.msra.mxu0 0.0
  %534 = vmatprep.subr.mxu0 0.0
  %535 = vmatpush1.msra.mxu0 0.0
  %536 = vmatprep.subr.mxu0 0.0
  %537 = vmatpush1.msra.mxu0 0.0
  %538 = vmatprep.subr.mxu0 0.0
  %539 = vmatpush1.msra.mxu0 0.0
  %540 = vmatprep.subr.mxu0 0.0
  %541 = vmatpush1.msra.mxu0 0.0
  %542 = vmatprep.subr.mxu0 0.0
  %543 = vmatpush1.msra.mxu0 0.0
  %544 = vmatprep.subr.mxu0 0.0
  %545 = vmatpush1.msra.mxu0 0.0
  %546 = vmatprep.subr.mxu0 0.0
  %547 = vmatpush1.msra.mxu0 0.0
  %548 = vmatprep.subr.mxu0 0.0
  %549 = vmatpush1.msra.mxu0 0.0
  %550 = vmatprep.mubr.f32.mxu0 0.0
  %551 = vmatmul.mubr.f32.gmra.mrb[0].mxu0 %v478
  %v552 = vpop.f32.mrb[0].mxu0
  %v553 = vadd.f32 %v476, %v552
  %v554 = vpop.f32.mrb[0].mxu0
  %555 = vmatprep.mubr.f32.mxu0 0.0
  %556 = vmatmul.mubr.f32.gmra.mrb[0].mxu0 %v481
  %v557 = vpop.f32.mrb[0].mxu0
  %v558 = vadd.f32 %v476, %v557
  %v559 = vpop.f32.mrb[0].mxu0
  %560 = vdwg.mxu0
  %v561 = vadd.f32 %v152, %v553
  %v562 = vadd.f32 %v153, %v558
  %v563 = vsel %vm62, %v561, 0.0
  %564 = vadd.xlane.f32.xlu0 %v563
  %v565 = vpop.xlane.xlu0 %564
  %v566 = vsel %vm62, %v562, 0.0
  %567 = vadd.xlane.f32.xlu0 %v566
  %v568 = vpop.xlane.xlu0 %567
  %v569 = vrcp.pop 9.0
  %v570 = vmul.f32 %v565, %v569
  %v571 = vmul.f32 %v568, %v569
  %v572 = vsub.f32 %v561, %v570
  %v573 = vsub.f32 %v562, %v571
  %v574 = vmul.f32 %v572, %v572
  %v575 = vmul.f32 %v573, %v573
  %v576 = vsel %vm62, %v574, 0.0
  %577 = vadd.xlane.f32.xlu0 %v576
  %v578 = vpop.xlane.xlu0 %577
  %v579 = vsel %vm62, %v575, 0.0
  %580 = vadd.xlane.f32.xlu0 %v579
  %v581 = vpop.xlane.xlu0 %580
  %v582 = vmul.f32 %v578, %v569
  %v583 = vmul.f32 %v581, %v569
  %v584 = vadd.f32 %v582, 1e-05
  %v585 = vadd.f32 %v583, 1e-05
  %v586 = vrsqrt.pop %v584
  %v587 = vrsqrt.pop %v585
  %v588 = vmul.f32 %v572, %v586
  %v589 = vmul.f32 %v573, %v587
  %v590 = vlaneseq
  %v591 = vshrl.u32 %v590, 7
  %v592 = vsub.s32 4, %v591
  %v593 = vrot.slane %v154, %v592
  %v594 = vmul.f32 %v588, %v593
  %v595 = vmul.f32 %v589, %v593
  %v596 = vlaneseq
  %v597 = vshrl.u32 %v596, 7
  %v598 = vsub.s32 5, %v597
  %v599 = vrot.slane %v154, %v598
  %v600 = vadd.f32 %v594, %v599
  %v601 = vadd.f32 %v595, %v599
  %v602 = vpack.c.bf16 %v601, %v600
  loop: start=0, step=1, limit=4
  $region62: #{transformer_light_forward.1} parent=0 // loop_pre_header
    _
  $region63: #{transformer_light_forward.1} parent=0 // loop_header
    %s604 = sphi 0, %s608
    %p605 = scmp.ge.s32.totalorder %s604, 4
    %v609 = vphi 0.0, %v915
    %v610 = vphi 0.0, %v916
  $region64: #{transformer_light_forward.1} parent=0 // loop_header_branch
    %607 = sbr.rel (%p605) target = $region68
  $region65: #{transformer_light_forward.1} parent=0 // loop_body
    %s611 = smul.u32 %s604, 8
    %s612 = smul.addr %s611, 4
    %s613 = scalar_lea.vmem %s7, %s612
    %v614 = vld [vmem:[%s613] sm:$0xff]
    %v615 = vld [vmem:[%s613 + $0x8] sm:$0xff]
    %v616 = vld [vmem:[%s613 + $0x10] sm:$0x11]
    %v617 = vld [vmem:[%s613 + $0x18] sm:$0x11]
    %s618 = smul.u32 %s604, 4
    %s619 = scalar_lea.vmem %s8, %s618
    %v620 = vld [vmem:[%s619] sm:$0xf]
    %s621 = smul.addr %s611, 4
    %s622 = scalar_lea.vmem %s9, %s621
    %v623 = vld [vmem:[%s622] sm:$0xff]
    %v624 = vld [vmem:[%s622 + $0x8] sm:$0xff]
    %v625 = vld [vmem:[%s622 + $0x10] sm:$0x11]
    %v626 = vld [vmem:[%s622 + $0x18] sm:$0x11]
    %v628 = vlaneseq
    %v629 = vshrl.u32 %v628, 7
    %v630 = vsub.s32 0, %v629
    %v631 = vrot.slane %v620, %v630
    %v632 = vlaneseq
    %v633 = vshrl.u32 %v632, 7
    %v634 = vsub.s32 1, %v633
    %v635 = vrot.slane %v620, %v634
    %v636 = vlaneseq
    %v637 = vshrl.u32 %v636, 7
    %v638 = vsub.s32 2, %v637
    %v639 = vrot.slane %v620, %v638
    %v640 = vlaneseq
    %v641 = vshrl.u32 %v640, 7
    %v642 = vsub.s32 3, %v641
    %v643 = vrot.slane %v620, %v642
    %v652 = vunpack.c.l.b16 %v614
    %v653 = vunpack.c.h.b16 %v614
    %v654 = vunpack.c.l.b16 %v615
    %v655 = vunpack.c.h.b16 %v615
    %v656 = vunpack.c.l.b16 %v616
    %v657 = vunpack.c.h.b16 %v616
    %v658 = vunpack.c.l.b16 %v617
    %v659 = vunpack.c.h.b16 %v617
    %v660 = vpack.c.b16 %v656, %v652
    %v661 = vpack.c.b16 %v657, %v653
    %v662 = vpack.c.b16 %v658, %v654
    %v663 = vpack.c.b16 %v659, %v655
    %v665 = vsel %vm62, %v602, 0
    %vm667 = vcmask 1043456
    %vm668 = vcmask 1044480
    %v669 = vsel %vm667, 4294967295, 65535
    %v670 = vsel %vm668, %v669, 0
    %v672 = vand.u32 %v660, %v670
    %v675 = vand.u32 %v661, %v670
    %v678 = vand.u32 %v662, %v670
    %v681 = vand.u32 %v663, %v670
    %683 = vmatprep.subr.bf16.mxu0 %v675
    %684 = vmatpush1.bf16.msra.mxu0 %v672
    %685 = vmatprep.subr.bf16.mxu0 0
    %686 = vmatpush1.bf16.msra.mxu0 0
    %687 = vmatprep.subr.bf16.mxu0 0
    %688 = vmatpush1.bf16.msra.mxu0 0
    %689 = vmatprep.subr.bf16.mxu0 0
    %690 = vmatpush1.bf16.msra.mxu0 0
    %691 = vmatprep.subr.bf16.mxu0 0
    %692 = vmatpush1.bf16.msra.mxu0 0
    %693 = vmatprep.subr.bf16.mxu0 0
    %694 = vmatpush1.bf16.msra.mxu0 0
    %695 = vmatprep.subr.bf16.mxu0 0
    %696 = vmatpush1.bf16.msra.mxu0 0
    %697 = vmatprep.subr.bf16.mxu0 0
    %698 = vmatpush1.bf16.msra.mxu0 0
    %699 = vmatprep.subr.bf16.mxu0 0
    %700 = vmatpush1.bf16.msra.mxu0 0
    %701 = vmatprep.subr.bf16.mxu0 0
    %702 = vmatpush1.bf16.msra.mxu0 0
    %703 = vmatprep.subr.bf16.mxu0 0
    %704 = vmatpush1.bf16.msra.mxu0 0
    %705 = vmatprep.subr.bf16.mxu0 0
    %706 = vmatpush1.bf16.msra.mxu0 0
    %707 = vmatprep.subr.bf16.mxu0 0
    %708 = vmatpush1.bf16.msra.mxu0 0
    %709 = vmatprep.subr.bf16.mxu0 0
    %710 = vmatpush1.bf16.msra.mxu0 0
    %711 = vmatprep.subr.bf16.mxu0 0
    %712 = vmatpush1.bf16.msra.mxu0 0
    %713 = vmatprep.subr.bf16.mxu0 0
    %714 = vmatpush1.bf16.msra.mxu0 0
    %715 = vmatprep.mubr.bf16.mxu0 0
    %716 = vmatmul.mubr.bf16.gmra.mrb[0].mxu0 %v665
    %v717 = vpop.f32.mrb[0].mxu0
    %v718 = vadd.f32 %v631, %v717
    %v719 = vpop.f32.mrb[0].mxu0
    %v720 = vadd.f32 %v635, %v719
    %v721 = vpop.f32.mrb[0].mxu0
    %v722 = vadd.f32 %v631, %v721
    %v723 = vpop.f32.mrb[0].mxu0
    %v724 = vadd.f32 %v635, %v723
    %725 = vdwg.mxu0
    %726 = vmatprep.subr.bf16.mxu0 %v681
    %727 = vmatpush1.bf16.msra.mxu0 %v678
    %728 = vmatprep.subr.bf16.mxu0 0
    %729 = vmatpush1.bf16.msra.mxu0 0
    %730 = vmatprep.subr.bf16.mxu0 0
    %731 = vmatpush1.bf16.msra.mxu0 0
    %732 = vmatprep.subr.bf16.mxu0 0
    %733 = vmatpush1.bf16.msra.mxu0 0
    %734 = vmatprep.subr.bf16.mxu0 0
    %735 = vmatpush1.bf16.msra.mxu0 0
    %736 = vmatprep.subr.bf16.mxu0 0
    %737 = vmatpush1.bf16.msra.mxu0 0
    %738 = vmatprep.subr.bf16.mxu0 0
    %739 = vmatpush1.bf16.msra.mxu0 0
    %740 = vmatprep.subr.bf16.mxu0 0
    %741 = vmatpush1.bf16.msra.mxu0 0
    %742 = vmatprep.subr.bf16.mxu0 0
    %743 = vmatpush1.bf16.msra.mxu0 0
    %744 = vmatprep.subr.bf16.mxu0 0
    %745 = vmatpush1.bf16.msra.mxu0 0
    %746 = vmatprep.subr.bf16.mxu0 0
    %747 = vmatpush1.bf16.msra.mxu0 0
    %748 = vmatprep.subr.bf16.mxu0 0
    %749 = vmatpush1.bf16.msra.mxu0 0
    %750 = vmatprep.subr.bf16.mxu0 0
    %751 = vmatpush1.bf16.msra.mxu0 0
    %752 = vmatprep.subr.bf16.mxu0 0
    %753 = vmatpush1.bf16.msra.mxu0 0
    %754 = vmatprep.subr.bf16.mxu0 0
    %755 = vmatpush1.bf16.msra.mxu0 0
    %756 = vmatprep.subr.bf16.mxu0 0
    %757 = vmatpush1.bf16.msra.mxu0 0
    %758 = vmatprep.mubr.bf16.mxu0 0
    %759 = vmatmul.mubr.bf16.gmra.mrb[0].mxu0 %v665
    %v760 = vpop.f32.mrb[0].mxu0
    %v761 = vadd.f32 %v639, %v760
    %v762 = vpop.f32.mrb[0].mxu0
    %v763 = vadd.f32 %v643, %v762
    %v764 = vpop.f32.mrb[0].mxu0
    %v765 = vadd.f32 %v639, %v764
    %v766 = vpop.f32.mrb[0].mxu0
    %v767 = vadd.f32 %v643, %v766
    %768 = vdwg.mxu0
    %v769 = vmul.f32 %v718, 0.5
    %v770 = vmul.f32 %v720, 0.5
    %v771 = vmul.f32 %v761, 0.5
    %v772 = vmul.f32 %v763, 0.5
    %v773 = vmul.f32 %v722, 0.5
    %v774 = vmul.f32 %v724, 0.5
    %v775 = vmul.f32 %v765, 0.5
    %v776 = vmul.f32 %v767, 0.5
    %v777 = vmul.f32 %v718, 0.70710677
    %v778 = vmul.f32 %v720, 0.70710677
    %v779 = vmul.f32 %v761, 0.70710677
    %v780 = vmul.f32 %v763, 0.70710677
    %v781 = vmul.f32 %v722, 0.70710677
    %v782 = vmul.f32 %v724, 0.70710677
    %v783 = vmul.f32 %v765, 0.70710677
    %v784 = vmul.f32 %v767, 0.70710677
    %v785 = verf.f32.pop %v777
    %v786 = verf.f32.pop %v778
    %v787 = verf.f32.pop %v779
    %v788 = verf.f32.pop %v780
    %v789 = verf.f32.pop %v781
    %v790 = verf.f32.pop %v782
    %v791 = verf.f32.pop %v783
    %v792 = verf.f32.pop %v784
    %v793 = vadd.f32 %v785, 1.0
    %v794 = vadd.f32 %v786, 1.0
    %v795 = vadd.f32 %v787, 1.0
    %v796 = vadd.f32 %v788, 1.0
    %v797 = vadd.f32 %v789, 1.0
    %v798 = vadd.f32 %v790, 1.0
    %v799 = vadd.f32 %v791, 1.0
    %v800 = vadd.f32 %v792, 1.0
    %v801 = vmul.f32 %v769, %v793
    %v802 = vmul.f32 %v770, %v794
    %v803 = vmul.f32 %v771, %v795
    %v804 = vmul.f32 %v772, %v796
    %v805 = vmul.f32 %v773, %v797
    %v806 = vmul.f32 %v774, %v798
    %v807 = vmul.f32 %v775, %v799
    %v808 = vmul.f32 %v776, %v800
    %v809 = vpack.c.bf16 %v805, %v801
    %v810 = vpack.c.bf16 %v806, %v802
    %v811 = vpack.c.bf16 %v807, %v803
    %v812 = vpack.c.bf16 %v808, %v804
    %v817 = vunpack.c.l.b16 %v623
    %v818 = vunpack.c.h.b16 %v623
    %v819 = vunpack.c.l.b16 %v624
    %v820 = vunpack.c.h.b16 %v624
    %v821 = vunpack.c.l.b16 %v625
    %v822 = vunpack.c.h.b16 %v625
    %v823 = vunpack.c.l.b16 %v626
    %v824 = vunpack.c.h.b16 %v626
    %v825 = vpack.c.b16 %v821, %v817
    %v826 = vpack.c.b16 %v822, %v818
    %v827 = vpack.c.b16 %v823, %v819
    %v828 = vpack.c.b16 %v824, %v820
    %833 = vmatprep.subr.bf16.mxu0 %v826
    %834 = vmatpush1.bf16.xpose.msra.mxu0 %v825
    %835 = vmatprep.subr.bf16.mxu0 0
    %836 = vmatpush1.bf16.xpose.msra.mxu0 0
    %837 = vmatprep.subr.bf16.mxu0 0
    %838 = vmatpush1.bf16.xpose.msra.mxu0 0
    %839 = vmatprep.subr.bf16.mxu0 0
    %840 = vmatpush1.bf16.xpose.msra.mxu0 0
    %841 = vmatprep.subr.bf16.mxu0 0
    %842 = vmatpush1.bf16.xpose.msra.mxu0 0
    %843 = vmatprep.subr.bf16.mxu0 0
    %844 = vmatpush1.bf16.xpose.msra.mxu0 0
    %845 = vmatprep.subr.bf16.mxu0 0
    %846 = vmatpush1.bf16.xpose.msra.mxu0 0
    %847 = vmatprep.subr.bf16.mxu0 0
    %848 = vmatpush1.bf16.xpose.msra.mxu0 0
    %849 = vmatprep.subr.bf16.mxu0 0
    %850 = vmatpush1.bf16.xpose.msra.mxu0 0
    %851 = vmatprep.subr.bf16.mxu0 0
    %852 = vmatpush1.bf16.xpose.msra.mxu0 0
    %853 = vmatprep.subr.bf16.mxu0 0
    %854 = vmatpush1.bf16.xpose.msra.mxu0 0
    %855 = vmatprep.subr.bf16.mxu0 0
    %856 = vmatpush1.bf16.xpose.msra.mxu0 0
    %857 = vmatprep.subr.bf16.mxu0 0
    %858 = vmatpush1.bf16.xpose.msra.mxu0 0
    %859 = vmatprep.subr.bf16.mxu0 0
    %860 = vmatpush1.bf16.xpose.msra.mxu0 0
    %861 = vmatprep.subr.bf16.mxu0 0
    %862 = vmatpush1.bf16.xpose.msra.mxu0 0
    %863 = vmatprep.subr.bf16.mxu0 0
    %864 = vmatpush1.bf16.xpose.msra.mxu0 0
    %865 = vmatprep.mubr.bf16.mxu0 %v810
    %866 = vmatmul.mubr.bf16.gmra.mrb[0].mxu0 %v809
    %v867 = vpop.f32.mrb[0].mxu0
    %v868 = vadd.f32 0.0, %v867
    %v869 = vpop.f32.mrb[0].mxu0
    %v870 = vpop.f32.mrb[0].mxu0
    %v871 = vadd.f32 0.0, %v870
    %v872 = vpop.f32.mrb[0].mxu0
    %873 = vdwg.mxu0
    %874 = vmatprep.subr.bf16.mxu0 %v828
    %875 = vmatpush1.bf16.xpose.msra.mxu0 %v827
    %876 = vmatprep.subr.bf16.mxu0 0
    %877 = vmatpush1.bf16.xpose.msra.mxu0 0
    %878 = vmatprep.subr.bf16.mxu0 0
    %879 = vmatpush1.bf16.xpose.msra.mxu0 0
    %880 = vmatprep.subr.bf16.mxu0 0
    %881 = vmatpush1.bf16.xpose.msra.mxu0 0
    %882 = vmatprep.subr.bf16.mxu0 0
    %883 = vmatpush1.bf16.xpose.msra.mxu0 0
    %884 = vmatprep.subr.bf16.mxu0 0
    %885 = vmatpush1.bf16.xpose.msra.mxu0 0
    %886 = vmatprep.subr.bf16.mxu0 0
    %887 = vmatpush1.bf16.xpose.msra.mxu0 0
    %888 = vmatprep.subr.bf16.mxu0 0
    %889 = vmatpush1.bf16.xpose.msra.mxu0 0
    %890 = vmatprep.subr.bf16.mxu0 0
    %891 = vmatpush1.bf16.xpose.msra.mxu0 0
    %892 = vmatprep.subr.bf16.mxu0 0
    %893 = vmatpush1.bf16.xpose.msra.mxu0 0
    %894 = vmatprep.subr.bf16.mxu0 0
    %895 = vmatpush1.bf16.xpose.msra.mxu0 0
    %896 = vmatprep.subr.bf16.mxu0 0
    %897 = vmatpush1.bf16.xpose.msra.mxu0 0
    %898 = vmatprep.subr.bf16.mxu0 0
    %899 = vmatpush1.bf16.xpose.msra.mxu0 0
    %900 = vmatprep.subr.bf16.mxu0 0
    %901 = vmatpush1.bf16.xpose.msra.mxu0 0
    %902 = vmatprep.subr.bf16.mxu0 0
    %903 = vmatpush1.bf16.xpose.msra.mxu0 0
    %904 = vmatprep.subr.bf16.mxu0 0
    %905 = vmatpush1.bf16.xpose.msra.mxu0 0
    %906 = vmatprep.mubr.bf16.mxu0 %v812
    %907 = vmatmul.mubr.bf16.gmra.mrb[0].mxu0 %v811
    %v908 = vpop.f32.mrb[0].mxu0
    %v909 = vadd.f32 %v868, %v908
    %v910 = vpop.f32.mrb[0].mxu0
    %v911 = vpop.f32.mrb[0].mxu0
    %v912 = vadd.f32 %v871, %v911
    %v913 = vpop.f32.mrb[0].mxu0
    %914 = vdwg.mxu0
    %v915 = vadd.f32 %v609, %v909
    %v916 = vadd.f32 %v610, %v912
  $region66: #{transformer_light_forward.1} parent=0 // loop_footer
    %s608 = sadd.s32 1, %s604
  $region67: #{transformer_light_forward.1} parent=0 // loop_footer_branch
    %603 = sbr.rel target = $region63
  $region68: #{transformer_light_forward.1} parent=0 // loop_exit
    _
  %v917 = vlaneseq
  %v918 = vshrl.u32 %v917, 7
  %v919 = vsub.s32 6, %v918
  %v920 = vrot.slane %v154, %v919
  %v921 = vadd.f32 %v609, %v920
  %v922 = vadd.f32 %v610, %v920
  %v923 = vadd.f32 %v600, %v921
  %v924 = vadd.f32 %v601, %v922
  %v925 = vsel %vm62, %v923, 0.0
  %926 = vadd.xlane.f32.xlu0 %v925
  %v927 = vpop.xlane.xlu0 %926
  %v928 = vsel %vm62, %v924, 0.0
  %929 = vadd.xlane.f32.xlu0 %v928
  %v930 = vpop.xlane.xlu0 %929
  %v931 = vmul.f32 %v927, %v569
  %v932 = vmul.f32 %v930, %v569
  %v933 = vsub.f32 %v923, %v931
  %v934 = vsub.f32 %v924, %v932
  %v935 = vmul.f32 %v933, %v933
  %v936 = vmul.f32 %v934, %v934
  %v937 = vsel %vm62, %v935, 0.0
  %938 = vadd.xlane.f32.xlu0 %v937
  %v939 = vpop.xlane.xlu0 %938
  %v940 = vsel %vm62, %v936, 0.0
  %941 = vadd.xlane.f32.xlu0 %v940
  %v942 = vpop.xlane.xlu0 %941
  %v943 = vmul.f32 %v939, %v569
  %v944 = vmul.f32 %v942, %v569
  %v945 = vadd.f32 %v943, 1e-05
  %v946 = vadd.f32 %v944, 1e-05
  %v947 = vrsqrt.pop %v945
  %v948 = vrsqrt.pop %v946
  %v949 = vmul.f32 %v933, %v947
  %v950 = vmul.f32 %v934, %v948
  %v951 = vlaneseq
  %v952 = vshrl.u32 %v951, 7
  %v953 = vsub.s32 7, %v952
  %v954 = vrot.slane %v154, %v953
  %v955 = vmul.f32 %v949, %v954
  %v956 = vmul.f32 %v950, %v954
  %v957 = vlaneseq
  %v958 = vshrl.u32 %v957, 7
  %v959 = vsub.s32 0, %v958
  %v960 = vrot.slane %v155, %v959
  %v961 = vadd.f32 %v955, %v960
  %v962 = vadd.f32 %v956, %v960
  %s963 = scalar_lea.vmem %s6, 16
  %v964 = vld [vmem:[%s963] sm:$0xff]
  %v965 = vld [vmem:[%s963 + $0x8] sm:$0x1]
  %s966 = scalar_lea.vmem %s4, 16
  %v967 = vld [vmem:[%s966] sm:$0xff]
  %v968 = vld [vmem:[%s966 + $0x8] sm:$0x1]
  %v970 = vsel %vm62, %v961, 0
  %v973 = vsel %vm62, %v962, 0
  %v976 = vsel %vm69, %v968, 0
  %978 = vmatprep.subr.mxu0 0.0
  %979 = vmatpush1.msra.mxu0 %v967
  %980 = vmatprep.subr.mxu0 0.0
  %981 = vmatpush1.msra.mxu0 %v976
  %982 = vmatprep.subr.mxu0 0.0
  %983 = vmatpush1.msra.mxu0 0.0
  %984 = vmatprep.subr.mxu0 0.0
  %985 = vmatpush1.msra.mxu0 0.0
  %986 = vmatprep.subr.mxu0 0.0
  %987 = vmatpush1.msra.mxu0 0.0
  %988 = vmatprep.subr.mxu0 0.0
  %989 = vmatpush1.msra.mxu0 0.0
  %990 = vmatprep.subr.mxu0 0.0
  %991 = vmatpush1.msra.mxu0 0.0
  %992 = vmatprep.subr.mxu0 0.0
  %993 = vmatpush1.msra.mxu0 0.0
  %994 = vmatprep.subr.mxu0 0.0
  %995 = vmatpush1.msra.mxu0 0.0
  %996 = vmatprep.subr.mxu0 0.0
  %997 = vmatpush1.msra.mxu0 0.0
  %998 = vmatprep.subr.mxu0 0.0
  %999 = vmatpush1.msra.mxu0 0.0
  %1000 = vmatprep.subr.mxu0 0.0
  %1001 = vmatpush1.msra.mxu0 0.0
  %1002 = vmatprep.subr.mxu0 0.0
  %1003 = vmatpush1.msra.mxu0 0.0
  %1004 = vmatprep.subr.mxu0 0.0
  %1005 = vmatpush1.msra.mxu0 0.0
  %1006 = vmatprep.subr.mxu0 0.0
  %1007 = vmatpush1.msra.mxu0 0.0
  %1008 = vmatprep.subr.mxu0 0.0
  %1009 = vmatpush1.msra.mxu0 0.0
  %1010 = vmatprep.subr.mxu0 0.0
  %1011 = vmatpush1.msra.mxu0 0.0
  %1012 = vmatprep.subr.mxu0 0.0
  %1013 = vmatpush1.msra.mxu0 0.0
  %1014 = vmatprep.subr.mxu0 0.0
  %1015 = vmatpush1.msra.mxu0 0.0
  %1016 = vmatprep.subr.mxu0 0.0
  %1017 = vmatpush1.msra.mxu0 0.0
  %1018 = vmatprep.subr.mxu0 0.0
  %1019 = vmatpush1.msra.mxu0 0.0
  %1020 = vmatprep.subr.mxu0 0.0
  %1021 = vmatpush1.msra.mxu0 0.0
  %1022 = vmatprep.subr.mxu0 0.0
  %1023 = vmatpush1.msra.mxu0 0.0
  %1024 = vmatprep.subr.mxu0 0.0
  %1025 = vmatpush1.msra.mxu0 0.0
  %1026 = vmatprep.subr.mxu0 0.0
  %1027 = vmatpush1.msra.mxu0 0.0
  %1028 = vmatprep.subr.mxu0 0.0
  %1029 = vmatpush1.msra.mxu0 0.0
  %1030 = vmatprep.subr.mxu0 0.0
  %1031 = vmatpush1.msra.mxu0 0.0
  %1032 = vmatprep.subr.mxu0 0.0
  %1033 = vmatpush1.msra.mxu0 0.0
  %1034 = vmatprep.subr.mxu0 0.0
  %1035 = vmatpush1.msra.mxu0 0.0
  %1036 = vmatprep.subr.mxu0 0.0
  %1037 = vmatpush1.msra.mxu0 0.0
  %1038 = vmatprep.subr.mxu0 0.0
  %1039 = vmatpush1.msra.mxu0 0.0
  %1040 = vmatprep.subr.mxu0 0.0
  %1041 = vmatpush1.msra.mxu0 0.0
  %1042 = vmatprep.mubr.f32.mxu0 0.0
  %1043 = vmatmul.mubr.f32.gmra.mrb[0].mxu0 %v970
  %v1044 = vpop.f32.mrb[0].mxu0
  %v1045 = vadd.f32 0.0, %v1044
  %v1046 = vpop.f32.mrb[0].mxu0
  %1047 = vmatprep.mubr.f32.mxu0 0.0
  %1048 = vmatmul.mubr.f32.gmra.mrb[0].mxu0 %v973
  %v1049 = vpop.f32.mrb[0].mxu0
  %v1050 = vadd.f32 0.0, %v1049
  %v1051 = vpop.f32.mrb[0].mxu0
  %1052 = vdwg.mxu0
  %v1053 = vlaneseq
  %v1054 = vshrl.u32 %v1053, 7
  %v1055 = vsub.s32 0, %v1054
  %v1056 = vrot.slane %v964, %v1055
  %v1057 = vadd.f32 %v1045, %v1056
  %v1058 = vadd.f32 %v1050, %v1056
  %v1059 = vlaneseq
  %v1060 = vshrl.u32 %v1059, 7
  %v1061 = vsub.s32 1, %v1060
  %v1062 = vrot.slane %v964, %v1061
  %1064 = vrot.lane.b32.xlu0 %v1062, 9
  %v1065 = vpop.permute.xlu0 %1064
  %v1067 = vadd.f32 %v1045, %v1065
  %v1068 = vadd.f32 %v1050, %v1065
  %v1069 = vlaneseq
  %v1070 = vshrl.u32 %v1069, 7
  %v1071 = vsub.s32 2, %v1070
  %v1072 = vrot.slane %v964, %v1071
  %1074 = vrot.lane.b32.xlu0 %v1072, 18
  %v1075 = vpop.permute.xlu0 %1074
  %v1077 = vadd.f32 %v1045, %v1075
  %v1078 = vadd.f32 %v1050, %v1075
  %1081 = vrot.lane.b32.xlu0 %v1067, 119
  %v1082 = vpop.permute.xlu0 %1081
  %1083 = vrot.lane.b32.xlu0 %v1068, 119
  %v1084 = vpop.permute.xlu0 %1083
  %v1086 = vsel %vm62, %v1057, 0
  %v1089 = vsel %vm62, %v1058, 0
  %v1091 = vsel %vm62, %v1082, 0
  %v1093 = vsel %vm62, %v1084, 0
  %1095 = vmatprep.subr.mxu0 0.0
  %1096 = vmatpush1.xpose.msra.mxu0 %v1091
  %1097 = vmatprep.subr.mxu0 0.0
  %1098 = vmatpush1.xpose.msra.mxu0 %v1093
  %1099 = vmatprep.subr.mxu0 0.0
  %1100 = vmatpush1.xpose.msra.mxu0 0.0
  %1101 = vmatprep.subr.mxu0 0.0
  %1102 = vmatpush1.xpose.msra.mxu0 0.0
  %1103 = vmatprep.subr.mxu0 0.0
  %1104 = vmatpush1.xpose.msra.mxu0 0.0
  %1105 = vmatprep.subr.mxu0 0.0
  %1106 = vmatpush1.xpose.msra.mxu0 0.0
  %1107 = vmatprep.subr.mxu0 0.0
  %1108 = vmatpush1.xpose.msra.mxu0 0.0
  %1109 = vmatprep.subr.mxu0 0.0
  %1110 = vmatpush1.xpose.msra.mxu0 0.0
  %1111 = vmatprep.subr.mxu0 0.0
  %1112 = vmatpush1.xpose.msra.mxu0 0.0
  %1113 = vmatprep.subr.mxu0 0.0
  %1114 = vmatpush1.xpose.msra.mxu0 0.0
  %1115 = vmatprep.subr.mxu0 0.0
  %1116 = vmatpush1.xpose.msra.mxu0 0.0
  %1117 = vmatprep.subr.mxu0 0.0
  %1118 = vmatpush1.xpose.msra.mxu0 0.0
  %1119 = vmatprep.subr.mxu0 0.0
  %1120 = vmatpush1.xpose.msra.mxu0 0.0
  %1121 = vmatprep.subr.mxu0 0.0
  %1122 = vmatpush1.xpose.msra.mxu0 0.0
  %1123 = vmatprep.subr.mxu0 0.0
  %1124 = vmatpush1.xpose.msra.mxu0 0.0
  %1125 = vmatprep.subr.mxu0 0.0
  %1126 = vmatpush1.xpose.msra.mxu0 0.0
  %1127 = vmatprep.subr.mxu0 0.0
  %1128 = vmatpush1.xpose.msra.mxu0 0.0
  %1129 = vmatprep.subr.mxu0 0.0
  %1130 = vmatpush1.xpose.msra.mxu0 0.0
  %1131 = vmatprep.subr.mxu0 0.0
  %1132 = vmatpush1.xpose.msra.mxu0 0.0
  %1133 = vmatprep.subr.mxu0 0.0
  %1134 = vmatpush1.xpose.msra.mxu0 0.0
  %1135 = vmatprep.subr.mxu0 0.0
  %1136 = vmatpush1.xpose.msra.mxu0 0.0
  %1137 = vmatprep.subr.mxu0 0.0
  %1138 = vmatpush1.xpose.msra.mxu0 0.0
  %1139 = vmatprep.subr.mxu0 0.0
  %1140 = vmatpush1.xpose.msra.mxu0 0.0
  %1141 = vmatprep.subr.mxu0 0.0
  %1142 = vmatpush1.xpose.msra.mxu0 0.0
  %1143 = vmatprep.subr.mxu0 0.0
  %1144 = vmatpush1.xpose.msra.mxu0 0.0
  %1145 = vmatprep.subr.mxu0 0.0
  %1146 = vmatpush1.xpose.msra.mxu0 0.0
  %1147 = vmatprep.subr.mxu0 0.0
  %1148 = vmatpush1.xpose.msra.mxu0 0.0
  %1149 = vmatprep.subr.mxu0 0.0
  %1150 = vmatpush1.xpose.msra.mxu0 0.0
  %1151 = vmatprep.subr.mxu0 0.0
  %1152 = vmatpush1.xpose.msra.mxu0 0.0
  %1153 = vmatprep.subr.mxu0 0.0
  %1154 = vmatpush1.xpose.msra.mxu0 0.0
  %1155 = vmatprep.subr.mxu0 0.0
  %1156 = vmatpush1.xpose.msra.mxu0 0.0
  %1157 = vmatprep.subr.mxu0 0.0
  %1158 = vmatpush1.xpose.msra.mxu0 0.0
  %1159 = vmatprep.mubr.f32.mxu0 0.0
  %1160 = vmatmul.mubr.f32.gmra.mrb[0].mxu0 %v1086
  %v1161 = vpop.f32.mrb[0].mxu0
  %v1162 = vadd.f32 %v54, %v1161
  %v1163 = vpop.f32.mrb[0].mxu0
  %1164 = vmatprep.mubr.f32.mxu0 0.0
  %1165 = vmatmul.mubr.f32.gmra.mrb[0].mxu0 %v1089
  %v1166 = vpop.f32.mrb[0].mxu0
  %v1167 = vadd.f32 %v55, %v1166
  %v1168 = vpop.f32.mrb[0].mxu0
  %1169 = vdwg.mxu0
  %v1170 = vsel %vm359, %v1162, -inf
  %1171 = vmax.xlane.f32.xlu0 %v1170
  %v1172 = vpop.xlane.xlu0 %1171
  %v1173 = vsel %vm359, %v1167, -inf
  %1174 = vmax.xlane.f32.xlu0 %v1173
  %v1175 = vpop.xlane.xlu0 %1174
  %v1176 = vsub.f32 %v1162, %v1172
  %v1177 = vsub.f32 %v1167, %v1175
  %v1178 = vmul.f32 %v1176, 1.442695
  %v1179 = vpow.pop %v1178
  %v1180 = vmul.f32 %v1177, 1.442695
  %v1181 = vpow.pop %v1180
  %v1182 = vsel %vm359, %v1179, 0.0
  %1183 = vadd.xlane.f32.xlu0 %v1182
  %v1184 = vpop.xlane.xlu0 %1183
  %v1185 = vsel %vm359, %v1181, 0.0
  %1186 = vadd.xlane.f32.xlu0 %v1185
  %v1187 = vpop.xlane.xlu0 %1186
  %v1188 = vrcp.pop %v1184
  %v1189 = vmul.f32 %v1179, %v1188
  %v1190 = vrcp.pop %v1187
  %v1191 = vmul.f32 %v1181, %v1190
  %1194 = vrot.lane.b32.xlu0 %v1077, 110
  %v1195 = vpop.permute.xlu0 %1194
  %1196 = vrot.lane.b32.xlu0 %v1078, 110
  %v1197 = vpop.permute.xlu0 %1196
  %v1201 = vsel %vm359, %v1189, 0
  %v1204 = vsel %vm359, %v1191, 0
  %1206 = vmatprep.subr.mxu0 0.0
  %1207 = vmatpush1.msra.mxu0 %v1195
  %1208 = vmatprep.subr.mxu0 0.0
  %1209 = vmatpush1.msra.mxu0 %v1197
  %1210 = vmatprep.subr.mxu0 0.0
  %1211 = vmatpush1.msra.mxu0 0.0
  %1212 = vmatprep.subr.mxu0 0.0
  %1213 = vmatpush1.msra.mxu0 0.0
  %1214 = vmatprep.subr.mxu0 0.0
  %1215 = vmatpush1.msra.mxu0 0.0
  %1216 = vmatprep.subr.mxu0 0.0
  %1217 = vmatpush1.msra.mxu0 0.0
  %1218 = vmatprep.subr.mxu0 0.0
  %1219 = vmatpush1.msra.mxu0 0.0
  %1220 = vmatprep.subr.mxu0 0.0
  %1221 = vmatpush1.msra.mxu0 0.0
  %1222 = vmatprep.subr.mxu0 0.0
  %1223 = vmatpush1.msra.mxu0 0.0
  %1224 = vmatprep.subr.mxu0 0.0
  %1225 = vmatpush1.msra.mxu0 0.0
  %1226 = vmatprep.subr.mxu0 0.0
  %1227 = vmatpush1.msra.mxu0 0.0
  %1228 = vmatprep.subr.mxu0 0.0
  %1229 = vmatpush1.msra.mxu0 0.0
  %1230 = vmatprep.subr.mxu0 0.0
  %1231 = vmatpush1.msra.mxu0 0.0
  %1232 = vmatprep.subr.mxu0 0.0
  %1233 = vmatpush1.msra.mxu0 0.0
  %1234 = vmatprep.subr.mxu0 0.0
  %1235 = vmatpush1.msra.mxu0 0.0
  %1236 = vmatprep.subr.mxu0 0.0
  %1237 = vmatpush1.msra.mxu0 0.0
  %1238 = vmatprep.subr.mxu0 0.0
  %1239 = vmatpush1.msra.mxu0 0.0
  %1240 = vmatprep.subr.mxu0 0.0
  %1241 = vmatpush1.msra.mxu0 0.0
  %1242 = vmatprep.subr.mxu0 0.0
  %1243 = vmatpush1.msra.mxu0 0.0
  %1244 = vmatprep.subr.mxu0 0.0
  %1245 = vmatpush1.msra.mxu0 0.0
  %1246 = vmatprep.subr.mxu0 0.0
  %1247 = vmatpush1.msra.mxu0 0.0
  %1248 = vmatprep.subr.mxu0 0.0
  %1249 = vmatpush1.msra.mxu0 0.0
  %1250 = vmatprep.subr.mxu0 0.0
  %1251 = vmatpush1.msra.mxu0 0.0
  %1252 = vmatprep.subr.mxu0 0.0
  %1253 = vmatpush1.msra.mxu0 0.0
  %1254 = vmatprep.subr.mxu0 0.0
  %1255 = vmatpush1.msra.mxu0 0.0
  %1256 = vmatprep.subr.mxu0 0.0
  %1257 = vmatpush1.msra.mxu0 0.0
  %1258 = vmatprep.subr.mxu0 0.0
  %1259 = vmatpush1.msra.mxu0 0.0
  %1260 = vmatprep.subr.mxu0 0.0
  %1261 = vmatpush1.msra.mxu0 0.0
  %1262 = vmatprep.subr.mxu0 0.0
  %1263 = vmatpush1.msra.mxu0 0.0
  %1264 = vmatprep.subr.mxu0 0.0
  %1265 = vmatpush1.msra.mxu0 0.0
  %1266 = vmatprep.subr.mxu0 0.0
  %1267 = vmatpush1.msra.mxu0 0.0
  %1268 = vmatprep.subr.mxu0 0.0
  %1269 = vmatpush1.msra.mxu0 0.0
  %1270 = vmatprep.mubr.f32.mxu0 0.0
  %1271 = vmatmul.mubr.f32.gmra.mrb[0].mxu0 %v1201
  %v1272 = vpop.f32.mrb[0].mxu0
  %v1273 = vadd.f32 0.0, %v1272
  %v1274 = vpop.f32.mrb[0].mxu0
  %1275 = vmatprep.mubr.f32.mxu0 0.0
  %1276 = vmatmul.mubr.f32.gmra.mrb[0].mxu0 %v1204
  %v1277 = vpop.f32.mrb[0].mxu0
  %v1278 = vadd.f32 0.0, %v1277
  %v1279 = vpop.f32.mrb[0].mxu0
  %1280 = vdwg.mxu0
  %s1281 = scalar_lea.vmem %s5, 16
  %v1282 = vld [vmem:[%s1281] sm:$0xff]
  %v1283 = vld [vmem:[%s1281 + $0x8] sm:$0x1]
  %v1284 = vlaneseq
  %v1285 = vshrl.u32 %v1284, 7
  %v1286 = vsub.s32 3, %v1285
  %v1287 = vrot.slane %v964, %v1286
  %v1289 = vsel %vm62, %v1273, 0
  %v1292 = vsel %vm62, %v1278, 0
  %v1295 = vsel %vm69, %v1283, 0
  %1297 = vmatprep.subr.mxu0 0.0
  %1298 = vmatpush1.msra.mxu0 %v1282
  %1299 = vmatprep.subr.mxu0 0.0
  %1300 = vmatpush1.msra.mxu0 %v1295
  %1301 = vmatprep.subr.mxu0 0.0
  %1302 = vmatpush1.msra.mxu0 0.0
  %1303 = vmatprep.subr.mxu0 0.0
  %1304 = vmatpush1.msra.mxu0 0.0
  %1305 = vmatprep.subr.mxu0 0.0
  %1306 = vmatpush1.msra.mxu0 0.0
  %1307 = vmatprep.subr.mxu0 0.0
  %1308 = vmatpush1.msra.mxu0 0.0
  %1309 = vmatprep.subr.mxu0 0.0
  %1310 = vmatpush1.msra.mxu0 0.0
  %1311 = vmatprep.subr.mxu0 0.0
  %1312 = vmatpush1.msra.mxu0 0.0
  %1313 = vmatprep.subr.mxu0 0.0
  %1314 = vmatpush1.msra.mxu0 0.0
  %1315 = vmatprep.subr.mxu0 0.0
  %1316 = vmatpush1.msra.mxu0 0.0
  %1317 = vmatprep.subr.mxu0 0.0
  %1318 = vmatpush1.msra.mxu0 0.0
  %1319 = vmatprep.subr.mxu0 0.0
  %1320 = vmatpush1.msra.mxu0 0.0
  %1321 = vmatprep.subr.mxu0 0.0
  %1322 = vmatpush1.msra.mxu0 0.0
  %1323 = vmatprep.subr.mxu0 0.0
  %1324 = vmatpush1.msra.mxu0 0.0
  %1325 = vmatprep.subr.mxu0 0.0
  %1326 = vmatpush1.msra.mxu0 0.0
  %1327 = vmatprep.subr.mxu0 0.0
  %1328 = vmatpush1.msra.mxu0 0.0
  %1329 = vmatprep.subr.mxu0 0.0
  %1330 = vmatpush1.msra.mxu0 0.0
  %1331 = vmatprep.subr.mxu0 0.0
  %1332 = vmatpush1.msra.mxu0 0.0
  %1333 = vmatprep.subr.mxu0 0.0
  %1334 = vmatpush1.msra.mxu0 0.0
  %1335 = vmatprep.subr.mxu0 0.0
  %1336 = vmatpush1.msra.mxu0 0.0
  %1337 = vmatprep.subr.mxu0 0.0
  %1338 = vmatpush1.msra.mxu0 0.0
  %1339 = vmatprep.subr.mxu0 0.0
  %1340 = vmatpush1.msra.mxu0 0.0
  %1341 = vmatprep.subr.mxu0 0.0
  %1342 = vmatpush1.msra.mxu0 0.0
  %1343 = vmatprep.subr.mxu0 0.0
  %1344 = vmatpush1.msra.mxu0 0.0
  %1345 = vmatprep.subr.mxu0 0.0
  %1346 = vmatpush1.msra.mxu0 0.0
  %1347 = vmatprep.subr.mxu0 0.0
  %1348 = vmatpush1.msra.mxu0 0.0
  %1349 = vmatprep.subr.mxu0 0.0
  %1350 = vmatpush1.msra.mxu0 0.0
  %1351 = vmatprep.subr.mxu0 0.0
  %1352 = vmatpush1.msra.mxu0 0.0
  %1353 = vmatprep.subr.mxu0 0.0
  %1354 = vmatpush1.msra.mxu0 0.0
  %1355 = vmatprep.subr.mxu0 0.0
  %1356 = vmatpush1.msra.mxu0 0.0
  %1357 = vmatprep.subr.mxu0 0.0
  %1358 = vmatpush1.msra.mxu0 0.0
  %1359 = vmatprep.subr.mxu0 0.0
  %1360 = vmatpush1.msra.mxu0 0.0
  %1361 = vmatprep.mubr.f32.mxu0 0.0
  %1362 = vmatmul.mubr.f32.gmra.mrb[0].mxu0 %v1289
  %v1363 = vpop.f32.mrb[0].mxu0
  %v1364 = vadd.f32 %v1287, %v1363
  %v1365 = vpop.f32.mrb[0].mxu0
  %1366 = vmatprep.mubr.f32.mxu0 0.0
  %1367 = vmatmul.mubr.f32.gmra.mrb[0].mxu0 %v1292
  %v1368 = vpop.f32.mrb[0].mxu0
  %v1369 = vadd.f32 %v1287, %v1368
  %v1370 = vpop.f32.mrb[0].mxu0
  %1371 = vdwg.mxu0
  %v1372 = vadd.f32 %v961, %v1364
  %v1373 = vadd.f32 %v962, %v1369
  %v1374 = vsel %vm62, %v1372, 0.0
  %1375 = vadd.xlane.f32.xlu0 %v1374
  %v1376 = vpop.xlane.xlu0 %1375
  %v1377 = vsel %vm62, %v1373, 0.0
  %1378 = vadd.xlane.f32.xlu0 %v1377
  %v1379 = vpop.xlane.xlu0 %1378
  %v1380 = vmul.f32 %v1376, %v569
  %v1381 = vmul.f32 %v1379, %v569
  %v1382 = vsub.f32 %v1372, %v1380
  %v1383 = vsub.f32 %v1373, %v1381
  %v1384 = vmul.f32 %v1382, %v1382
  %v1385 = vmul.f32 %v1383, %v1383
  %v1386 = vsel %vm62, %v1384, 0.0
  %1387 = vadd.xlane.f32.xlu0 %v1386
  %v1388 = vpop.xlane.xlu0 %1387
  %v1389 = vsel %vm62, %v1385, 0.0
  %1390 = vadd.xlane.f32.xlu0 %v1389
  %v1391 = vpop.xlane.xlu0 %1390
  %v1392 = vmul.f32 %v1388, %v569
  %v1393 = vmul.f32 %v1391, %v569
  %v1394 = vadd.f32 %v1392, 1e-05
  %v1395 = vadd.f32 %v1393, 1e-05
  %v1396 = vrsqrt.pop %v1394
  %v1397 = vrsqrt.pop %v1395
  %v1398 = vmul.f32 %v1382, %v1396
  %v1399 = vmul.f32 %v1383, %v1397
  %v1400 = vlaneseq
  %v1401 = vshrl.u32 %v1400, 7
  %v1402 = vsub.s32 4, %v1401
  %v1403 = vrot.slane %v964, %v1402
  %v1404 = vmul.f32 %v1398, %v1403
  %v1405 = vmul.f32 %v1399, %v1403
  %v1406 = vlaneseq
  %v1407 = vshrl.u32 %v1406, 7
  %v1408 = vsub.s32 5, %v1407
  %v1409 = vrot.slane %v964, %v1408
  %v1410 = vadd.f32 %v1404, %v1409
  %v1411 = vadd.f32 %v1405, %v1409
  %v1412 = vpack.c.bf16 %v1411, %v1410
  loop: start=0, step=1, limit=4
  $region69: #{transformer_light_forward.1} parent=0 // loop_pre_header
    _
  $region70: #{transformer_light_forward.1} parent=0 // loop_header
    %s1414 = sphi 0, %s1418
    %p1415 = scmp.ge.s32.totalorder %s1414, 4
    %v1419 = vphi 0.0, %v1726
    %v1420 = vphi 0.0, %v1727
  $region71: #{transformer_light_forward.1} parent=0 // loop_header_branch
    %1417 = sbr.rel (%p1415) target = $region75
  $region72: #{transformer_light_forward.1} parent=0 // loop_body
    %s1421 = sadd.s32 %s1414, 4
    %s1422 = smul.u32 %s1421, 8
    %s1423 = smul.addr %s1422, 4
    %s1424 = scalar_lea.vmem %s7, %s1423
    %v1425 = vld [vmem:[%s1424] sm:$0xff]
    %v1426 = vld [vmem:[%s1424 + $0x8] sm:$0xff]
    %v1427 = vld [vmem:[%s1424 + $0x10] sm:$0x11]
    %v1428 = vld [vmem:[%s1424 + $0x18] sm:$0x11]
    %s1429 = smul.u32 %s1421, 4
    %s1430 = scalar_lea.vmem %s8, %s1429
    %v1431 = vld [vmem:[%s1430] sm:$0xf]
    %s1432 = smul.addr %s1422, 4
    %s1433 = scalar_lea.vmem %s9, %s1432
    %v1434 = vld [vmem:[%s1433] sm:$0xff]
    %v1435 = vld [vmem:[%s1433 + $0x8] sm:$0xff]
    %v1436 = vld [vmem:[%s1433 + $0x10] sm:$0x11]
    %v1437 = vld [vmem:[%s1433 + $0x18] sm:$0x11]
    %v1439 = vlaneseq
    %v1440 = vshrl.u32 %v1439, 7
    %v1441 = vsub.s32 0, %v1440
    %v1442 = vrot.slane %v1431, %v1441
    %v1443 = vlaneseq
    %v1444 = vshrl.u32 %v1443, 7
    %v1445 = vsub.s32 1, %v1444
    %v1446 = vrot.slane %v1431, %v1445
    %v1447 = vlaneseq
    %v1448 = vshrl.u32 %v1447, 7
    %v1449 = vsub.s32 2, %v1448
    %v1450 = vrot.slane %v1431, %v1449
    %v1451 = vlaneseq
    %v1452 = vshrl.u32 %v1451, 7
    %v1453 = vsub.s32 3, %v1452
    %v1454 = vrot.slane %v1431, %v1453
    %v1463 = vunpack.c.l.b16 %v1425
    %v1464 = vunpack.c.h.b16 %v1425
    %v1465 = vunpack.c.l.b16 %v1426
    %v1466 = vunpack.c.h.b16 %v1426
    %v1467 = vunpack.c.l.b16 %v1427
    %v1468 = vunpack.c.h.b16 %v1427
    %v1469 = vunpack.c.l.b16 %v1428
    %v1470 = vunpack.c.h.b16 %v1428
    %v1471 = vpack.c.b16 %v1467, %v1463
    %v1472 = vpack.c.b16 %v1468, %v1464
    %v1473 = vpack.c.b16 %v1469, %v1465
    %v1474 = vpack.c.b16 %v1470, %v1466
    %v1476 = vsel %vm62, %v1412, 0
    %vm1478 = vcmask 1043456
    %vm1479 = vcmask 1044480
    %v1480 = vsel %vm1478, 4294967295, 65535
    %v1481 = vsel %vm1479, %v1480, 0
    %v1483 = vand.u32 %v1471, %v1481
    %v1486 = vand.u32 %v1472, %v1481
    %v1489 = vand.u32 %v1473, %v1481
    %v1492 = vand.u32 %v1474, %v1481
    %1494 = vmatprep.subr.bf16.mxu0 %v1486
    %1495 = vmatpush1.bf16.msra.mxu0 %v1483
    %1496 = vmatprep.subr.bf16.mxu0 0
    %1497 = vmatpush1.bf16.msra.mxu0 0
    %1498 = vmatprep.subr.bf16.mxu0 0
    %1499 = vmatpush1.bf16.msra.mxu0 0
    %1500 = vmatprep.subr.bf16.mxu0 0
    %1501 = vmatpush1.bf16.msra.mxu0 0
    %1502 = vmatprep.subr.bf16.mxu0 0
    %1503 = vmatpush1.bf16.msra.mxu0 0
    %1504 = vmatprep.subr.bf16.mxu0 0
    %1505 = vmatpush1.bf16.msra.mxu0 0
    %1506 = vmatprep.subr.bf16.mxu0 0
    %1507 = vmatpush1.bf16.msra.mxu0 0
    %1508 = vmatprep.subr.bf16.mxu0 0
    %1509 = vmatpush1.bf16.msra.mxu0 0
    %1510 = vmatprep.subr.bf16.mxu0 0
    %1511 = vmatpush1.bf16.msra.mxu0 0
    %1512 = vmatprep.subr.bf16.mxu0 0
    %1513 = vmatpush1.bf16.msra.mxu0 0
    %1514 = vmatprep.subr.bf16.mxu0 0
    %1515 = vmatpush1.bf16.msra.mxu0 0
    %1516 = vmatprep.subr.bf16.mxu0 0
    %1517 = vmatpush1.bf16.msra.mxu0 0
    %1518 = vmatprep.subr.bf16.mxu0 0
    %1519 = vmatpush1.bf16.msra.mxu0 0
    %1520 = vmatprep.subr.bf16.mxu0 0
    %1521 = vmatpush1.bf16.msra.mxu0 0
    %1522 = vmatprep.subr.bf16.mxu0 0
    %1523 = vmatpush1.bf16.msra.mxu0 0
    %1524 = vmatprep.subr.bf16.mxu0 0
    %1525 = vmatpush1.bf16.msra.mxu0 0
    %1526 = vmatprep.mubr.bf16.mxu0 0
    %1527 = vmatmul.mubr.bf16.gmra.mrb[0].mxu0 %v1476
    %v1528 = vpop.f32.mrb[0].mxu0
    %v1529 = vadd.f32 %v1442, %v1528
    %v1530 = vpop.f32.mrb[0].mxu0
    %v1531 = vadd.f32 %v1446, %v1530
    %v1532 = vpop.f32.mrb[0].mxu0
    %v1533 = vadd.f32 %v1442, %v1532
    %v1534 = vpop.f32.mrb[0].mxu0
    %v1535 = vadd.f32 %v1446, %v1534
    %1536 = vdwg.mxu0
    %1537 = vmatprep.subr.bf16.mxu0 %v1492
    %1538 = vmatpush1.bf16.msra.mxu0 %v1489
    %1539 = vmatprep.subr.bf16.mxu0 0
    %1540 = vmatpush1.bf16.msra.mxu0 0
    %1541 = vmatprep.subr.bf16.mxu0 0
    %1542 = vmatpush1.bf16.msra.mxu0 0
    %1543 = vmatprep.subr.bf16.mxu0 0
    %1544 = vmatpush1.bf16.msra.mxu0 0
    %1545 = vmatprep.subr.bf16.mxu0 0
    %1546 = vmatpush1.bf16.msra.mxu0 0
    %1547 = vmatprep.subr.bf16.mxu0 0
    %1548 = vmatpush1.bf16.msra.mxu0 0
    %1549 = vmatprep.subr.bf16.mxu0 0
    %1550 = vmatpush1.bf16.msra.mxu0 0
    %1551 = vmatprep.subr.bf16.mxu0 0
    %1552 = vmatpush1.bf16.msra.mxu0 0
    %1553 = vmatprep.subr.bf16.mxu0 0
    %1554 = vmatpush1.bf16.msra.mxu0 0
    %1555 = vmatprep.subr.bf16.mxu0 0
    %1556 = vmatpush1.bf16.msra.mxu0 0
    %1557 = vmatprep.subr.bf16.mxu0 0
    %1558 = vmatpush1.bf16.msra.mxu0 0
    %1559 = vmatprep.subr.bf16.mxu0 0
    %1560 = vmatpush1.bf16.msra.mxu0 0
    %1561 = vmatprep.subr.bf16.mxu0 0
    %1562 = vmatpush1.bf16.msra.mxu0 0
    %1563 = vmatprep.subr.bf16.mxu0 0
    %1564 = vmatpush1.bf16.msra.mxu0 0
    %1565 = vmatprep.subr.bf16.mxu0 0
    %1566 = vmatpush1.bf16.msra.mxu0 0
    %1567 = vmatprep.subr.bf16.mxu0 0
    %1568 = vmatpush1.bf16.msra.mxu0 0
    %1569 = vmatprep.mubr.bf16.mxu0 0
    %1570 = vmatmul.mubr.bf16.gmra.mrb[0].mxu0 %v1476
    %v1571 = vpop.f32.mrb[0].mxu0
    %v1572 = vadd.f32 %v1450, %v1571
    %v1573 = vpop.f32.mrb[0].mxu0
    %v1574 = vadd.f32 %v1454, %v1573
    %v1575 = vpop.f32.mrb[0].mxu0
    %v1576 = vadd.f32 %v1450, %v1575
    %v1577 = vpop.f32.mrb[0].mxu0
    %v1578 = vadd.f32 %v1454, %v1577
    %1579 = vdwg.mxu0
    %v1580 = vmul.f32 %v1529, 0.5
    %v1581 = vmul.f32 %v1531, 0.5
    %v1582 = vmul.f32 %v1572, 0.5
    %v1583 = vmul.f32 %v1574, 0.5
    %v1584 = vmul.f32 %v1533, 0.5
    %v1585 = vmul.f32 %v1535, 0.5
    %v1586 = vmul.f32 %v1576, 0.5
    %v1587 = vmul.f32 %v1578, 0.5
    %v1588 = vmul.f32 %v1529, 0.70710677
    %v1589 = vmul.f32 %v1531, 0.70710677
    %v1590 = vmul.f32 %v1572, 0.70710677
    %v1591 = vmul.f32 %v1574, 0.70710677
    %v1592 = vmul.f32 %v1533, 0.70710677
    %v1593 = vmul.f32 %v1535, 0.70710677
    %v1594 = vmul.f32 %v1576, 0.70710677
    %v1595 = vmul.f32 %v1578, 0.70710677
    %v1596 = verf.f32.pop %v1588
    %v1597 = verf.f32.pop %v1589
    %v1598 = verf.f32.pop %v1590
    %v1599 = verf.f32.pop %v1591
    %v1600 = verf.f32.pop %v1592
    %v1601 = verf.f32.pop %v1593
    %v1602 = verf.f32.pop %v1594
    %v1603 = verf.f32.pop %v1595
    %v1604 = vadd.f32 %v1596, 1.0
    %v1605 = vadd.f32 %v1597, 1.0
    %v1606 = vadd.f32 %v1598, 1.0
    %v1607 = vadd.f32 %v1599, 1.0
    %v1608 = vadd.f32 %v1600, 1.0
    %v1609 = vadd.f32 %v1601, 1.0
    %v1610 = vadd.f32 %v1602, 1.0
    %v1611 = vadd.f32 %v1603, 1.0
    %v1612 = vmul.f32 %v1580, %v1604
    %v1613 = vmul.f32 %v1581, %v1605
    %v1614 = vmul.f32 %v1582, %v1606
    %v1615 = vmul.f32 %v1583, %v1607
    %v1616 = vmul.f32 %v1584, %v1608
    %v1617 = vmul.f32 %v1585, %v1609
    %v1618 = vmul.f32 %v1586, %v1610
    %v1619 = vmul.f32 %v1587, %v1611
    %v1620 = vpack.c.bf16 %v1616, %v1612
    %v1621 = vpack.c.bf16 %v1617, %v1613
    %v1622 = vpack.c.bf16 %v1618, %v1614
    %v1623 = vpack.c.bf16 %v1619, %v1615
    %v1628 = vunpack.c.l.b16 %v1434
    %v1629 = vunpack.c.h.b16 %v1434
    %v1630 = vunpack.c.l.b16 %v1435
    %v1631 = vunpack.c.h.b16 %v1435
    %v1632 = vunpack.c.l.b16 %v1436
    %v1633 = vunpack.c.h.b16 %v1436
    %v1634 = vunpack.c.l.b16 %v1437
    %v1635 = vunpack.c.h.b16 %v1437
    %v1636 = vpack.c.b16 %v1632, %v1628
    %v1637 = vpack.c.b16 %v1633, %v1629
    %v1638 = vpack.c.b16 %v1634, %v1630
    %v1639 = vpack.c.b16 %v1635, %v1631
    %1644 = vmatprep.subr.bf16.mxu0 %v1637
    %1645 = vmatpush1.bf16.xpose.msra.mxu0 %v1636
    %1646 = vmatprep.subr.bf16.mxu0 0
    %1647 = vmatpush1.bf16.xpose.msra.mxu0 0
    %1648 = vmatprep.subr.bf16.mxu0 0
    %1649 = vmatpush1.bf16.xpose.msra.mxu0 0
    %1650 = vmatprep.subr.bf16.mxu0 0
    %1651 = vmatpush1.bf16.xpose.msra.mxu0 0
    %1652 = vmatprep.subr.bf16.mxu0 0
    %1653 = vmatpush1.bf16.xpose.msra.mxu0 0
    %1654 = vmatprep.subr.bf16.mxu0 0
    %1655 = vmatpush1.bf16.xpose.msra.mxu0 0
    %1656 = vmatprep.subr.bf16.mxu0 0
    %1657 = vmatpush1.bf16.xpose.msra.mxu0 0
    %1658 = vmatprep.subr.bf16.mxu0 0
    %1659 = vmatpush1.bf16.xpose.msra.mxu0 0
    %1660 = vmatprep.subr.bf16.mxu0 0
    %1661 = vmatpush1.bf16.xpose.msra.mxu0 0
    %1662 = vmatprep.subr.bf16.mxu0 0
    %1663 = vmatpush1.bf16.xpose.msra.mxu0 0
    %1664 = vmatprep.subr.bf16.mxu0 0
    %1665 = vmatpush1.bf16.xpose.msra.mxu0 0
    %1666 = vmatprep.subr.bf16.mxu0 0
    %1667 = vmatpush1.bf16.xpose.msra.mxu0 0
    %1668 = vmatprep.subr.bf16.mxu0 0
    %1669 = vmatpush1.bf16.xpose.msra.mxu0 0
    %1670 = vmatprep.subr.bf16.mxu0 0
    %1671 = vmatpush1.bf16.xpose.msra.mxu0 0
    %1672 = vmatprep.subr.bf16.mxu0 0
    %1673 = vmatpush1.bf16.xpose.msra.mxu0 0
    %1674 = vmatprep.subr.bf16.mxu0 0
    %1675 = vmatpush1.bf16.xpose.msra.mxu0 0
    %1676 = vmatprep.mubr.bf16.mxu0 %v1621
    %1677 = vmatmul.mubr.bf16.gmra.mrb[0].mxu0 %v1620
    %v1678 = vpop.f32.mrb[0].mxu0
    %v1679 = vadd.f32 0.0, %v1678
    %v1680 = vpop.f32.mrb[0].mxu0
    %v1681 = vpop.f32.mrb[0].mxu0
    %v1682 = vadd.f32 0.0, %v1681
    %v1683 = vpop.f32.mrb[0].mxu0
    %1684 = vdwg.mxu0
    %1685 = vmatprep.subr.bf16.mxu0 %v1639
    %1686 = vmatpush1.bf16.xpose.msra.mxu0 %v1638
    %1687 = vmatprep.subr.bf16.mxu0 0
    %1688 = vmatpush1.bf16.xpose.msra.mxu0 0
    %1689 = vmatprep.subr.bf16.mxu0 0
    %1690 = vmatpush1.bf16.xpose.msra.mxu0 0
    %1691 = vmatprep.subr.bf16.mxu0 0
    %1692 = vmatpush1.bf16.xpose.msra.mxu0 0
    %1693 = vmatprep.subr.bf16.mxu0 0
    %1694 = vmatpush1.bf16.xpose.msra.mxu0 0
    %1695 = vmatprep.subr.bf16.mxu0 0
    %1696 = vmatpush1.bf16.xpose.msra.mxu0 0
    %1697 = vmatprep.subr.bf16.mxu0 0
    %1698 = vmatpush1.bf16.xpose.msra.mxu0 0
    %1699 = vmatprep.subr.bf16.mxu0 0
    %1700 = vmatpush1.bf16.xpose.msra.mxu0 0
    %1701 = vmatprep.subr.bf16.mxu0 0
    %1702 = vmatpush1.bf16.xpose.msra.mxu0 0
    %1703 = vmatprep.subr.bf16.mxu0 0
    %1704 = vmatpush1.bf16.xpose.msra.mxu0 0
    %1705 = vmatprep.subr.bf16.mxu0 0
    %1706 = vmatpush1.bf16.xpose.msra.mxu0 0
    %1707 = vmatprep.subr.bf16.mxu0 0
    %1708 = vmatpush1.bf16.xpose.msra.mxu0 0
    %1709 = vmatprep.subr.bf16.mxu0 0
    %1710 = vmatpush1.bf16.xpose.msra.mxu0 0
    %1711 = vmatprep.subr.bf16.mxu0 0
    %1712 = vmatpush1.bf16.xpose.msra.mxu0 0
    %1713 = vmatprep.subr.bf16.mxu0 0
    %1714 = vmatpush1.bf16.xpose.msra.mxu0 0
    %1715 = vmatprep.subr.bf16.mxu0 0
    %1716 = vmatpush1.bf16.xpose.msra.mxu0 0
    %1717 = vmatprep.mubr.bf16.mxu0 %v1623
    %1718 = vmatmul.mubr.bf16.gmra.mrb[0].mxu0 %v1622
    %v1719 = vpop.f32.mrb[0].mxu0
    %v1720 = vadd.f32 %v1679, %v1719
    %v1721 = vpop.f32.mrb[0].mxu0
    %v1722 = vpop.f32.mrb[0].mxu0
    %v1723 = vadd.f32 %v1682, %v1722
    %v1724 = vpop.f32.mrb[0].mxu0
    %1725 = vdwg.mxu0
    %v1726 = vadd.f32 %v1419, %v1720
    %v1727 = vadd.f32 %v1420, %v1723
  $region73: #{transformer_light_forward.1} parent=0 // loop_footer
    %s1418 = sadd.s32 1, %s1414
  $region74: #{transformer_light_forward.1} parent=0 // loop_footer_branch
    %1413 = sbr.rel target = $region70
  $region75: #{transformer_light_forward.1} parent=0 // loop_exit
    _
  %v1728 = vlaneseq
  %v1729 = vshrl.u32 %v1728, 7
  %v1730 = vsub.s32 6, %v1729
  %v1731 = vrot.slane %v964, %v1730
  %v1732 = vadd.f32 %v1419, %v1731
  %v1733 = vadd.f32 %v1420, %v1731
  %v1734 = vadd.f32 %v1410, %v1732
  %v1735 = vadd.f32 %v1411, %v1733
  %v1736 = vsel %vm62, %v1734, 0.0
  %1737 = vadd.xlane.f32.xlu0 %v1736
  %v1738 = vpop.xlane.xlu0 %1737
  %v1739 = vsel %vm62, %v1735, 0.0
  %1740 = vadd.xlane.f32.xlu0 %v1739
  %v1741 = vpop.xlane.xlu0 %1740
  %v1742 = vmul.f32 %v1738, %v569
  %v1743 = vmul.f32 %v1741, %v569
  %v1744 = vsub.f32 %v1734, %v1742
  %v1745 = vsub.f32 %v1735, %v1743
  %v1746 = vmul.f32 %v1744, %v1744
  %v1747 = vmul.f32 %v1745, %v1745
  %v1748 = vsel %vm62, %v1746, 0.0
  %1749 = vadd.xlane.f32.xlu0 %v1748
  %v1750 = vpop.xlane.xlu0 %1749
  %v1751 = vsel %vm62, %v1747, 0.0
  %1752 = vadd.xlane.f32.xlu0 %v1751
  %v1753 = vpop.xlane.xlu0 %1752
  %v1754 = vmul.f32 %v1750, %v569
  %v1755 = vmul.f32 %v1753, %v569
  %v1756 = vadd.f32 %v1754, 1e-05
  %v1757 = vadd.f32 %v1755, 1e-05
  %v1758 = vrsqrt.pop %v1756
  %v1759 = vrsqrt.pop %v1757
  %v1760 = vmul.f32 %v1744, %v1758
  %v1761 = vmul.f32 %v1745, %v1759
  %v1762 = vlaneseq
  %v1763 = vshrl.u32 %v1762, 7
  %v1764 = vsub.s32 7, %v1763
  %v1765 = vrot.slane %v964, %v1764
  %v1766 = vmul.f32 %v1760, %v1765
  %v1767 = vmul.f32 %v1761, %v1765
  %v1768 = vlaneseq
  %v1769 = vshrl.u32 %v1768, 7
  %v1770 = vsub.s32 0, %v1769
  %v1771 = vrot.slane %v965, %v1770
  %v1772 = vadd.f32 %v1766, %v1771
  %v1773 = vadd.f32 %v1767, %v1771
  %s1774 = scalar_lea.vmem %s6, 32
  %v1775 = vld [vmem:[%s1774] sm:$0xff]
  %v1776 = vld [vmem:[%s1774 + $0x8] sm:$0x1]
  %s1777 = scalar_lea.vmem %s4, 32
  %v1778 = vld [vmem:[%s1777] sm:$0xff]
  %v1779 = vld [vmem:[%s1777 + $0x8] sm:$0x1]
  %v1781 = vsel %vm62, %v1772, 0
  %v1784 = vsel %vm62, %v1773, 0
  %v1787 = vsel %vm69, %v1779, 0
  %1789 = vmatprep.subr.mxu0 0.0
  %1790 = vmatpush1.msra.mxu0 %v1778
  %1791 = vmatprep.subr.mxu0 0.0
  %1792 = vmatpush1.msra.mxu0 %v1787
  %1793 = vmatprep.subr.mxu0 0.0
  %1794 = vmatpush1.msra.mxu0 0.0
  %1795 = vmatprep.subr.mxu0 0.0
  %1796 = vmatpush1.msra.mxu0 0.0
  %1797 = vmatprep.subr.mxu0 0.0
  %1798 = vmatpush1.msra.mxu0 0.0
  %1799 = vmatprep.subr.mxu0 0.0
  %1800 = vmatpush1.msra.mxu0 0.0
  %1801 = vmatprep.subr.mxu0 0.0
  %1802 = vmatpush1.msra.mxu0 0.0
  %1803 = vmatprep.subr.mxu0 0.0
  %1804 = vmatpush1.msra.mxu0 0.0
  %1805 = vmatprep.subr.mxu0 0.0
  %1806 = vmatpush1.msra.mxu0 0.0
  %1807 = vmatprep.subr.mxu0 0.0
  %1808 = vmatpush1.msra.mxu0 0.0
  %1809 = vmatprep.subr.mxu0 0.0
  %1810 = vmatpush1.msra.mxu0 0.0
  %1811 = vmatprep.subr.mxu0 0.0
  %1812 = vmatpush1.msra.mxu0 0.0
  %1813 = vmatprep.subr.mxu0 0.0
  %1814 = vmatpush1.msra.mxu0 0.0
  %1815 = vmatprep.subr.mxu0 0.0
  %1816 = vmatpush1.msra.mxu0 0.0
  %1817 = vmatprep.subr.mxu0 0.0
  %1818 = vmatpush1.msra.mxu0 0.0
  %1819 = vmatprep.subr.mxu0 0.0
  %1820 = vmatpush1.msra.mxu0 0.0
  %1821 = vmatprep.subr.mxu0 0.0
  %1822 = vmatpush1.msra.mxu0 0.0
  %1823 = vmatprep.subr.mxu0 0.0
  %1824 = vmatpush1.msra.mxu0 0.0
  %1825 = vmatprep.subr.mxu0 0.0
  %1826 = vmatpush1.msra.mxu0 0.0
  %1827 = vmatprep.subr.mxu0 0.0
  %1828 = vmatpush1.msra.mxu0 0.0
  %1829 = vmatprep.subr.mxu0 0.0
  %1830 = vmatpush1.msra.mxu0 0.0
  %1831 = vmatprep.subr.mxu0 0.0
  %1832 = vmatpush1.msra.mxu0 0.0
  %1833 = vmatprep.subr.mxu0 0.0
  %1834 = vmatpush1.msra.mxu0 0.0
  %1835 = vmatprep.subr.mxu0 0.0
  %1836 = vmatpush1.msra.mxu0 0.0
  %1837 = vmatprep.subr.mxu0 0.0
  %1838 = vmatpush1.msra.mxu0 0.0
  %1839 = vmatprep.subr.mxu0 0.0
  %1840 = vmatpush1.msra.mxu0 0.0
  %1841 = vmatprep.subr.mxu0 0.0
  %1842 = vmatpush1.msra.mxu0 0.0
  %1843 = vmatprep.subr.mxu0 0.0
  %1844 = vmatpush1.msra.mxu0 0.0
  %1845 = vmatprep.subr.mxu0 0.0
  %1846 = vmatpush1.msra.mxu0 0.0
  %1847 = vmatprep.subr.mxu0 0.0
  %1848 = vmatpush1.msra.mxu0 0.0
  %1849 = vmatprep.subr.mxu0 0.0
  %1850 = vmatpush1.msra.mxu0 0.0
  %1851 = vmatprep.subr.mxu0 0.0
  %1852 = vmatpush1.msra.mxu0 0.0
  %1853 = vmatprep.mubr.f32.mxu0 0.0
  %1854 = vmatmul.mubr.f32.gmra.mrb[0].mxu0 %v1781
  %v1855 = vpop.f32.mrb[0].mxu0
  %v1856 = vadd.f32 0.0, %v1855
  %v1857 = vpop.f32.mrb[0].mxu0
  %1858 = vmatprep.mubr.f32.mxu0 0.0
  %1859 = vmatmul.mubr.f32.gmra.mrb[0].mxu0 %v1784
  %v1860 = vpop.f32.mrb[0].mxu0
  %v1861 = vadd.f32 0.0, %v1860
  %v1862 = vpop.f32.mrb[0].mxu0
  %1863 = vdwg.mxu0
  %v1864 = vlaneseq
  %v1865 = vshrl.u32 %v1864, 7
  %v1866 = vsub.s32 0, %v1865
  %v1867 = vrot.slane %v1775, %v1866
  %v1868 = vadd.f32 %v1856, %v1867
  %v1869 = vadd.f32 %v1861, %v1867
  %v1870 = vlaneseq
  %v1871 = vshrl.u32 %v1870, 7
  %v1872 = vsub.s32 1, %v1871
  %v1873 = vrot.slane %v1775, %v1872
  %1875 = vrot.lane.b32.xlu0 %v1873, 9
  %v1876 = vpop.permute.xlu0 %1875
  %v1878 = vadd.f32 %v1856, %v1876
  %v1879 = vadd.f32 %v1861, %v1876
  %v1880 = vlaneseq
  %v1881 = vshrl.u32 %v1880, 7
  %v1882 = vsub.s32 2, %v1881
  %v1883 = vrot.slane %v1775, %v1882
  %1885 = vrot.lane.b32.xlu0 %v1883, 18
  %v1886 = vpop.permute.xlu0 %1885
  %v1888 = vadd.f32 %v1856, %v1886
  %v1889 = vadd.f32 %v1861, %v1886
  %1892 = vrot.lane.b32.xlu0 %v1878, 119
  %v1893 = vpop.permute.xlu0 %1892
  %1894 = vrot.lane.b32.xlu0 %v1879, 119
  %v1895 = vpop.permute.xlu0 %1894
  %v1897 = vsel %vm62, %v1868, 0
  %v1900 = vsel %vm62, %v1869, 0
  %v1902 = vsel %vm62, %v1893, 0
  %v1904 = vsel %vm62, %v1895, 0
  %1906 = vmatprep.subr.mxu0 0.0
  %1907 = vmatpush1.xpose.msra.mxu0 %v1902
  %1908 = vmatprep.subr.mxu0 0.0
  %1909 = vmatpush1.xpose.msra.mxu0 %v1904
  %1910 = vmatprep.subr.mxu0 0.0
  %1911 = vmatpush1.xpose.msra.mxu0 0.0
  %1912 = vmatprep.subr.mxu0 0.0
  %1913 = vmatpush1.xpose.msra.mxu0 0.0
  %1914 = vmatprep.subr.mxu0 0.0
  %1915 = vmatpush1.xpose.msra.mxu0 0.0
  %1916 = vmatprep.subr.mxu0 0.0
  %1917 = vmatpush1.xpose.msra.mxu0 0.0
  %1918 = vmatprep.subr.mxu0 0.0
  %1919 = vmatpush1.xpose.msra.mxu0 0.0
  %1920 = vmatprep.subr.mxu0 0.0
  %1921 = vmatpush1.xpose.msra.mxu0 0.0
  %1922 = vmatprep.subr.mxu0 0.0
  %1923 = vmatpush1.xpose.msra.mxu0 0.0
  %1924 = vmatprep.subr.mxu0 0.0
  %1925 = vmatpush1.xpose.msra.mxu0 0.0
  %1926 = vmatprep.subr.mxu0 0.0
  %1927 = vmatpush1.xpose.msra.mxu0 0.0
  %1928 = vmatprep.subr.mxu0 0.0
  %1929 = vmatpush1.xpose.msra.mxu0 0.0
  %1930 = vmatprep.subr.mxu0 0.0
  %1931 = vmatpush1.xpose.msra.mxu0 0.0
  %1932 = vmatprep.subr.mxu0 0.0
  %1933 = vmatpush1.xpose.msra.mxu0 0.0
  %1934 = vmatprep.subr.mxu0 0.0
  %1935 = vmatpush1.xpose.msra.mxu0 0.0
  %1936 = vmatprep.subr.mxu0 0.0
  %1937 = vmatpush1.xpose.msra.mxu0 0.0
  %1938 = vmatprep.subr.mxu0 0.0
  %1939 = vmatpush1.xpose.msra.mxu0 0.0
  %1940 = vmatprep.subr.mxu0 0.0
  %1941 = vmatpush1.xpose.msra.mxu0 0.0
  %1942 = vmatprep.subr.mxu0 0.0
  %1943 = vmatpush1.xpose.msra.mxu0 0.0
  %1944 = vmatprep.subr.mxu0 0.0
  %1945 = vmatpush1.xpose.msra.mxu0 0.0
  %1946 = vmatprep.subr.mxu0 0.0
  %1947 = vmatpush1.xpose.msra.mxu0 0.0
  %1948 = vmatprep.subr.mxu0 0.0
  %1949 = vmatpush1.xpose.msra.mxu0 0.0
  %1950 = vmatprep.subr.mxu0 0.0
  %1951 = vmatpush1.xpose.msra.mxu0 0.0
  %1952 = vmatprep.subr.mxu0 0.0
  %1953 = vmatpush1.xpose.msra.mxu0 0.0
  %1954 = vmatprep.subr.mxu0 0.0
  %1955 = vmatpush1.xpose.msra.mxu0 0.0
  %1956 = vmatprep.subr.mxu0 0.0
  %1957 = vmatpush1.xpose.msra.mxu0 0.0
  %1958 = vmatprep.subr.mxu0 0.0
  %1959 = vmatpush1.xpose.msra.mxu0 0.0
  %1960 = vmatprep.subr.mxu0 0.0
  %1961 = vmatpush1.xpose.msra.mxu0 0.0
  %1962 = vmatprep.subr.mxu0 0.0
  %1963 = vmatpush1.xpose.msra.mxu0 0.0
  %1964 = vmatprep.subr.mxu0 0.0
  %1965 = vmatpush1.xpose.msra.mxu0 0.0
  %1966 = vmatprep.subr.mxu0 0.0
  %1967 = vmatpush1.xpose.msra.mxu0 0.0
  %1968 = vmatprep.subr.mxu0 0.0
  %1969 = vmatpush1.xpose.msra.mxu0 0.0
  %1970 = vmatprep.mubr.f32.mxu0 0.0
  %1971 = vmatmul.mubr.f32.gmra.mrb[0].mxu0 %v1897
  %v1972 = vpop.f32.mrb[0].mxu0
  %v1973 = vadd.f32 %v54, %v1972
  %v1974 = vpop.f32.mrb[0].mxu0
  %1975 = vmatprep.mubr.f32.mxu0 0.0
  %1976 = vmatmul.mubr.f32.gmra.mrb[0].mxu0 %v1900
  %v1977 = vpop.f32.mrb[0].mxu0
  %v1978 = vadd.f32 %v55, %v1977
  %v1979 = vpop.f32.mrb[0].mxu0
  %1980 = vdwg.mxu0
  %v1981 = vsel %vm359, %v1973, -inf
  %1982 = vmax.xlane.f32.xlu0 %v1981
  %v1983 = vpop.xlane.xlu0 %1982
  %v1984 = vsel %vm359, %v1978, -inf
  %1985 = vmax.xlane.f32.xlu0 %v1984
  %v1986 = vpop.xlane.xlu0 %1985
  %v1987 = vsub.f32 %v1973, %v1983
  %v1988 = vsub.f32 %v1978, %v1986
  %v1989 = vmul.f32 %v1987, 1.442695
  %v1990 = vpow.pop %v1989
  %v1991 = vmul.f32 %v1988, 1.442695
  %v1992 = vpow.pop %v1991
  %v1993 = vsel %vm359, %v1990, 0.0
  %1994 = vadd.xlane.f32.xlu0 %v1993
  %v1995 = vpop.xlane.xlu0 %1994
  %v1996 = vsel %vm359, %v1992, 0.0
  %1997 = vadd.xlane.f32.xlu0 %v1996
  %v1998 = vpop.xlane.xlu0 %1997
  %v1999 = vrcp.pop %v1995
  %v2000 = vmul.f32 %v1990, %v1999
  %v2001 = vrcp.pop %v1998
  %v2002 = vmul.f32 %v1992, %v2001
  %2005 = vrot.lane.b32.xlu0 %v1888, 110
  %v2006 = vpop.permute.xlu0 %2005
  %2007 = vrot.lane.b32.xlu0 %v1889, 110
  %v2008 = vpop.permute.xlu0 %2007
  %v2012 = vsel %vm359, %v2000, 0
  %v2015 = vsel %vm359, %v2002, 0
  %2017 = vmatprep.subr.mxu0 0.0
  %2018 = vmatpush1.msra.mxu0 %v2006
  %2019 = vmatprep.subr.mxu0 0.0
  %2020 = vmatpush1.msra.mxu0 %v2008
  %2021 = vmatprep.subr.mxu0 0.0
  %2022 = vmatpush1.msra.mxu0 0.0
  %2023 = vmatprep.subr.mxu0 0.0
  %2024 = vmatpush1.msra.mxu0 0.0
  %2025 = vmatprep.subr.mxu0 0.0
  %2026 = vmatpush1.msra.mxu0 0.0
  %2027 = vmatprep.subr.mxu0 0.0
  %2028 = vmatpush1.msra.mxu0 0.0
  %2029 = vmatprep.subr.mxu0 0.0
  %2030 = vmatpush1.msra.mxu0 0.0
  %2031 = vmatprep.subr.mxu0 0.0
  %2032 = vmatpush1.msra.mxu0 0.0
  %2033 = vmatprep.subr.mxu0 0.0
  %2034 = vmatpush1.msra.mxu0 0.0
  %2035 = vmatprep.subr.mxu0 0.0
  %2036 = vmatpush1.msra.mxu0 0.0
  %2037 = vmatprep.subr.mxu0 0.0
  %2038 = vmatpush1.msra.mxu0 0.0
  %2039 = vmatprep.subr.mxu0 0.0
  %2040 = vmatpush1.msra.mxu0 0.0
  %2041 = vmatprep.subr.mxu0 0.0
  %2042 = vmatpush1.msra.mxu0 0.0
  %2043 = vmatprep.subr.mxu0 0.0
  %2044 = vmatpush1.msra.mxu0 0.0
  %2045 = vmatprep.subr.mxu0 0.0
  %2046 = vmatpush1.msra.mxu0 0.0
  %2047 = vmatprep.subr.mxu0 0.0
  %2048 = vmatpush1.msra.mxu0 0.0
  %2049 = vmatprep.subr.mxu0 0.0
  %2050 = vmatpush1.msra.mxu0 0.0
  %2051 = vmatprep.subr.mxu0 0.0
  %2052 = vmatpush1.msra.mxu0 0.0
  %2053 = vmatprep.subr.mxu0 0.0
  %2054 = vmatpush1.msra.mxu0 0.0
  %2055 = vmatprep.subr.mxu0 0.0
  %2056 = vmatpush1.msra.mxu0 0.0
  %2057 = vmatprep.subr.mxu0 0.0
  %2058 = vmatpush1.msra.mxu0 0.0
  %2059 = vmatprep.subr.mxu0 0.0
  %2060 = vmatpush1.msra.mxu0 0.0
  %2061 = vmatprep.subr.mxu0 0.0
  %2062 = vmatpush1.msra.mxu0 0.0
  %2063 = vmatprep.subr.mxu0 0.0
  %2064 = vmatpush1.msra.mxu0 0.0
  %2065 = vmatprep.subr.mxu0 0.0
  %2066 = vmatpush1.msra.mxu0 0.0
  %2067 = vmatprep.subr.mxu0 0.0
  %2068 = vmatpush1.msra.mxu0 0.0
  %2069 = vmatprep.subr.mxu0 0.0
  %2070 = vmatpush1.msra.mxu0 0.0
  %2071 = vmatprep.subr.mxu0 0.0
  %2072 = vmatpush1.msra.mxu0 0.0
  %2073 = vmatprep.subr.mxu0 0.0
  %2074 = vmatpush1.msra.mxu0 0.0
  %2075 = vmatprep.subr.mxu0 0.0
  %2076 = vmatpush1.msra.mxu0 0.0
  %2077 = vmatprep.subr.mxu0 0.0
  %2078 = vmatpush1.msra.mxu0 0.0
  %2079 = vmatprep.subr.mxu0 0.0
  %2080 = vmatpush1.msra.mxu0 0.0
  %2081 = vmatprep.mubr.f32.mxu0 0.0
  %2082 = vmatmul.mubr.f32.gmra.mrb[0].mxu0 %v2012
  %v2083 = vpop.f32.mrb[0].mxu0
  %v2084 = vadd.f32 0.0, %v2083
  %v2085 = vpop.f32.mrb[0].mxu0
  %2086 = vmatprep.mubr.f32.mxu0 0.0
  %2087 = vmatmul.mubr.f32.gmra.mrb[0].mxu0 %v2015
  %v2088 = vpop.f32.mrb[0].mxu0
  %v2089 = vadd.f32 0.0, %v2088
  %v2090 = vpop.f32.mrb[0].mxu0
  %2091 = vdwg.mxu0
  %s2092 = scalar_lea.vmem %s5, 32
  %v2093 = vld [vmem:[%s2092] sm:$0xff]
  %v2094 = vld [vmem:[%s2092 + $0x8] sm:$0x1]
  %v2095 = vlaneseq
  %v2096 = vshrl.u32 %v2095, 7
  %v2097 = vsub.s32 3, %v2096
  %v2098 = vrot.slane %v1775, %v2097
  %v2100 = vsel %vm62, %v2084, 0
  %v2103 = vsel %vm62, %v2089, 0
  %v2106 = vsel %vm69, %v2094, 0
  %2108 = vmatprep.subr.mxu0 0.0
  %2109 = vmatpush1.msra.mxu0 %v2093
  %2110 = vmatprep.subr.mxu0 0.0
  %2111 = vmatpush1.msra.mxu0 %v2106
  %2112 = vmatprep.subr.mxu0 0.0
  %2113 = vmatpush1.msra.mxu0 0.0
  %2114 = vmatprep.subr.mxu0 0.0
  %2115 = vmatpush1.msra.mxu0 0.0
  %2116 = vmatprep.subr.mxu0 0.0
  %2117 = vmatpush1.msra.mxu0 0.0
  %2118 = vmatprep.subr.mxu0 0.0
  %2119 = vmatpush1.msra.mxu0 0.0
  %2120 = vmatprep.subr.mxu0 0.0
  %2121 = vmatpush1.msra.mxu0 0.0
  %2122 = vmatprep.subr.mxu0 0.0
  %2123 = vmatpush1.msra.mxu0 0.0
  %2124 = vmatprep.subr.mxu0 0.0
  %2125 = vmatpush1.msra.mxu0 0.0
  %2126 = vmatprep.subr.mxu0 0.0
  %2127 = vmatpush1.msra.mxu0 0.0
  %2128 = vmatprep.subr.mxu0 0.0
  %2129 = vmatpush1.msra.mxu0 0.0
  %2130 = vmatprep.subr.mxu0 0.0
  %2131 = vmatpush1.msra.mxu0 0.0
  %2132 = vmatprep.subr.mxu0 0.0
  %2133 = vmatpush1.msra.mxu0 0.0
  %2134 = vmatprep.subr.mxu0 0.0
  %2135 = vmatpush1.msra.mxu0 0.0
  %2136 = vmatprep.subr.mxu0 0.0
  %2137 = vmatpush1.msra.mxu0 0.0
  %2138 = vmatprep.subr.mxu0 0.0
  %2139 = vmatpush1.msra.mxu0 0.0
  %2140 = vmatprep.subr.mxu0 0.0
  %2141 = vmatpush1.msra.mxu0 0.0
  %2142 = vmatprep.subr.mxu0 0.0
  %2143 = vmatpush1.msra.mxu0 0.0
  %2144 = vmatprep.subr.mxu0 0.0
  %2145 = vmatpush1.msra.mxu0 0.0
  %2146 = vmatprep.subr.mxu0 0.0
  %2147 = vmatpush1.msra.mxu0 0.0
  %2148 = vmatprep.subr.mxu0 0.0
  %2149 = vmatpush1.msra.mxu0 0.0
  %2150 = vmatprep.subr.mxu0 0.0
  %2151 = vmatpush1.msra.mxu0 0.0
  %2152 = vmatprep.subr.mxu0 0.0
  %2153 = vmatpush1.msra.mxu0 0.0
  %2154 = vmatprep.subr.mxu0 0.0
  %2155 = vmatpush1.msra.mxu0 0.0
  %2156 = vmatprep.subr.mxu0 0.0
  %2157 = vmatpush1.msra.mxu0 0.0
  %2158 = vmatprep.subr.mxu0 0.0
  %2159 = vmatpush1.msra.mxu0 0.0
  %2160 = vmatprep.subr.mxu0 0.0
  %2161 = vmatpush1.msra.mxu0 0.0
  %2162 = vmatprep.subr.mxu0 0.0
  %2163 = vmatpush1.msra.mxu0 0.0
  %2164 = vmatprep.subr.mxu0 0.0
  %2165 = vmatpush1.msra.mxu0 0.0
  %2166 = vmatprep.subr.mxu0 0.0
  %2167 = vmatpush1.msra.mxu0 0.0
  %2168 = vmatprep.subr.mxu0 0.0
  %2169 = vmatpush1.msra.mxu0 0.0
  %2170 = vmatprep.subr.mxu0 0.0
  %2171 = vmatpush1.msra.mxu0 0.0
  %2172 = vmatprep.mubr.f32.mxu0 0.0
  %2173 = vmatmul.mubr.f32.gmra.mrb[0].mxu0 %v2100
  %v2174 = vpop.f32.mrb[0].mxu0
  %v2175 = vadd.f32 %v2098, %v2174
  %v2176 = vpop.f32.mrb[0].mxu0
  %2177 = vmatprep.mubr.f32.mxu0 0.0
  %2178 = vmatmul.mubr.f32.gmra.mrb[0].mxu0 %v2103
  %v2179 = vpop.f32.mrb[0].mxu0
  %v2180 = vadd.f32 %v2098, %v2179
  %v2181 = vpop.f32.mrb[0].mxu0
  %2182 = vdwg.mxu0
  %v2183 = vadd.f32 %v1772, %v2175
  %v2184 = vadd.f32 %v1773, %v2180
  %v2185 = vsel %vm62, %v2183, 0.0
  %2186 = vadd.xlane.f32.xlu0 %v2185
  %v2187 = vpop.xlane.xlu0 %2186
  %v2188 = vsel %vm62, %v2184, 0.0
  %2189 = vadd.xlane.f32.xlu0 %v2188
  %v2190 = vpop.xlane.xlu0 %2189
  %v2191 = vmul.f32 %v2187, %v569
  %v2192 = vmul.f32 %v2190, %v569
  %v2193 = vsub.f32 %v2183, %v2191
  %v2194 = vsub.f32 %v2184, %v2192
  %v2195 = vmul.f32 %v2193, %v2193
  %v2196 = vmul.f32 %v2194, %v2194
  %v2197 = vsel %vm62, %v2195, 0.0
  %2198 = vadd.xlane.f32.xlu0 %v2197
  %v2199 = vpop.xlane.xlu0 %2198
  %v2200 = vsel %vm62, %v2196, 0.0
  %2201 = vadd.xlane.f32.xlu0 %v2200
  %v2202 = vpop.xlane.xlu0 %2201
  %v2203 = vmul.f32 %v2199, %v569
  %v2204 = vmul.f32 %v2202, %v569
  %v2205 = vadd.f32 %v2203, 1e-05
  %v2206 = vadd.f32 %v2204, 1e-05
  %v2207 = vrsqrt.pop %v2205
  %v2208 = vrsqrt.pop %v2206
  %v2209 = vmul.f32 %v2193, %v2207
  %v2210 = vmul.f32 %v2194, %v2208
  %v2211 = vlaneseq
  %v2212 = vshrl.u32 %v2211, 7
  %v2213 = vsub.s32 4, %v2212
  %v2214 = vrot.slane %v1775, %v2213
  %v2215 = vmul.f32 %v2209, %v2214
  %v2216 = vmul.f32 %v2210, %v2214
  %v2217 = vlaneseq
  %v2218 = vshrl.u32 %v2217, 7
  %v2219 = vsub.s32 5, %v2218
  %v2220 = vrot.slane %v1775, %v2219
  %v2221 = vadd.f32 %v2215, %v2220
  %v2222 = vadd.f32 %v2216, %v2220
  %v2223 = vpack.c.bf16 %v2222, %v2221
  loop: start=0, step=1, limit=4
  $region76: #{transformer_light_forward.1} parent=0 // loop_pre_header
    _
  $region77: #{transformer_light_forward.1} parent=0 // loop_header
    %s2225 = sphi 0, %s2229
    %p2226 = scmp.ge.s32.totalorder %s2225, 4
    %v2230 = vphi 0.0, %v2537
    %v2231 = vphi 0.0, %v2538
  $region78: #{transformer_light_forward.1} parent=0 // loop_header_branch
    %2228 = sbr.rel (%p2226) target = $region82
  $region79: #{transformer_light_forward.1} parent=0 // loop_body
    %s2232 = sadd.s32 %s2225, 8
    %s2233 = smul.u32 %s2232, 8
    %s2234 = smul.addr %s2233, 4
    %s2235 = scalar_lea.vmem %s7, %s2234
    %v2236 = vld [vmem:[%s2235] sm:$0xff]
    %v2237 = vld [vmem:[%s2235 + $0x8] sm:$0xff]
    %v2238 = vld [vmem:[%s2235 + $0x10] sm:$0x11]
    %v2239 = vld [vmem:[%s2235 + $0x18] sm:$0x11]
    %s2240 = smul.u32 %s2232, 4
    %s2241 = scalar_lea.vmem %s8, %s2240
    %v2242 = vld [vmem:[%s2241] sm:$0xf]
    %s2243 = smul.addr %s2233, 4
    %s2244 = scalar_lea.vmem %s9, %s2243
    %v2245 = vld [vmem:[%s2244] sm:$0xff]
    %v2246 = vld [vmem:[%s2244 + $0x8] sm:$0xff]
    %v2247 = vld [vmem:[%s2244 + $0x10] sm:$0x11]
    %v2248 = vld [vmem:[%s2244 + $0x18] sm:$0x11]
    %v2250 = vlaneseq
    %v2251 = vshrl.u32 %v2250, 7
    %v2252 = vsub.s32 0, %v2251
    %v2253 = vrot.slane %v2242, %v2252
    %v2254 = vlaneseq
    %v2255 = vshrl.u32 %v2254, 7
    %v2256 = vsub.s32 1, %v2255
    %v2257 = vrot.slane %v2242, %v2256
    %v2258 = vlaneseq
    %v2259 = vshrl.u32 %v2258, 7
    %v2260 = vsub.s32 2, %v2259
    %v2261 = vrot.slane %v2242, %v2260
    %v2262 = vlaneseq
    %v2263 = vshrl.u32 %v2262, 7
    %v2264 = vsub.s32 3, %v2263
    %v2265 = vrot.slane %v2242, %v2264
    %v2274 = vunpack.c.l.b16 %v2236
    %v2275 = vunpack.c.h.b16 %v2236
    %v2276 = vunpack.c.l.b16 %v2237
    %v2277 = vunpack.c.h.b16 %v2237
    %v2278 = vunpack.c.l.b16 %v2238
    %v2279 = vunpack.c.h.b16 %v2238
    %v2280 = vunpack.c.l.b16 %v2239
    %v2281 = vunpack.c.h.b16 %v2239
    %v2282 = vpack.c.b16 %v2278, %v2274
    %v2283 = vpack.c.b16 %v2279, %v2275
    %v2284 = vpack.c.b16 %v2280, %v2276
    %v2285 = vpack.c.b16 %v2281, %v2277
    %v2287 = vsel %vm62, %v2223, 0
    %vm2289 = vcmask 1043456
    %vm2290 = vcmask 1044480
    %v2291 = vsel %vm2289, 4294967295, 65535
    %v2292 = vsel %vm2290, %v2291, 0
    %v2294 = vand.u32 %v2282, %v2292
    %v2297 = vand.u32 %v2283, %v2292
    %v2300 = vand.u32 %v2284, %v2292
    %v2303 = vand.u32 %v2285, %v2292
    %2305 = vmatprep.subr.bf16.mxu0 %v2297
    %2306 = vmatpush1.bf16.msra.mxu0 %v2294
    %2307 = vmatprep.subr.bf16.mxu0 0
    %2308 = vmatpush1.bf16.msra.mxu0 0
    %2309 = vmatprep.subr.bf16.mxu0 0
    %2310 = vmatpush1.bf16.msra.mxu0 0
    %2311 = vmatprep.subr.bf16.mxu0 0
    %2312 = vmatpush1.bf16.msra.mxu0 0
    %2313 = vmatprep.subr.bf16.mxu0 0
    %2314 = vmatpush1.bf16.msra.mxu0 0
    %2315 = vmatprep.subr.bf16.mxu0 0
    %2316 = vmatpush1.bf16.msra.mxu0 0
    %2317 = vmatprep.subr.bf16.mxu0 0
    %2318 = vmatpush1.bf16.msra.mxu0 0
    %2319 = vmatprep.subr.bf16.mxu0 0
    %2320 = vmatpush1.bf16.msra.mxu0 0
    %2321 = vmatprep.subr.bf16.mxu0 0
    %2322 = vmatpush1.bf16.msra.mxu0 0
    %2323 = vmatprep.subr.bf16.mxu0 0
    %2324 = vmatpush1.bf16.msra.mxu0 0
    %2325 = vmatprep.subr.bf16.mxu0 0
    %2326 = vmatpush1.bf16.msra.mxu0 0
    %2327 = vmatprep.subr.bf16.mxu0 0
    %2328 = vmatpush1.bf16.msra.mxu0 0
    %2329 = vmatprep.subr.bf16.mxu0 0
    %2330 = vmatpush1.bf16.msra.mxu0 0
    %2331 = vmatprep.subr.bf16.mxu0 0
    %2332 = vmatpush1.bf16.msra.mxu0 0
    %2333 = vmatprep.subr.bf16.mxu0 0
    %2334 = vmatpush1.bf16.msra.mxu0 0
    %2335 = vmatprep.subr.bf16.mxu0 0
    %2336 = vmatpush1.bf16.msra.mxu0 0
    %2337 = vmatprep.mubr.bf16.mxu0 0
    %2338 = vmatmul.mubr.bf16.gmra.mrb[0].mxu0 %v2287
    %v2339 = vpop.f32.mrb[0].mxu0
    %v2340 = vadd.f32 %v2253, %v2339
    %v2341 = vpop.f32.mrb[0].mxu0
    %v2342 = vadd.f32 %v2257, %v2341
    %v2343 = vpop.f32.mrb[0].mxu0
    %v2344 = vadd.f32 %v2253, %v2343
    %v2345 = vpop.f32.mrb[0].mxu0
    %v2346 = vadd.f32 %v2257, %v2345
    %2347 = vdwg.mxu0
    %2348 = vmatprep.subr.bf16.mxu0 %v2303
    %2349 = vmatpush1.bf16.msra.mxu0 %v2300
    %2350 = vmatprep.subr.bf16.mxu0 0
    %2351 = vmatpush1.bf16.msra.mxu0 0
    %2352 = vmatprep.subr.bf16.mxu0 0
    %2353 = vmatpush1.bf16.msra.mxu0 0
    %2354 = vmatprep.subr.bf16.mxu0 0
    %2355 = vmatpush1.bf16.msra.mxu0 0
    %2356 = vmatprep.subr.bf16.mxu0 0
    %2357 = vmatpush1.bf16.msra.mxu0 0
    %2358 = vmatprep.subr.bf16.mxu0 0
    %2359 = vmatpush1.bf16.msra.mxu0 0
    %2360 = vmatprep.subr.bf16.mxu0 0
    %2361 = vmatpush1.bf16.msra.mxu0 0
    %2362 = vmatprep.subr.bf16.mxu0 0
    %2363 = vmatpush1.bf16.msra.mxu0 0
    %2364 = vmatprep.subr.bf16.mxu0 0
    %2365 = vmatpush1.bf16.msra.mxu0 0
    %2366 = vmatprep.subr.bf16.mxu0 0
    %2367 = vmatpush1.bf16.msra.mxu0 0
    %2368 = vmatprep.subr.bf16.mxu0 0
    %2369 = vmatpush1.bf16.msra.mxu0 0
    %2370 = vmatprep.subr.bf16.mxu0 0
    %2371 = vmatpush1.bf16.msra.mxu0 0
    %2372 = vmatprep.subr.bf16.mxu0 0
    %2373 = vmatpush1.bf16.msra.mxu0 0
    %2374 = vmatprep.subr.bf16.mxu0 0
    %2375 = vmatpush1.bf16.msra.mxu0 0
    %2376 = vmatprep.subr.bf16.mxu0 0
    %2377 = vmatpush1.bf16.msra.mxu0 0
    %2378 = vmatprep.subr.bf16.mxu0 0
    %2379 = vmatpush1.bf16.msra.mxu0 0
    %2380 = vmatprep.mubr.bf16.mxu0 0
    %2381 = vmatmul.mubr.bf16.gmra.mrb[0].mxu0 %v2287
    %v2382 = vpop.f32.mrb[0].mxu0
    %v2383 = vadd.f32 %v2261, %v2382
    %v2384 = vpop.f32.mrb[0].mxu0
    %v2385 = vadd.f32 %v2265, %v2384
    %v2386 = vpop.f32.mrb[0].mxu0
    %v2387 = vadd.f32 %v2261, %v2386
    %v2388 = vpop.f32.mrb[0].mxu0
    %v2389 = vadd.f32 %v2265, %v2388
    %2390 = vdwg.mxu0
    %v2391 = vmul.f32 %v2340, 0.5
    %v2392 = vmul.f32 %v2342, 0.5
    %v2393 = vmul.f32 %v2383, 0.5
    %v2394 = vmul.f32 %v2385, 0.5
    %v2395 = vmul.f32 %v2344, 0.5
    %v2396 = vmul.f32 %v2346, 0.5
    %v2397 = vmul.f32 %v2387, 0.5
    %v2398 = vmul.f32 %v2389, 0.5
    %v2399 = vmul.f32 %v2340, 0.70710677
    %v2400 = vmul.f32 %v2342, 0.70710677
    %v2401 = vmul.f32 %v2383, 0.70710677
    %v2402 = vmul.f32 %v2385, 0.70710677
    %v2403 = vmul.f32 %v2344, 0.70710677
    %v2404 = vmul.f32 %v2346, 0.70710677
    %v2405 = vmul.f32 %v2387, 0.70710677
    %v2406 = vmul.f32 %v2389, 0.70710677
    %v2407 = verf.f32.pop %v2399
    %v2408 = verf.f32.pop %v2400
    %v2409 = verf.f32.pop %v2401
    %v2410 = verf.f32.pop %v2402
    %v2411 = verf.f32.pop %v2403
    %v2412 = verf.f32.pop %v2404
    %v2413 = verf.f32.pop %v2405
    %v2414 = verf.f32.pop %v2406
    %v2415 = vadd.f32 %v2407, 1.0
    %v2416 = vadd.f32 %v2408, 1.0
    %v2417 = vadd.f32 %v2409, 1.0
    %v2418 = vadd.f32 %v2410, 1.0
    %v2419 = vadd.f32 %v2411, 1.0
    %v2420 = vadd.f32 %v2412, 1.0
    %v2421 = vadd.f32 %v2413, 1.0
    %v2422 = vadd.f32 %v2414, 1.0
    %v2423 = vmul.f32 %v2391, %v2415
    %v2424 = vmul.f32 %v2392, %v2416
    %v2425 = vmul.f32 %v2393, %v2417
    %v2426 = vmul.f32 %v2394, %v2418
    %v2427 = vmul.f32 %v2395, %v2419
    %v2428 = vmul.f32 %v2396, %v2420
    %v2429 = vmul.f32 %v2397, %v2421
    %v2430 = vmul.f32 %v2398, %v2422
    %v2431 = vpack.c.bf16 %v2427, %v2423
    %v2432 = vpack.c.bf16 %v2428, %v2424
    %v2433 = vpack.c.bf16 %v2429, %v2425
    %v2434 = vpack.c.bf16 %v2430, %v2426
    %v2439 = vunpack.c.l.b16 %v2245
    %v2440 = vunpack.c.h.b16 %v2245
    %v2441 = vunpack.c.l.b16 %v2246
    %v2442 = vunpack.c.h.b16 %v2246
    %v2443 = vunpack.c.l.b16 %v2247
    %v2444 = vunpack.c.h.b16 %v2247
    %v2445 = vunpack.c.l.b16 %v2248
    %v2446 = vunpack.c.h.b16 %v2248
    %v2447 = vpack.c.b16 %v2443, %v2439
    %v2448 = vpack.c.b16 %v2444, %v2440
    %v2449 = vpack.c.b16 %v2445, %v2441
    %v2450 = vpack.c.b16 %v2446, %v2442
    %2455 = vmatprep.subr.bf16.mxu0 %v2448
    %2456 = vmatpush1.bf16.xpose.msra.mxu0 %v2447
    %2457 = vmatprep.subr.bf16.mxu0 0
    %2458 = vmatpush1.bf16.xpose.msra.mxu0 0
    %2459 = vmatprep.subr.bf16.mxu0 0
    %2460 = vmatpush1.bf16.xpose.msra.mxu0 0
    %2461 = vmatprep.subr.bf16.mxu0 0
    %2462 = vmatpush1.bf16.xpose.msra.mxu0 0
    %2463 = vmatprep.subr.bf16.mxu0 0
    %2464 = vmatpush1.bf16.xpose.msra.mxu0 0
    %2465 = vmatprep.subr.bf16.mxu0 0
    %2466 = vmatpush1.bf16.xpose.msra.mxu0 0
    %2467 = vmatprep.subr.bf16.mxu0 0
    %2468 = vmatpush1.bf16.xpose.msra.mxu0 0
    %2469 = vmatprep.subr.bf16.mxu0 0
    %2470 = vmatpush1.bf16.xpose.msra.mxu0 0
    %2471 = vmatprep.subr.bf16.mxu0 0
    %2472 = vmatpush1.bf16.xpose.msra.mxu0 0
    %2473 = vmatprep.subr.bf16.mxu0 0
    %2474 = vmatpush1.bf16.xpose.msra.mxu0 0
    %2475 = vmatprep.subr.bf16.mxu0 0
    %2476 = vmatpush1.bf16.xpose.msra.mxu0 0
    %2477 = vmatprep.subr.bf16.mxu0 0
    %2478 = vmatpush1.bf16.xpose.msra.mxu0 0
    %2479 = vmatprep.subr.bf16.mxu0 0
    %2480 = vmatpush1.bf16.xpose.msra.mxu0 0
    %2481 = vmatprep.subr.bf16.mxu0 0
    %2482 = vmatpush1.bf16.xpose.msra.mxu0 0
    %2483 = vmatprep.subr.bf16.mxu0 0
    %2484 = vmatpush1.bf16.xpose.msra.mxu0 0
    %2485 = vmatprep.subr.bf16.mxu0 0
    %2486 = vmatpush1.bf16.xpose.msra.mxu0 0
    %2487 = vmatprep.mubr.bf16.mxu0 %v2432
    %2488 = vmatmul.mubr.bf16.gmra.mrb[0].mxu0 %v2431
    %v2489 = vpop.f32.mrb[0].mxu0
    %v2490 = vadd.f32 0.0, %v2489
    %v2491 = vpop.f32.mrb[0].mxu0
    %v2492 = vpop.f32.mrb[0].mxu0
    %v2493 = vadd.f32 0.0, %v2492
    %v2494 = vpop.f32.mrb[0].mxu0
    %2495 = vdwg.mxu0
    %2496 = vmatprep.subr.bf16.mxu0 %v2450
    %2497 = vmatpush1.bf16.xpose.msra.mxu0 %v2449
    %2498 = vmatprep.subr.bf16.mxu0 0
    %2499 = vmatpush1.bf16.xpose.msra.mxu0 0
    %2500 = vmatprep.subr.bf16.mxu0 0
    %2501 = vmatpush1.bf16.xpose.msra.mxu0 0
    %2502 = vmatprep.subr.bf16.mxu0 0
    %2503 = vmatpush1.bf16.xpose.msra.mxu0 0
    %2504 = vmatprep.subr.bf16.mxu0 0
    %2505 = vmatpush1.bf16.xpose.msra.mxu0 0
    %2506 = vmatprep.subr.bf16.mxu0 0
    %2507 = vmatpush1.bf16.xpose.msra.mxu0 0
    %2508 = vmatprep.subr.bf16.mxu0 0
    %2509 = vmatpush1.bf16.xpose.msra.mxu0 0
    %2510 = vmatprep.subr.bf16.mxu0 0
    %2511 = vmatpush1.bf16.xpose.msra.mxu0 0
    %2512 = vmatprep.subr.bf16.mxu0 0
    %2513 = vmatpush1.bf16.xpose.msra.mxu0 0
    %2514 = vmatprep.subr.bf16.mxu0 0
    %2515 = vmatpush1.bf16.xpose.msra.mxu0 0
    %2516 = vmatprep.subr.bf16.mxu0 0
    %2517 = vmatpush1.bf16.xpose.msra.mxu0 0
    %2518 = vmatprep.subr.bf16.mxu0 0
    %2519 = vmatpush1.bf16.xpose.msra.mxu0 0
    %2520 = vmatprep.subr.bf16.mxu0 0
    %2521 = vmatpush1.bf16.xpose.msra.mxu0 0
    %2522 = vmatprep.subr.bf16.mxu0 0
    %2523 = vmatpush1.bf16.xpose.msra.mxu0 0
    %2524 = vmatprep.subr.bf16.mxu0 0
    %2525 = vmatpush1.bf16.xpose.msra.mxu0 0
    %2526 = vmatprep.subr.bf16.mxu0 0
    %2527 = vmatpush1.bf16.xpose.msra.mxu0 0
    %2528 = vmatprep.mubr.bf16.mxu0 %v2434
    %2529 = vmatmul.mubr.bf16.gmra.mrb[0].mxu0 %v2433
    %v2530 = vpop.f32.mrb[0].mxu0
    %v2531 = vadd.f32 %v2490, %v2530
    %v2532 = vpop.f32.mrb[0].mxu0
    %v2533 = vpop.f32.mrb[0].mxu0
    %v2534 = vadd.f32 %v2493, %v2533
    %v2535 = vpop.f32.mrb[0].mxu0
    %2536 = vdwg.mxu0
    %v2537 = vadd.f32 %v2230, %v2531
    %v2538 = vadd.f32 %v2231, %v2534
  $region80: #{transformer_light_forward.1} parent=0 // loop_footer
    %s2229 = sadd.s32 1, %s2225
  $region81: #{transformer_light_forward.1} parent=0 // loop_footer_branch
    %2224 = sbr.rel target = $region77
  $region82: #{transformer_light_forward.1} parent=0 // loop_exit
    _
  %v2539 = vlaneseq
  %v2540 = vshrl.u32 %v2539, 7
  %v2541 = vsub.s32 6, %v2540
  %v2542 = vrot.slane %v1775, %v2541
  %v2543 = vadd.f32 %v2230, %v2542
  %v2544 = vadd.f32 %v2231, %v2542
  %v2545 = vadd.f32 %v2221, %v2543
  %v2546 = vadd.f32 %v2222, %v2544
  %v2547 = vsel %vm62, %v2545, 0.0
  %2548 = vadd.xlane.f32.xlu0 %v2547
  %v2549 = vpop.xlane.xlu0 %2548
  %v2550 = vsel %vm62, %v2546, 0.0
  %2551 = vadd.xlane.f32.xlu0 %v2550
  %v2552 = vpop.xlane.xlu0 %2551
  %v2553 = vmul.f32 %v2549, %v569
  %v2554 = vmul.f32 %v2552, %v569
  %v2555 = vsub.f32 %v2545, %v2553
  %v2556 = vsub.f32 %v2546, %v2554
  %v2557 = vmul.f32 %v2555, %v2555
  %v2558 = vmul.f32 %v2556, %v2556
  %v2559 = vsel %vm62, %v2557, 0.0
  %2560 = vadd.xlane.f32.xlu0 %v2559
  %v2561 = vpop.xlane.xlu0 %2560
  %v2562 = vsel %vm62, %v2558, 0.0
  %2563 = vadd.xlane.f32.xlu0 %v2562
  %v2564 = vpop.xlane.xlu0 %2563
  %v2565 = vmul.f32 %v2561, %v569
  %v2566 = vmul.f32 %v2564, %v569
  %v2567 = vadd.f32 %v2565, 1e-05
  %v2568 = vadd.f32 %v2566, 1e-05
  %v2569 = vrsqrt.pop %v2567
  %v2570 = vrsqrt.pop %v2568
  %v2571 = vmul.f32 %v2555, %v2569
  %v2572 = vmul.f32 %v2556, %v2570
  %v2573 = vlaneseq
  %v2574 = vshrl.u32 %v2573, 7
  %v2575 = vsub.s32 7, %v2574
  %v2576 = vrot.slane %v1775, %v2575
  %v2577 = vmul.f32 %v2571, %v2576
  %v2578 = vmul.f32 %v2572, %v2576
  %v2579 = vlaneseq
  %v2580 = vshrl.u32 %v2579, 7
  %v2581 = vsub.s32 0, %v2580
  %v2582 = vrot.slane %v1776, %v2581
  %v2583 = vadd.f32 %v2577, %v2582
  %v2584 = vadd.f32 %v2578, %v2582
  %v2585 = vld [vmem:[%s14] sm:$0xf]
  %v2586 = vld [vmem:[%s10] sm:$0xff]
  %v2587 = vld [vmem:[%s10 + $0x8] sm:$0x1]
  %v2588 = vlaneseq
  %v2589 = vshrl.u32 %v2588, 7
  %v2590 = vsub.s32 0, %v2589
  %v2591 = vrot.slane %v2585, %v2590
  %v2593 = vsel %vm62, %v2583, 0
  %v2596 = vsel %vm62, %v2584, 0
  %v2599 = vsel %vm69, %v2587, 0
  %2601 = vmatprep.subr.mxu0 0.0
  %2602 = vmatpush1.msra.mxu0 %v2586
  %2603 = vmatprep.subr.mxu0 0.0
  %2604 = vmatpush1.msra.mxu0 %v2599
  %2605 = vmatprep.subr.mxu0 0.0
  %2606 = vmatpush1.msra.mxu0 0.0
  %2607 = vmatprep.subr.mxu0 0.0
  %2608 = vmatpush1.msra.mxu0 0.0
  %2609 = vmatprep.subr.mxu0 0.0
  %2610 = vmatpush1.msra.mxu0 0.0
  %2611 = vmatprep.subr.mxu0 0.0
  %2612 = vmatpush1.msra.mxu0 0.0
  %2613 = vmatprep.subr.mxu0 0.0
  %2614 = vmatpush1.msra.mxu0 0.0
  %2615 = vmatprep.subr.mxu0 0.0
  %2616 = vmatpush1.msra.mxu0 0.0
  %2617 = vmatprep.subr.mxu0 0.0
  %2618 = vmatpush1.msra.mxu0 0.0
  %2619 = vmatprep.subr.mxu0 0.0
  %2620 = vmatpush1.msra.mxu0 0.0
  %2621 = vmatprep.subr.mxu0 0.0
  %2622 = vmatpush1.msra.mxu0 0.0
  %2623 = vmatprep.subr.mxu0 0.0
  %2624 = vmatpush1.msra.mxu0 0.0
  %2625 = vmatprep.subr.mxu0 0.0
  %2626 = vmatpush1.msra.mxu0 0.0
  %2627 = vmatprep.subr.mxu0 0.0
  %2628 = vmatpush1.msra.mxu0 0.0
  %2629 = vmatprep.subr.mxu0 0.0
  %2630 = vmatpush1.msra.mxu0 0.0
  %2631 = vmatprep.subr.mxu0 0.0
  %2632 = vmatpush1.msra.mxu0 0.0
  %2633 = vmatprep.subr.mxu0 0.0
  %2634 = vmatpush1.msra.mxu0 0.0
  %2635 = vmatprep.subr.mxu0 0.0
  %2636 = vmatpush1.msra.mxu0 0.0
  %2637 = vmatprep.subr.mxu0 0.0
  %2638 = vmatpush1.msra.mxu0 0.0
  %2639 = vmatprep.subr.mxu0 0.0
  %2640 = vmatpush1.msra.mxu0 0.0
  %2641 = vmatprep.subr.mxu0 0.0
  %2642 = vmatpush1.msra.mxu0 0.0
  %2643 = vmatprep.subr.mxu0 0.0
  %2644 = vmatpush1.msra.mxu0 0.0
  %2645 = vmatprep.subr.mxu0 0.0
  %2646 = vmatpush1.msra.mxu0 0.0
  %2647 = vmatprep.subr.mxu0 0.0
  %2648 = vmatpush1.msra.mxu0 0.0
  %2649 = vmatprep.subr.mxu0 0.0
  %2650 = vmatpush1.msra.mxu0 0.0
  %2651 = vmatprep.subr.mxu0 0.0
  %2652 = vmatpush1.msra.mxu0 0.0
  %2653 = vmatprep.subr.mxu0 0.0
  %2654 = vmatpush1.msra.mxu0 0.0
  %2655 = vmatprep.subr.mxu0 0.0
  %2656 = vmatpush1.msra.mxu0 0.0
  %2657 = vmatprep.subr.mxu0 0.0
  %2658 = vmatpush1.msra.mxu0 0.0
  %2659 = vmatprep.subr.mxu0 0.0
  %2660 = vmatpush1.msra.mxu0 0.0
  %2661 = vmatprep.subr.mxu0 0.0
  %2662 = vmatpush1.msra.mxu0 0.0
  %2663 = vmatprep.subr.mxu0 0.0
  %2664 = vmatpush1.msra.mxu0 0.0
  %2665 = vmatprep.mubr.f32.mxu0 0.0
  %2666 = vmatmul.mubr.f32.gmra.mrb[0].mxu0 %v2593
  %v2667 = vpop.f32.mrb[0].mxu0
  %v2668 = vadd.f32 %v2591, %v2667
  %v2669 = vpop.f32.mrb[0].mxu0
  %2670 = vmatprep.mubr.f32.mxu0 0.0
  %2671 = vmatmul.mubr.f32.gmra.mrb[0].mxu0 %v2596
  %v2672 = vpop.f32.mrb[0].mxu0
  %v2673 = vadd.f32 %v2591, %v2672
  %v2674 = vpop.f32.mrb[0].mxu0
  %2675 = vdwg.mxu0
  %v2676 = vmax.f32 %v2668, 0.0
  %v2677 = vmax.f32 %v2673, 0.0
  %v2678 = vld [vmem:[%s11] sm:$0xff]
  %v2679 = vld [vmem:[%s11 + $0x8] sm:$0xff]
  %v2680 = vld [vmem:[%s11 + $0x10] sm:$0xff]
  %v2681 = vld [vmem:[%s11 + $0x18] sm:$0xff]
  %v2682 = vld [vmem:[%s11 + $0x20] sm:$0xff]
  %v2683 = vld [vmem:[%s11 + $0x28] sm:$0xff]
  %v2684 = vld [vmem:[%s11 + $0x30] sm:$0xff]
  %v2685 = vld [vmem:[%s11 + $0x38] sm:$0xff]
  %v2686 = vlaneseq
  %v2687 = vshrl.u32 %v2686, 7
  %v2688 = vsub.s32 1, %v2687
  %v2689 = vrot.slane %v2585, %v2688
  %vm2690 = vcmask 523264
  %v2692 = vsel %vm2690, %v2676, 0
  %v2695 = vsel %vm2690, %v2677, 0
  %2697 = vmatprep.subr.mxu0 0.0
  %2698 = vmatpush1.msra.mxu0 %v2678
  %2699 = vmatprep.subr.mxu0 0.0
  %2700 = vmatpush1.msra.mxu0 %v2679
  %2701 = vmatprep.subr.mxu0 0.0
  %2702 = vmatpush1.msra.mxu0 %v2680
  %2703 = vmatprep.subr.mxu0 0.0
  %2704 = vmatpush1.msra.mxu0 %v2681
  %2705 = vmatprep.subr.mxu0 0.0
  %2706 = vmatpush1.msra.mxu0 %v2682
  %2707 = vmatprep.subr.mxu0 0.0
  %2708 = vmatpush1.msra.mxu0 %v2683
  %2709 = vmatprep.subr.mxu0 0.0
  %2710 = vmatpush1.msra.mxu0 %v2684
  %2711 = vmatprep.subr.mxu0 0.0
  %2712 = vmatpush1.msra.mxu0 %v2685
  %2713 = vmatprep.subr.mxu0 0.0
  %2714 = vmatpush1.msra.mxu0 0.0
  %2715 = vmatprep.subr.mxu0 0.0
  %2716 = vmatpush1.msra.mxu0 0.0
  %2717 = vmatprep.subr.mxu0 0.0
  %2718 = vmatpush1.msra.mxu0 0.0
  %2719 = vmatprep.subr.mxu0 0.0
  %2720 = vmatpush1.msra.mxu0 0.0
  %2721 = vmatprep.subr.mxu0 0.0
  %2722 = vmatpush1.msra.mxu0 0.0
  %2723 = vmatprep.subr.mxu0 0.0
  %2724 = vmatpush1.msra.mxu0 0.0
  %2725 = vmatprep.subr.mxu0 0.0
  %2726 = vmatpush1.msra.mxu0 0.0
  %2727 = vmatprep.subr.mxu0 0.0
  %2728 = vmatpush1.msra.mxu0 0.0
  %2729 = vmatprep.subr.mxu0 0.0
  %2730 = vmatpush1.msra.mxu0 0.0
  %2731 = vmatprep.subr.mxu0 0.0
  %2732 = vmatpush1.msra.mxu0 0.0
  %2733 = vmatprep.subr.mxu0 0.0
  %2734 = vmatpush1.msra.mxu0 0.0
  %2735 = vmatprep.subr.mxu0 0.0
  %2736 = vmatpush1.msra.mxu0 0.0
  %2737 = vmatprep.subr.mxu0 0.0
  %2738 = vmatpush1.msra.mxu0 0.0
  %2739 = vmatprep.subr.mxu0 0.0
  %2740 = vmatpush1.msra.mxu0 0.0
  %2741 = vmatprep.subr.mxu0 0.0
  %2742 = vmatpush1.msra.mxu0 0.0
  %2743 = vmatprep.subr.mxu0 0.0
  %2744 = vmatpush1.msra.mxu0 0.0
  %2745 = vmatprep.subr.mxu0 0.0
  %2746 = vmatpush1.msra.mxu0 0.0
  %2747 = vmatprep.subr.mxu0 0.0
  %2748 = vmatpush1.msra.mxu0 0.0
  %2749 = vmatprep.subr.mxu0 0.0
  %2750 = vmatpush1.msra.mxu0 0.0
  %2751 = vmatprep.subr.mxu0 0.0
  %2752 = vmatpush1.msra.mxu0 0.0
  %2753 = vmatprep.subr.mxu0 0.0
  %2754 = vmatpush1.msra.mxu0 0.0
  %2755 = vmatprep.subr.mxu0 0.0
  %2756 = vmatpush1.msra.mxu0 0.0
  %2757 = vmatprep.subr.mxu0 0.0
  %2758 = vmatpush1.msra.mxu0 0.0
  %2759 = vmatprep.subr.mxu0 0.0
  %2760 = vmatpush1.msra.mxu0 0.0
  %2761 = vmatprep.mubr.f32.mxu0 0.0
  %2762 = vmatmul.mubr.f32.gmra.mrb[0].mxu0 %v2692
  %v2763 = vpop.f32.mrb[0].mxu0
  %v2764 = vadd.f32 %v2689, %v2763
  %v2765 = vpop.f32.mrb[0].mxu0
  %2766 = vmatprep.mubr.f32.mxu0 0.0
  %2767 = vmatmul.mubr.f32.gmra.mrb[0].mxu0 %v2695
  %v2768 = vpop.f32.mrb[0].mxu0
  %v2769 = vadd.f32 %v2689, %v2768
  %v2770 = vpop.f32.mrb[0].mxu0
  %2771 = vdwg.mxu0
  %v2772 = vmax.f32 %v2764, 0.0
  %v2773 = vmax.f32 %v2769, 0.0
  %v2774 = vld [vmem:[%s12] sm:$0xff]
  %v2775 = vld [vmem:[%s12 + $0x8] sm:$0xff]
  %v2776 = vld [vmem:[%s12 + $0x10] sm:$0xff]
  %v2777 = vld [vmem:[%s12 + $0x18] sm:$0xff]
  %v2778 = vlaneseq
  %v2779 = vshrl.u32 %v2778, 7
  %v2780 = vsub.s32 2, %v2779
  %v2781 = vrot.slane %v2585, %v2780
  %vm2782 = vcmask 261120
  %v2784 = vsel %vm2782, %v2772, 0
  %v2787 = vsel %vm2782, %v2773, 0
  %2789 = vmatprep.subr.mxu0 0.0
  %2790 = vmatpush1.msra.mxu0 %v2774
  %2791 = vmatprep.subr.mxu0 0.0
  %2792 = vmatpush1.msra.mxu0 %v2775
  %2793 = vmatprep.subr.mxu0 0.0
  %2794 = vmatpush1.msra.mxu0 %v2776
  %2795 = vmatprep.subr.mxu0 0.0
  %2796 = vmatpush1.msra.mxu0 %v2777
  %2797 = vmatprep.subr.mxu0 0.0
  %2798 = vmatpush1.msra.mxu0 0.0
  %2799 = vmatprep.subr.mxu0 0.0
  %2800 = vmatpush1.msra.mxu0 0.0
  %2801 = vmatprep.subr.mxu0 0.0
  %2802 = vmatpush1.msra.mxu0 0.0
  %2803 = vmatprep.subr.mxu0 0.0
  %2804 = vmatpush1.msra.mxu0 0.0
  %2805 = vmatprep.subr.mxu0 0.0
  %2806 = vmatpush1.msra.mxu0 0.0
  %2807 = vmatprep.subr.mxu0 0.0
  %2808 = vmatpush1.msra.mxu0 0.0
  %2809 = vmatprep.subr.mxu0 0.0
  %2810 = vmatpush1.msra.mxu0 0.0
  %2811 = vmatprep.subr.mxu0 0.0
  %2812 = vmatpush1.msra.mxu0 0.0
  %2813 = vmatprep.subr.mxu0 0.0
  %2814 = vmatpush1.msra.mxu0 0.0
  %2815 = vmatprep.subr.mxu0 0.0
  %2816 = vmatpush1.msra.mxu0 0.0
  %2817 = vmatprep.subr.mxu0 0.0
  %2818 = vmatpush1.msra.mxu0 0.0
  %2819 = vmatprep.subr.mxu0 0.0
  %2820 = vmatpush1.msra.mxu0 0.0
  %2821 = vmatprep.subr.mxu0 0.0
  %2822 = vmatpush1.msra.mxu0 0.0
  %2823 = vmatprep.subr.mxu0 0.0
  %2824 = vmatpush1.msra.mxu0 0.0
  %2825 = vmatprep.subr.mxu0 0.0
  %2826 = vmatpush1.msra.mxu0 0.0
  %2827 = vmatprep.subr.mxu0 0.0
  %2828 = vmatpush1.msra.mxu0 0.0
  %2829 = vmatprep.subr.mxu0 0.0
  %2830 = vmatpush1.msra.mxu0 0.0
  %2831 = vmatprep.subr.mxu0 0.0
  %2832 = vmatpush1.msra.mxu0 0.0
  %2833 = vmatprep.subr.mxu0 0.0
  %2834 = vmatpush1.msra.mxu0 0.0
  %2835 = vmatprep.subr.mxu0 0.0
  %2836 = vmatpush1.msra.mxu0 0.0
  %2837 = vmatprep.subr.mxu0 0.0
  %2838 = vmatpush1.msra.mxu0 0.0
  %2839 = vmatprep.subr.mxu0 0.0
  %2840 = vmatpush1.msra.mxu0 0.0
  %2841 = vmatprep.subr.mxu0 0.0
  %2842 = vmatpush1.msra.mxu0 0.0
  %2843 = vmatprep.subr.mxu0 0.0
  %2844 = vmatpush1.msra.mxu0 0.0
  %2845 = vmatprep.subr.mxu0 0.0
  %2846 = vmatpush1.msra.mxu0 0.0
  %2847 = vmatprep.subr.mxu0 0.0
  %2848 = vmatpush1.msra.mxu0 0.0
  %2849 = vmatprep.subr.mxu0 0.0
  %2850 = vmatpush1.msra.mxu0 0.0
  %2851 = vmatprep.subr.mxu0 0.0
  %2852 = vmatpush1.msra.mxu0 0.0
  %2853 = vmatprep.mubr.f32.mxu0 0.0
  %2854 = vmatmul.mubr.f32.gmra.mrb[0].mxu0 %v2784
  %v2855 = vpop.f32.mrb[0].mxu0
  %v2856 = vadd.f32 %v2781, %v2855
  %v2857 = vpop.f32.mrb[0].mxu0
  %2858 = vmatprep.mubr.f32.mxu0 0.0
  %2859 = vmatmul.mubr.f32.gmra.mrb[0].mxu0 %v2787
  %v2860 = vpop.f32.mrb[0].mxu0
  %v2861 = vadd.f32 %v2781, %v2860
  %v2862 = vpop.f32.mrb[0].mxu0
  %2863 = vdwg.mxu0
  %v2864 = vmax.f32 %v2856, 0.0
  %v2865 = vmax.f32 %v2861, 0.0
  %v2866 = vld [vmem:[%s13] sm:$0xff]
  %v2867 = vld [vmem:[%s13 + $0x8] sm:$0xff]
  %v2868 = vlaneseq
  %v2869 = vshrl.u32 %v2868, 7
  %v2870 = vsub.s32 3, %v2869
  %v2871 = vrot.slane %v2585, %v2870
  %v2873 = vsel %vm359, %v2864, 0
  %v2876 = vsel %vm359, %v2865, 0
  %2878 = vmatprep.subr.mxu0 0.0
  %2879 = vmatpush1.msra.mxu0 %v2866
  %2880 = vmatprep.subr.mxu0 0.0
  %2881 = vmatpush1.msra.mxu0 %v2867
  %2882 = vmatprep.subr.mxu0 0.0
  %2883 = vmatpush1.msra.mxu0 0.0
  %2884 = vmatprep.subr.mxu0 0.0
  %2885 = vmatpush1.msra.mxu0 0.0
  %2886 = vmatprep.subr.mxu0 0.0
  %2887 = vmatpush1.msra.mxu0 0.0
  %2888 = vmatprep.subr.mxu0 0.0
  %2889 = vmatpush1.msra.mxu0 0.0
  %2890 = vmatprep.subr.mxu0 0.0
  %2891 = vmatpush1.msra.mxu0 0.0
  %2892 = vmatprep.subr.mxu0 0.0
  %2893 = vmatpush1.msra.mxu0 0.0
  %2894 = vmatprep.subr.mxu0 0.0
  %2895 = vmatpush1.msra.mxu0 0.0
  %2896 = vmatprep.subr.mxu0 0.0
  %2897 = vmatpush1.msra.mxu0 0.0
  %2898 = vmatprep.subr.mxu0 0.0
  %2899 = vmatpush1.msra.mxu0 0.0
  %2900 = vmatprep.subr.mxu0 0.0
  %2901 = vmatpush1.msra.mxu0 0.0
  %2902 = vmatprep.subr.mxu0 0.0
  %2903 = vmatpush1.msra.mxu0 0.0
  %2904 = vmatprep.subr.mxu0 0.0
  %2905 = vmatpush1.msra.mxu0 0.0
  %2906 = vmatprep.subr.mxu0 0.0
  %2907 = vmatpush1.msra.mxu0 0.0
  %2908 = vmatprep.subr.mxu0 0.0
  %2909 = vmatpush1.msra.mxu0 0.0
  %2910 = vmatprep.subr.mxu0 0.0
  %2911 = vmatpush1.msra.mxu0 0.0
  %2912 = vmatprep.subr.mxu0 0.0
  %2913 = vmatpush1.msra.mxu0 0.0
  %2914 = vmatprep.subr.mxu0 0.0
  %2915 = vmatpush1.msra.mxu0 0.0
  %2916 = vmatprep.subr.mxu0 0.0
  %2917 = vmatpush1.msra.mxu0 0.0
  %2918 = vmatprep.subr.mxu0 0.0
  %2919 = vmatpush1.msra.mxu0 0.0
  %2920 = vmatprep.subr.mxu0 0.0
  %2921 = vmatpush1.msra.mxu0 0.0
  %2922 = vmatprep.subr.mxu0 0.0
  %2923 = vmatpush1.msra.mxu0 0.0
  %2924 = vmatprep.subr.mxu0 0.0
  %2925 = vmatpush1.msra.mxu0 0.0
  %2926 = vmatprep.subr.mxu0 0.0
  %2927 = vmatpush1.msra.mxu0 0.0
  %2928 = vmatprep.subr.mxu0 0.0
  %2929 = vmatpush1.msra.mxu0 0.0
  %2930 = vmatprep.subr.mxu0 0.0
  %2931 = vmatpush1.msra.mxu0 0.0
  %2932 = vmatprep.subr.mxu0 0.0
  %2933 = vmatpush1.msra.mxu0 0.0
  %2934 = vmatprep.subr.mxu0 0.0
  %2935 = vmatpush1.msra.mxu0 0.0
  %2936 = vmatprep.subr.mxu0 0.0
  %2937 = vmatpush1.msra.mxu0 0.0
  %2938 = vmatprep.subr.mxu0 0.0
  %2939 = vmatpush1.msra.mxu0 0.0
  %2940 = vmatprep.subr.mxu0 0.0
  %2941 = vmatpush1.msra.mxu0 0.0
  %2942 = vmatprep.mubr.f32.mxu0 0.0
  %2943 = vmatmul.mubr.f32.gmra.mrb[0].mxu0 %v2873
  %v2944 = vpop.f32.mrb[0].mxu0
  %v2945 = vadd.f32 %v2871, %v2944
  %v2946 = vpop.f32.mrb[0].mxu0
  %2947 = vmatprep.mubr.f32.mxu0 0.0
  %2948 = vmatmul.mubr.f32.gmra.mrb[0].mxu0 %v2876
  %v2949 = vpop.f32.mrb[0].mxu0
  %v2950 = vadd.f32 %v2871, %v2949
  %v2951 = vpop.f32.mrb[0].mxu0
  %2952 = vdwg.mxu0
  %vm2953 = vcmask 7168
  %2954 = vst.msk [vmem:[%s15] sm:$0xff] %vm2953, %v2945
  %2955 = vst.msk [vmem:[%s15 + $0x8] sm:$0xff] %vm2953, %v2950
  // Predicated region
  $region83: #{transformer_light_forward.1} parent=0 // pred_check
    _
  $region84: #{transformer_light_forward.1} parent=0 // pred_check_branch
    %2957 = sbr.rel (0) target = $region86
  $region85: #{transformer_light_forward.1} parent=0 // pred_region
    _
  $region86: #{transformer_light_forward.1} parent=0 // pred_fallthru
    _
  // Predicated region
  $region87: #{transformer_light_forward.1} parent=0 // pred_check
    _
  $region88: #{transformer_light_forward.1} parent=0 // pred_check_branch
    %2959 = sbr.rel (0) target = $region90
  $region89: #{transformer_light_forward.1} parent=0 // pred_region
    _
  $region90: #{transformer_light_forward.1} parent=0 // pred_fallthru
    _

</llo_original>
